<compile_context>
chip_gen: v6e
topology: v6e:2x2x1
jax: 0.10.0
libtpu: 0.0.40
codegen_flags: <defaults>
</compile_context>

<pallas_src>
import functools

import jax
import jax.numpy as jnp
import numpy as np
from jax.experimental import pallas as pl
from jax.experimental.pallas import tpu as pltpu

EPS = 1e-5
VMEM_LIMIT = 32 * 1024 * 1024  # safe on v5e/v6e/v7x; well above what these tiles need


# ---------------------------------------------------------------------------
# Kernel 1: BatchNorm statistics -> fused scale/shift per channel.
# Tiled over row blocks of the flattened (N*H*W, C) activations; sum / sumsq
# accumulate in VMEM scratch, finalized on the last grid step.
# ---------------------------------------------------------------------------
def bn_stats_kernel(x_ref, bnw_ref, bnb_ref, scale_ref, shift_ref,
                    sum_ref, sq_ref, *, count):
    @pl.when(pl.program_id(0) == 0)
    def _init():
        sum_ref[...] = jnp.zeros_like(sum_ref)
        sq_ref[...] = jnp.zeros_like(sq_ref)

    x = x_ref[...]                                            # (TB, C) f32
    sum_ref[...] += jnp.sum(x, axis=0, keepdims=True)
    sq_ref[...] += jnp.sum(x * x, axis=0, keepdims=True)

    @pl.when(pl.program_id(0) == pl.num_programs(0) - 1)
    def _finalize():
        inv = jnp.float32(1.0 / count)
        mean = sum_ref[...] * inv
        # NOTE: single-pass E[x^2]-E[x]^2 (standard for BN kernels); fine for
        # roughly centered activations. Use Welford if |mean| >> std.
        var = sq_ref[...] * inv - mean * mean
        scale = bnw_ref[...] * jax.lax.rsqrt(var + EPS)
        scale_ref[...] = scale
        shift_ref[...] = bnb_ref[...] - mean * scale


# ---------------------------------------------------------------------------
# Kernel 2: per (batch, row-block) SPADE.
#   conv1  : one bf16 matmul over the im2col patches (K = 9*Cm) for TH+2 rows.
#   gamma/beta : 9 fused bf16 matmuls (Hd -> 2C) over the padded hidden scratch.
#   tail   : f32 BN FMA + SPADE combine.
# ---------------------------------------------------------------------------
def spade_kernel(x_ref, scale_ref, shift_ref, pat_ref, w1_ref, b1_ref,
                 wgb_ref, bgb_ref, out_ref, hid_ref):
    _, TH, W, C = out_ref.shape
    Hd = w1_ref.shape[1]
    K = w1_ref.shape[0]                       # 9 * Cm
    t = pl.program_id(1)
    row0 = pl.multiple_of(t * TH, TH)         # row offset into the padded im2col

    # ---- conv1 for TH+2 rows (1-row halo each side): single MXU matmul.
    pat = pat_ref[0, pl.ds(row0, TH + 2), :, :]               # (TH+2, W, 9Cm) bf16
    hraw = jnp.dot(pat.reshape((TH + 2) * W, K), w1_ref[...],
                   preferred_element_type=jnp.float32)        # ((TH+2)*W, Hd) f32
    hraw = (hraw + b1_ref[...]).astype(hid_ref.dtype)         # -> bf16

    # ---- hidden scratch: zero only the halo columns, write interior directly.
    zcol = jnp.zeros((TH + 2, 1, Hd), dtype=hid_ref.dtype)
    hid_ref[:, 0:1, :] = zcol
    hid_ref[:, W + 1:W + 2, :] = zcol
    hid_ref[:, 1:W + 1, :] = hraw.reshape(TH + 2, W, Hd)

    # Zero the halo rows only at the image borders (conv zero padding).
    @pl.when(t == 0)
    def _zero_top():
        hid_ref[0:1, :, :] = jnp.zeros((1, W + 2, Hd), dtype=hid_ref.dtype)

    @pl.when(t == pl.num_programs(1) - 1)
    def _zero_bottom():
        hid_ref[TH + 1:TH + 2, :, :] = jnp.zeros((1, W + 2, Hd), dtype=hid_ref.dtype)

    # ---- gamma/beta 3x3 conv: fused (Hd -> 2C) matmul per tap, patches read
    # straight from the VMEM scratch ref.
    gb = jnp.zeros((TH * W, 2 * C), dtype=jnp.float32)
    for dy in range(3):
        for dx in range(3):
            patch = hid_ref[dy:dy + TH, dx:dx + W, :].reshape(TH * W, Hd)
            gb = gb + jnp.dot(patch, wgb_ref[dy * 3 + dx],
                              preferred_element_type=jnp.float32)
    gb = gb + bgb_ref[...]
    gamma = gb[:, :C]
    beta = gb[:, C:]

    # ---- BatchNorm (precomputed scale/shift) + SPADE combine, all f32.
    x = x_ref[...].reshape(TH * W, C)
    xn = x * scale_ref[...] + shift_ref[...]
    out_ref[...] = (xn + xn * gamma + beta).reshape(1, TH, W, C)


# ---------------------------------------------------------------------------
# Tiling heuristics.
# ---------------------------------------------------------------------------
def _pick_tile_rows(h):
    for th in (64, 32, 16, 8):
        if h % th == 0 and h // th >= 2:
            return th
    return h


def _pick_stat_rows(r):
    for tb in (1024, 512, 256, 128, 64, 32, 16, 8):
        if r % tb == 0 and r // tb >= 2:
            return tb
    return r


# ---------------------------------------------------------------------------
# Wrapper: NCHW in / NCHW out, parameters in PyTorch layouts.
# ---------------------------------------------------------------------------
def spade_pallas(x_nchw, mod_nchw, params):
    N, C, H, W = x_nchw.shape
    Cm = mod_nchw.shape[1]
    Hd = params["w1"].shape[0]
    TH = _pick_tile_rows(H)

    # ---- layout plumbing (channels-last activations, im2col'd modulation) ----
    x_hwc = jnp.transpose(x_nchw, (0, 2, 3, 1)).astype(jnp.float32)      # (N,H,W,C)
    mod = jnp.transpose(mod_nchw, (0, 2, 3, 1)).astype(jnp.float32)      # (N,H,W,Cm)
    modp = jnp.pad(mod, ((0, 0), (1, 1), (1, 1), (0, 0)))                # (N,H+2,W+2,Cm)
    taps = [modp[:, dy:dy + H, dx:dx + W, :] for dy in range(3) for dx in range(3)]
    pat = jnp.concatenate(taps, axis=-1)                                 # (N,H,W,9*Cm)
    pat = jnp.pad(pat, ((0, 0), (1, 1), (0, 0), (0, 0)))                 # +row halo
    pat = pat.astype(jnp.bfloat16)                                       # (N,H+2,W,9*Cm)

    # conv1 weight (Hd, Cm, 3, 3) -> (9*Cm, Hd), rows ordered (dy, dx, cin).
    w1 = jnp.transpose(params["w1"], (2, 3, 1, 0)).reshape(9 * Cm, Hd)
    w1 = w1.astype(jnp.bfloat16)
    b1 = params["b1"].reshape(1, Hd).astype(jnp.float32)
    # gamma & beta conv weights fused: (2C, Hd, 3, 3) -> (9, Hd, 2C).
    wcat = jnp.concatenate([params["wg"], params["wb"]], axis=0)
    wgb = jnp.transpose(wcat, (2, 3, 1, 0)).reshape(9, Hd, 2 * C).astype(jnp.bfloat16)
    bgb = jnp.concatenate([params["bg"], params["bb"]]).reshape(1, 2 * C)
    bgb = bgb.astype(jnp.float32)
    bnw = params["bn_w"].reshape(1, C).astype(jnp.float32)
    bnb = params["bn_b"].reshape(1, C).astype(jnp.float32)

    # ---- kernel 1: BN statistics -> fused scale / shift ----
    R = N * H * W
    TB = _pick_stat_rows(R)
    x2d = x_hwc.reshape(R, C)
    scale, shift = pl.pallas_call(
        functools.partial(bn_stats_kernel, count=float(R)),
        grid=(R // TB,),
        in_specs=[
            pl.BlockSpec((TB, C), lambda i: (i, 0)),
            pl.BlockSpec((1, C), lambda i: (0, 0)),
            pl.BlockSpec((1, C), lambda i: (0, 0)),
        ],
        out_specs=(pl.BlockSpec((1, C), lambda i: (0, 0)),
                   pl.BlockSpec((1, C), lambda i: (0, 0))),
        out_shape=(jax.ShapeDtypeStruct((1, C), jnp.float32),
                   jax.ShapeDtypeStruct((1, C), jnp.float32)),
        scratch_shapes=[pltpu.VMEM((1, C), jnp.float32),
                        pltpu.VMEM((1, C), jnp.float32)],
        compiler_params=pltpu.CompilerParams(
            dimension_semantics=("arbitrary",),
            vmem_limit_bytes=VMEM_LIMIT),
    )(x2d, bnw, bnb)

    # ---- kernel 2: SPADE, grid over (batch, row blocks) ----
    out_hwc = pl.pallas_call(
        spade_kernel,
        grid=(N, H // TH),
        in_specs=[
            pl.BlockSpec((1, TH, W, C), lambda n, t: (n, t, 0, 0)),          # x tile
            pl.BlockSpec((1, C), lambda n, t: (0, 0)),                       # bn scale
            pl.BlockSpec((1, C), lambda n, t: (0, 0)),                       # bn shift
            pl.BlockSpec((1, H + 2, W, 9 * Cm), lambda n, t: (n, 0, 0, 0)),  # im2col
            pl.BlockSpec((9 * Cm, Hd), lambda n, t: (0, 0)),                 # w1
            pl.BlockSpec((1, Hd), lambda n, t: (0, 0)),                      # b1
            pl.BlockSpec((9, Hd, 2 * C), lambda n, t: (0, 0, 0)),            # wg|wb
            pl.BlockSpec((1, 2 * C), lambda n, t: (0, 0)),                   # bg|bb
        ],
        out_specs=pl.BlockSpec((1, TH, W, C), lambda n, t: (n, t, 0, 0)),
        out_shape=jax.ShapeDtypeStruct((N, H, W, C), jnp.float32),
        scratch_shapes=[pltpu.VMEM((TH + 2, W + 2, Hd), jnp.bfloat16)],
        compiler_params=pltpu.CompilerParams(
            dimension_semantics=("parallel", "arbitrary"),
            vmem_limit_bytes=VMEM_LIMIT),
    )(x_hwc, scale, shift, pat, w1, b1, wgb, bgb)

    return jnp.transpose(out_hwc, (0, 3, 1, 2))                             # NCHW


# ---------------------------------------------------------------------------
# Pure-JAX references.
#   conv_dtype=float32  : exact module semantics.
#   conv_dtype=bfloat16 : same bf16-operand / f32-accumulate policy as the
#                         kernel (for a tight structural correctness check).
# ---------------------------------------------------------------------------
def spade_ref(x, mod, p, conv_dtype=jnp.float32):
    mean = jnp.mean(x, axis=(0, 2, 3), keepdims=True)
    var = jnp.var(x, axis=(0, 2, 3), keepdims=True)           # biased (BN training)
    xn = (x - mean) / jnp.sqrt(var + EPS)
    xn = xn * p["bn_w"][None, :, None, None] + p["bn_b"][None, :, None, None]

    def conv(inp, w, b):
        y = jax.lax.conv_general_dilated(
            inp.astype(conv_dtype), w.astype(conv_dtype),
            window_strides=(1, 1), padding=((1, 1), (1, 1)),
            dimension_numbers=("NCHW", "OIHW", "NCHW"),
            preferred_element_type=jnp.float32)
        return y + b[None, :, None, None]

    h = conv(mod, p["w1"], p["b1"])
    if conv_dtype == jnp.bfloat16:
        h = h.astype(jnp.bfloat16).astype(jnp.float32)
    g = conv(h, p["wg"], p["bg"])
    bt = conv(h, p["wb"], p["bb"])
    return xn + xn * g + bt


if __name__ == "__main__":
    # Module-consistent small shapes: num_channel=4, num_channel_modulation=3,
    # hidden_size=32, 3x3 / stride 1 / pad 1 convs, batch=2, spatial 16x16.
    N, C, Cm, Hd, H, W = 2, 4, 3, 32, 16, 16

    key = jax.random.PRNGKey(0)
    ks = jax.random.split(key, 10)
    x = jax.random.normal(ks[0], (N, C, H, W), jnp.float32)
    mod = jax.random.normal(ks[1], (N, Cm, H, W), jnp.float32)

    params = {
        "w1": 0.1 * jax.random.normal(ks[2], (Hd, Cm, 3, 3), jnp.float32),
        "b1": 0.1 * jax.random.normal(ks[3], (Hd,), jnp.float32),
        "wg": 0.1 * jax.random.normal(ks[4], (C, Hd, 3, 3), jnp.float32),
        "bg": 0.1 * jax.random.normal(ks[5], (C,), jnp.float32),
        "wb": 0.1 * jax.random.normal(ks[6], (C, Hd, 3, 3), jnp.float32),
        "bb": 0.1 * jax.random.normal(ks[7], (C,), jnp.float32),
        "bn_w": 1.0 + 0.1 * jax.random.normal(ks[8], (C,), jnp.float32),
        "bn_b": 0.1 * jax.random.normal(ks[9], (C,), jnp.float32),
    }

    spade_fn = jax.jit(spade_pallas)
    out = jax.block_until_ready(spade_fn(x, mod, params))

    # Tight check against a precision-matched (bf16 matmul operands) reference.
    ref_bf16 = jax.block_until_ready(spade_ref(x, mod, params, jnp.bfloat16))
    np.testing.assert_allclose(np.asarray(out), np.asarray(ref_bf16),
                               rtol=5e-3, atol=5e-3)
    # Loose sanity check against the exact f32 module semantics.
    ref_f32 = jax.block_until_ready(spade_ref(x, mod, params, jnp.float32))
    np.testing.assert_allclose(np.asarray(out), np.asarray(ref_f32),
                               rtol=1e-1, atol=1e-1)
    print("KERNEL_OK")
</pallas_src>

<mosaic_0001>
module attributes {stable_mosaic.version = 11 : i64} {
  func.func @bn_stats_kernel(%arg0: i32, %arg1: memref<256x4xf32, #tpu.memory_space<vmem>>, %arg2: memref<1x4xf32, #tpu.memory_space<vmem>>, %arg3: memref<1x4xf32, #tpu.memory_space<vmem>>, %arg4: memref<1x4xf32, #tpu.memory_space<vmem>>, %arg5: memref<1x4xf32, #tpu.memory_space<vmem>>, %arg6: memref<1x4xf32, #tpu.memory_space<vmem>>, %arg7: memref<1x4xf32, #tpu.memory_space<vmem>>) attributes {dimension_semantics = [#tpu.dimension_semantics<arbitrary>], iteration_bounds = array<i64: 2>, scalar_prefetch = 0 : i64, scratch_operands = 2 : i64, tpu.core_type = #tpu.core_type<tc>, window_params = [{transform_indices = @transform_0, window_bounds = array<i64: 256, 4>}, {pipeline_mode = #tpu.pipeline_mode<synchronous>, transform_indices = @transform_1, window_bounds = array<i64: 1, 4>}, {pipeline_mode = #tpu.pipeline_mode<synchronous>, transform_indices = @transform_2, window_bounds = array<i64: 1, 4>}, {pipeline_mode = #tpu.pipeline_mode<synchronous>, transform_indices = @transform_3, window_bounds = array<i64: 1, 4>}, {pipeline_mode = #tpu.pipeline_mode<synchronous>, transform_indices = @transform_4, window_bounds = array<i64: 1, 4>}]} {
    %c0_i32 = arith.constant 0 : i32
    %0 = arith.cmpi eq, %arg0, %c0_i32 : i32
    %1 = arith.extui %0 : i1 to i32
    %c0_i32_0 = arith.constant 0 : i32
    %2 = arith.cmpi ne, %1, %c0_i32_0 : i32
    scf.if %2 {
      %cst_12 = arith.constant 0.000000e+00 : f32
      %18 = vector.broadcast %cst_12 : f32 to vector<1x4xf32>
      %c0_13 = arith.constant 0 : index
      %c0_14 = arith.constant 0 : index
      %19 = vector.load %arg6[%c0_13, %c0_14] : memref<1x4xf32, #tpu.memory_space<vmem>>, vector<1x4xf32>
      tpu.vector_store %arg6[%c0_13, %c0_14], %18 {strides = array<i32>} : memref<1x4xf32, #tpu.memory_space<vmem>>, vector<1x4xf32>,
      %cst_15 = arith.constant 0.000000e+00 : f32
      %20 = vector.broadcast %cst_15 : f32 to vector<1x4xf32>
      %c0_16 = arith.constant 0 : index
      %c0_17 = arith.constant 0 : index
      %21 = vector.load %arg7[%c0_16, %c0_17] : memref<1x4xf32, #tpu.memory_space<vmem>>, vector<1x4xf32>
      tpu.vector_store %arg7[%c0_16, %c0_17], %20 {strides = array<i32>} : memref<1x4xf32, #tpu.memory_space<vmem>>, vector<1x4xf32>,
    } else {
    }
    %c0 = arith.constant 0 : index
    %c0_1 = arith.constant 0 : index
    %3 = vector.load %arg1[%c0, %c0_1] : memref<256x4xf32, #tpu.memory_space<vmem>>, vector<256x4xf32>
    %c0_2 = arith.constant 0 : index
    %c0_3 = arith.constant 0 : index
    %4 = vector.load %arg6[%c0_2, %c0_3] : memref<1x4xf32, #tpu.memory_space<vmem>>, vector<1x4xf32>
    %cst = arith.constant dense<0.000000e+00> : vector<4xf32>
    %5 = vector.multi_reduction <add>, %3, %cst [0] : vector<256x4xf32> to vector<4xf32>
    %6 = vector.shape_cast %5 : vector<4xf32> to vector<1x4xf32>
    %7 = arith.addf %4, %6 : vector<1x4xf32>
    %c0_4 = arith.constant 0 : index
    %c0_5 = arith.constant 0 : index
    %8 = vector.load %arg6[%c0_4, %c0_5] : memref<1x4xf32, #tpu.memory_space<vmem>>, vector<1x4xf32>
    tpu.vector_store %arg6[%c0_4, %c0_5], %7 {strides = array<i32>} : memref<1x4xf32, #tpu.memory_space<vmem>>, vector<1x4xf32>,
    %c0_6 = arith.constant 0 : index
    %c0_7 = arith.constant 0 : index
    %9 = vector.load %arg7[%c0_6, %c0_7] : memref<1x4xf32, #tpu.memory_space<vmem>>, vector<1x4xf32>
    %10 = arith.mulf %3, %3 : vector<256x4xf32>
    %cst_8 = arith.constant dense<0.000000e+00> : vector<4xf32>
    %11 = vector.multi_reduction <add>, %10, %cst_8 [0] : vector<256x4xf32> to vector<4xf32>
    %12 = vector.shape_cast %11 : vector<4xf32> to vector<1x4xf32>
    %13 = arith.addf %9, %12 : vector<1x4xf32>
    %c0_9 = arith.constant 0 : index
    %c0_10 = arith.constant 0 : index
    %14 = vector.load %arg7[%c0_9, %c0_10] : memref<1x4xf32, #tpu.memory_space<vmem>>, vector<1x4xf32>
    tpu.vector_store %arg7[%c0_9, %c0_10], %13 {strides = array<i32>} : memref<1x4xf32, #tpu.memory_space<vmem>>, vector<1x4xf32>,
    %c1_i32 = arith.constant 1 : i32
    %15 = arith.cmpi eq, %arg0, %c1_i32 : i32
    %16 = arith.extui %15 : i1 to i32
    %c0_i32_11 = arith.constant 0 : i32
    %17 = arith.cmpi ne, %16, %c0_i32_11 : i32
    scf.if %17 {
      %c0_12 = arith.constant 0 : index
      %c0_13 = arith.constant 0 : index
      %18 = vector.load %arg6[%c0_12, %c0_13] : memref<1x4xf32, #tpu.memory_space<vmem>>, vector<1x4xf32>
      %cst_14 = arith.constant 0.001953125 : f32
      %19 = vector.broadcast %cst_14 : f32 to vector<1x4xf32>
      %20 = arith.mulf %18, %19 : vector<1x4xf32>
      %c0_15 = arith.constant 0 : index
      %c0_16 = arith.constant 0 : index
      %21 = vector.load %arg7[%c0_15, %c0_16] : memref<1x4xf32, #tpu.memory_space<vmem>>, vector<1x4xf32>
      %cst_17 = arith.constant 0.001953125 : f32
      %22 = vector.broadcast %cst_17 : f32 to vector<1x4xf32>
      %23 = arith.mulf %21, %22 : vector<1x4xf32>
      %24 = arith.mulf %20, %20 : vector<1x4xf32>
      %25 = arith.subf %23, %24 : vector<1x4xf32>
      %c0_18 = arith.constant 0 : index
      %c0_19 = arith.constant 0 : index
      %26 = vector.load %arg2[%c0_18, %c0_19] : memref<1x4xf32, #tpu.memory_space<vmem>>, vector<1x4xf32>
      %cst_20 = arith.constant 9.99999974E-6 : f32
      %27 = vector.broadcast %cst_20 : f32 to vector<1x4xf32>
      %28 = arith.addf %25, %27 : vector<1x4xf32>
      %29 = math.rsqrt %28 : vector<1x4xf32>
      %30 = arith.mulf %26, %29 : vector<1x4xf32>
      %c0_21 = arith.constant 0 : index
      %c0_22 = arith.constant 0 : index
      %31 = vector.load %arg4[%c0_21, %c0_22] : memref<1x4xf32, #tpu.memory_space<vmem>>, vector<1x4xf32>
      tpu.vector_store %arg4[%c0_21, %c0_22], %30 {strides = array<i32>} : memref<1x4xf32, #tpu.memory_space<vmem>>, vector<1x4xf32>,
      %c0_23 = arith.constant 0 : index
      %c0_24 = arith.constant 0 : index
      %32 = vector.load %arg3[%c0_23, %c0_24] : memref<1x4xf32, #tpu.memory_space<vmem>>, vector<1x4xf32>
      %33 = arith.mulf %20, %30 : vector<1x4xf32>
      %34 = arith.subf %32, %33 : vector<1x4xf32>
      %c0_25 = arith.constant 0 : index
      %c0_26 = arith.constant 0 : index
      %35 = vector.load %arg5[%c0_25, %c0_26] : memref<1x4xf32, #tpu.memory_space<vmem>>, vector<1x4xf32>
      tpu.vector_store %arg5[%c0_25, %c0_26], %34 {strides = array<i32>} : memref<1x4xf32, #tpu.memory_space<vmem>>, vector<1x4xf32>,
    } else {
    }
    return
  }
  func.func @transform_0(%arg0: i32) -> (i32, i32) {
    %c0_i32 = arith.constant 0 : i32
    %c0_i32_0 = arith.constant 0 : i32
    return %arg0, %c0_i32 : i32, i32
  }
  func.func @transform_1(%arg0: i32) -> (i32, i32) {
    %c0_i32 = arith.constant 0 : i32
    %c0_i32_0 = arith.constant 0 : i32
    %c0_i32_1 = arith.constant 0 : i32
    return %c0_i32, %c0_i32_0 : i32, i32
  }
  func.func @transform_2(%arg0: i32) -> (i32, i32) {
    %c0_i32 = arith.constant 0 : i32
    %c0_i32_0 = arith.constant 0 : i32
    %c0_i32_1 = arith.constant 0 : i32
    return %c0_i32, %c0_i32_0 : i32, i32
  }
  func.func @transform_3(%arg0: i32) -> (i32, i32) {
    %c0_i32 = arith.constant 0 : i32
    %c0_i32_0 = arith.constant 0 : i32
    %c0_i32_1 = arith.constant 0 : i32
    return %c0_i32, %c0_i32_0 : i32, i32
  }
  func.func @transform_4(%arg0: i32) -> (i32, i32) {
    %c0_i32 = arith.constant 0 : i32
    %c0_i32_0 = arith.constant 0 : i32
    %c0_i32_1 = arith.constant 0 : i32
    return %c0_i32, %c0_i32_0 : i32, i32
  }
}

module attributes {stable_mosaic.version = 11 : i64} {
  func.func @spade_kernel(%arg0: i32, %arg1: i32, %arg2: memref<1x8x16x4xf32, #tpu.memory_space<vmem>>, %arg3: memref<1x4xf32, #tpu.memory_space<vmem>>, %arg4: memref<1x4xf32, #tpu.memory_space<vmem>>, %arg5: memref<1x18x16x27xbf16, #tpu.memory_space<vmem>>, %arg6: memref<27x32xbf16, #tpu.memory_space<vmem>>, %arg7: memref<1x32xf32, #tpu.memory_space<vmem>>, %arg8: memref<9x32x8xbf16, #tpu.memory_space<vmem>>, %arg9: memref<1x8xf32, #tpu.memory_space<vmem>>, %arg10: memref<1x8x16x4xf32, #tpu.memory_space<vmem>>, %arg11: memref<10x18x32xbf16, #tpu.memory_space<vmem>>) attributes {dimension_semantics = [#tpu.dimension_semantics<parallel>, #tpu.dimension_semantics<arbitrary>], iteration_bounds = array<i64: 2, 2>, scalar_prefetch = 0 : i64, scratch_operands = 1 : i64, tpu.core_type = #tpu.core_type<tc>, window_params = [{transform_indices = @transform_0, window_bounds = array<i64: 1, 8, 16, 4>}, {pipeline_mode = #tpu.pipeline_mode<synchronous>, transform_indices = @transform_1, window_bounds = array<i64: 1, 4>}, {pipeline_mode = #tpu.pipeline_mode<synchronous>, transform_indices = @transform_2, window_bounds = array<i64: 1, 4>}, {transform_indices = @transform_3, window_bounds = array<i64: 1, 18, 16, 27>}, {pipeline_mode = #tpu.pipeline_mode<synchronous>, transform_indices = @transform_4, window_bounds = array<i64: 27, 32>}, {pipeline_mode = #tpu.pipeline_mode<synchronous>, transform_indices = @transform_5, window_bounds = array<i64: 1, 32>}, {pipeline_mode = #tpu.pipeline_mode<synchronous>, transform_indices = @transform_6, window_bounds = array<i64: 9, 32, 8>}, {pipeline_mode = #tpu.pipeline_mode<synchronous>, transform_indices = @transform_7, window_bounds = array<i64: 1, 8>}, {transform_indices = @transform_8, window_bounds = array<i64: 1, 8, 16, 4>}]} {
    %c8_i32 = arith.constant 8 : i32
    %0 = arith.muli %arg1, %c8_i32 : i32
    %1 = tpu.assume_multiple %0, 8 : i32
    %c0 = arith.constant 0 : index
    %2 = arith.index_cast %1 : i32 to index
    %c0_0 = arith.constant 0 : index
    %c0_1 = arith.constant 0 : index
    %3 = vector.load %arg5[%c0, %2, %c0_0, %c0_1] : memref<1x18x16x27xbf16, #tpu.memory_space<vmem>>, vector<1x10x16x27xbf16>
    %4 = vector.shape_cast %3 : vector<1x10x16x27xbf16> to vector<10x16x27xbf16>
    %5 = vector.shape_cast %4 : vector<10x16x27xbf16> to vector<160x27xbf16>
    %c0_2 = arith.constant 0 : index
    %c0_3 = arith.constant 0 : index
    %6 = vector.load %arg6[%c0_2, %c0_3] : memref<27x32xbf16, #tpu.memory_space<vmem>>, vector<27x32xbf16>
    %cst = arith.constant dense<0.000000e+00> : vector<160x32xf32>
    %7 = tpu.matmul %5, %6, %cst {dimension_numbers = #tpu.dot_dimension_numbers<[1], [0], [0], [1], [0, 0, 1, 1], [], []>} : vector<160x27xbf16>, vector<27x32xbf16>, vector<160x32xf32> -> vector<160x32xf32>
    %c0_4 = arith.constant 0 : index
    %c0_5 = arith.constant 0 : index
    %8 = vector.load %arg7[%c0_4, %c0_5] : memref<1x32xf32, #tpu.memory_space<vmem>>, vector<1x32xf32>
    %9 = vector.broadcast %8 : vector<1x32xf32> to vector<160x32xf32>
    %10 = arith.addf %7, %9 : vector<160x32xf32>
    %11 = arith.truncf %10 : vector<160x32xf32> to vector<160x32xbf16>
    %cst_6 = arith.constant 0.000000e+00 : bf16
    %12 = vector.broadcast %cst_6 : bf16 to vector<10x1x32xbf16>
    %c0_7 = arith.constant 0 : index
    %c0_8 = arith.constant 0 : index
    %c0_9 = arith.constant 0 : index
    %13 = vector.load %arg11[%c0_7, %c0_8, %c0_9] : memref<10x18x32xbf16, #tpu.memory_space<vmem>>, vector<10x1x32xbf16>
    tpu.vector_store %arg11[%c0_7, %c0_8, %c0_9], %12 {strides = array<i32>} : memref<10x18x32xbf16, #tpu.memory_space<vmem>>, vector<10x1x32xbf16>,
    %c0_10 = arith.constant 0 : index
    %c17 = arith.constant 17 : index
    %c0_11 = arith.constant 0 : index
    %14 = vector.load %arg11[%c0_10, %c17, %c0_11] : memref<10x18x32xbf16, #tpu.memory_space<vmem>>, vector<10x1x32xbf16>
    tpu.vector_store %arg11[%c0_10, %c17, %c0_11], %12 {strides = array<i32>} : memref<10x18x32xbf16, #tpu.memory_space<vmem>>, vector<10x1x32xbf16>,
    %15 = vector.shape_cast %11 : vector<160x32xbf16> to vector<10x16x32xbf16>
    %c0_12 = arith.constant 0 : index
    %c1 = arith.constant 1 : index
    %c0_13 = arith.constant 0 : index
    %16 = vector.load %arg11[%c0_12, %c1, %c0_13] : memref<10x18x32xbf16, #tpu.memory_space<vmem>>, vector<10x16x32xbf16>
    tpu.vector_store %arg11[%c0_12, %c1, %c0_13], %15 {strides = array<i32>} : memref<10x18x32xbf16, #tpu.memory_space<vmem>>, vector<10x16x32xbf16>,
    %c0_i32 = arith.constant 0 : i32
    %17 = arith.cmpi eq, %arg1, %c0_i32 : i32
    %18 = arith.extui %17 : i1 to i32
    %c0_i32_14 = arith.constant 0 : i32
    %19 = arith.cmpi ne, %18, %c0_i32_14 : i32
    scf.if %19 {
      %cst_87 = arith.constant 0.000000e+00 : bf16
      %96 = vector.broadcast %cst_87 : bf16 to vector<1x18x32xbf16>
      %c0_88 = arith.constant 0 : index
      %c0_89 = arith.constant 0 : index
      %c0_90 = arith.constant 0 : index
      %97 = vector.load %arg11[%c0_88, %c0_89, %c0_90] : memref<10x18x32xbf16, #tpu.memory_space<vmem>>, vector<1x18x32xbf16>
      tpu.vector_store %arg11[%c0_88, %c0_89, %c0_90], %96 {strides = array<i32>} : memref<10x18x32xbf16, #tpu.memory_space<vmem>>, vector<1x18x32xbf16>,
    } else {
    }
    %c1_i32 = arith.constant 1 : i32
    %20 = arith.cmpi eq, %arg1, %c1_i32 : i32
    %21 = arith.extui %20 : i1 to i32
    %c0_i32_15 = arith.constant 0 : i32
    %22 = arith.cmpi ne, %21, %c0_i32_15 : i32
    scf.if %22 {
      %cst_87 = arith.constant 0.000000e+00 : bf16
      %96 = vector.broadcast %cst_87 : bf16 to vector<1x18x32xbf16>
      %c9 = arith.constant 9 : index
      %c0_88 = arith.constant 0 : index
      %c0_89 = arith.constant 0 : index
      %97 = vector.load %arg11[%c9, %c0_88, %c0_89] : memref<10x18x32xbf16, #tpu.memory_space<vmem>>, vector<1x18x32xbf16>
      tpu.vector_store %arg11[%c9, %c0_88, %c0_89], %96 {strides = array<i32>} : memref<10x18x32xbf16, #tpu.memory_space<vmem>>, vector<1x18x32xbf16>,
    } else {
    }
    %cst_16 = arith.constant 0.000000e+00 : f32
    %23 = vector.broadcast %cst_16 : f32 to vector<128x8xf32>
    %c0_17 = arith.constant 0 : index
    %c0_18 = arith.constant 0 : index
    %c0_19 = arith.constant 0 : index
    %24 = vector.load %arg11[%c0_17, %c0_18, %c0_19] : memref<10x18x32xbf16, #tpu.memory_space<vmem>>, vector<8x16x32xbf16>
    %25 = vector.shape_cast %24 : vector<8x16x32xbf16> to vector<128x32xbf16>
    %c0_20 = arith.constant 0 : index
    %c0_21 = arith.constant 0 : index
    %c0_22 = arith.constant 0 : index
    %26 = vector.load %arg8[%c0_20, %c0_21, %c0_22] : memref<9x32x8xbf16, #tpu.memory_space<vmem>>, vector<1x32x8xbf16>
    %27 = vector.shape_cast %26 : vector<1x32x8xbf16> to vector<32x8xbf16>
    %cst_23 = arith.constant dense<0.000000e+00> : vector<128x8xf32>
    %28 = tpu.matmul %25, %27, %cst_23 {dimension_numbers = #tpu.dot_dimension_numbers<[1], [0], [0], [1], [0, 0, 1, 1], [], []>} : vector<128x32xbf16>, vector<32x8xbf16>, vector<128x8xf32> -> vector<128x8xf32>
    %29 = arith.addf %23, %28 : vector<128x8xf32>
    %c0_24 = arith.constant 0 : index
    %c1_25 = arith.constant 1 : index
    %c0_26 = arith.constant 0 : index
    %30 = vector.load %arg11[%c0_24, %c1_25, %c0_26] : memref<10x18x32xbf16, #tpu.memory_space<vmem>>, vector<8x16x32xbf16>
    %31 = vector.shape_cast %30 : vector<8x16x32xbf16> to vector<128x32xbf16>
    %c1_27 = arith.constant 1 : index
    %c0_28 = arith.constant 0 : index
    %c0_29 = arith.constant 0 : index
    %32 = vector.load %arg8[%c1_27, %c0_28, %c0_29] : memref<9x32x8xbf16, #tpu.memory_space<vmem>>, vector<1x32x8xbf16>
    %33 = vector.shape_cast %32 : vector<1x32x8xbf16> to vector<32x8xbf16>
    %cst_30 = arith.constant dense<0.000000e+00> : vector<128x8xf32>
    %34 = tpu.matmul %31, %33, %cst_30 {dimension_numbers = #tpu.dot_dimension_numbers<[1], [0], [0], [1], [0, 0, 1, 1], [], []>} : vector<128x32xbf16>, vector<32x8xbf16>, vector<128x8xf32> -> vector<128x8xf32>
    %35 = arith.addf %29, %34 : vector<128x8xf32>
    %c0_31 = arith.constant 0 : index
    %c2 = arith.constant 2 : index
    %c0_32 = arith.constant 0 : index
    %36 = vector.load %arg11[%c0_31, %c2, %c0_32] : memref<10x18x32xbf16, #tpu.memory_space<vmem>>, vector<8x16x32xbf16>
    %37 = vector.shape_cast %36 : vector<8x16x32xbf16> to vector<128x32xbf16>
    %c2_33 = arith.constant 2 : index
    %c0_34 = arith.constant 0 : index
    %c0_35 = arith.constant 0 : index
    %38 = vector.load %arg8[%c2_33, %c0_34, %c0_35] : memref<9x32x8xbf16, #tpu.memory_space<vmem>>, vector<1x32x8xbf16>
    %39 = vector.shape_cast %38 : vector<1x32x8xbf16> to vector<32x8xbf16>
    %cst_36 = arith.constant dense<0.000000e+00> : vector<128x8xf32>
    %40 = tpu.matmul %37, %39, %cst_36 {dimension_numbers = #tpu.dot_dimension_numbers<[1], [0], [0], [1], [0, 0, 1, 1], [], []>} : vector<128x32xbf16>, vector<32x8xbf16>, vector<128x8xf32> -> vector<128x8xf32>
    %41 = arith.addf %35, %40 : vector<128x8xf32>
    %c1_37 = arith.constant 1 : index
    %c0_38 = arith.constant 0 : index
    %c0_39 = arith.constant 0 : index
    %42 = vector.load %arg11[%c1_37, %c0_38, %c0_39] : memref<10x18x32xbf16, #tpu.memory_space<vmem>>, vector<8x16x32xbf16>
    %43 = vector.shape_cast %42 : vector<8x16x32xbf16> to vector<128x32xbf16>
    %c3 = arith.constant 3 : index
    %c0_40 = arith.constant 0 : index
    %c0_41 = arith.constant 0 : index
    %44 = vector.load %arg8[%c3, %c0_40, %c0_41] : memref<9x32x8xbf16, #tpu.memory_space<vmem>>, vector<1x32x8xbf16>
    %45 = vector.shape_cast %44 : vector<1x32x8xbf16> to vector<32x8xbf16>
    %cst_42 = arith.constant dense<0.000000e+00> : vector<128x8xf32>
    %46 = tpu.matmul %43, %45, %cst_42 {dimension_numbers = #tpu.dot_dimension_numbers<[1], [0], [0], [1], [0, 0, 1, 1], [], []>} : vector<128x32xbf16>, vector<32x8xbf16>, vector<128x8xf32> -> vector<128x8xf32>
    %47 = arith.addf %41, %46 : vector<128x8xf32>
    %c1_43 = arith.constant 1 : index
    %c1_44 = arith.constant 1 : index
    %c0_45 = arith.constant 0 : index
    %48 = vector.load %arg11[%c1_43, %c1_44, %c0_45] : memref<10x18x32xbf16, #tpu.memory_space<vmem>>, vector<8x16x32xbf16>
    %49 = vector.shape_cast %48 : vector<8x16x32xbf16> to vector<128x32xbf16>
    %c4 = arith.constant 4 : index
    %c0_46 = arith.constant 0 : index
    %c0_47 = arith.constant 0 : index
    %50 = vector.load %arg8[%c4, %c0_46, %c0_47] : memref<9x32x8xbf16, #tpu.memory_space<vmem>>, vector<1x32x8xbf16>
    %51 = vector.shape_cast %50 : vector<1x32x8xbf16> to vector<32x8xbf16>
    %cst_48 = arith.constant dense<0.000000e+00> : vector<128x8xf32>
    %52 = tpu.matmul %49, %51, %cst_48 {dimension_numbers = #tpu.dot_dimension_numbers<[1], [0], [0], [1], [0, 0, 1, 1], [], []>} : vector<128x32xbf16>, vector<32x8xbf16>, vector<128x8xf32> -> vector<128x8xf32>
    %53 = arith.addf %47, %52 : vector<128x8xf32>
    %c1_49 = arith.constant 1 : index
    %c2_50 = arith.constant 2 : index
    %c0_51 = arith.constant 0 : index
    %54 = vector.load %arg11[%c1_49, %c2_50, %c0_51] : memref<10x18x32xbf16, #tpu.memory_space<vmem>>, vector<8x16x32xbf16>
    %55 = vector.shape_cast %54 : vector<8x16x32xbf16> to vector<128x32xbf16>
    %c5 = arith.constant 5 : index
    %c0_52 = arith.constant 0 : index
    %c0_53 = arith.constant 0 : index
    %56 = vector.load %arg8[%c5, %c0_52, %c0_53] : memref<9x32x8xbf16, #tpu.memory_space<vmem>>, vector<1x32x8xbf16>
    %57 = vector.shape_cast %56 : vector<1x32x8xbf16> to vector<32x8xbf16>
    %cst_54 = arith.constant dense<0.000000e+00> : vector<128x8xf32>
    %58 = tpu.matmul %55, %57, %cst_54 {dimension_numbers = #tpu.dot_dimension_numbers<[1], [0], [0], [1], [0, 0, 1, 1], [], []>} : vector<128x32xbf16>, vector<32x8xbf16>, vector<128x8xf32> -> vector<128x8xf32>
    %59 = arith.addf %53, %58 : vector<128x8xf32>
    %c2_55 = arith.constant 2 : index
    %c0_56 = arith.constant 0 : index
    %c0_57 = arith.constant 0 : index
    %60 = vector.load %arg11[%c2_55, %c0_56, %c0_57] : memref<10x18x32xbf16, #tpu.memory_space<vmem>>, vector<8x16x32xbf16>
    %61 = vector.shape_cast %60 : vector<8x16x32xbf16> to vector<128x32xbf16>
    %c6 = arith.constant 6 : index
    %c0_58 = arith.constant 0 : index
    %c0_59 = arith.constant 0 : index
    %62 = vector.load %arg8[%c6, %c0_58, %c0_59] : memref<9x32x8xbf16, #tpu.memory_space<vmem>>, vector<1x32x8xbf16>
    %63 = vector.shape_cast %62 : vector<1x32x8xbf16> to vector<32x8xbf16>
    %cst_60 = arith.constant dense<0.000000e+00> : vector<128x8xf32>
    %64 = tpu.matmul %61, %63, %cst_60 {dimension_numbers = #tpu.dot_dimension_numbers<[1], [0], [0], [1], [0, 0, 1, 1], [], []>} : vector<128x32xbf16>, vector<32x8xbf16>, vector<128x8xf32> -> vector<128x8xf32>
    %65 = arith.addf %59, %64 : vector<128x8xf32>
    %c2_61 = arith.constant 2 : index
    %c1_62 = arith.constant 1 : index
    %c0_63 = arith.constant 0 : index
    %66 = vector.load %arg11[%c2_61, %c1_62, %c0_63] : memref<10x18x32xbf16, #tpu.memory_space<vmem>>, vector<8x16x32xbf16>
    %67 = vector.shape_cast %66 : vector<8x16x32xbf16> to vector<128x32xbf16>
    %c7 = arith.constant 7 : index
    %c0_64 = arith.constant 0 : index
    %c0_65 = arith.constant 0 : index
    %68 = vector.load %arg8[%c7, %c0_64, %c0_65] : memref<9x32x8xbf16, #tpu.memory_space<vmem>>, vector<1x32x8xbf16>
    %69 = vector.shape_cast %68 : vector<1x32x8xbf16> to vector<32x8xbf16>
    %cst_66 = arith.constant dense<0.000000e+00> : vector<128x8xf32>
    %70 = tpu.matmul %67, %69, %cst_66 {dimension_numbers = #tpu.dot_dimension_numbers<[1], [0], [0], [1], [0, 0, 1, 1], [], []>} : vector<128x32xbf16>, vector<32x8xbf16>, vector<128x8xf32> -> vector<128x8xf32>
    %71 = arith.addf %65, %70 : vector<128x8xf32>
    %c2_67 = arith.constant 2 : index
    %c2_68 = arith.constant 2 : index
    %c0_69 = arith.constant 0 : index
    %72 = vector.load %arg11[%c2_67, %c2_68, %c0_69] : memref<10x18x32xbf16, #tpu.memory_space<vmem>>, vector<8x16x32xbf16>
    %73 = vector.shape_cast %72 : vector<8x16x32xbf16> to vector<128x32xbf16>
    %c8 = arith.constant 8 : index
    %c0_70 = arith.constant 0 : index
    %c0_71 = arith.constant 0 : index
    %74 = vector.load %arg8[%c8, %c0_70, %c0_71] : memref<9x32x8xbf16, #tpu.memory_space<vmem>>, vector<1x32x8xbf16>
    %75 = vector.shape_cast %74 : vector<1x32x8xbf16> to vector<32x8xbf16>
    %cst_72 = arith.constant dense<0.000000e+00> : vector<128x8xf32>
    %76 = tpu.matmul %73, %75, %cst_72 {dimension_numbers = #tpu.dot_dimension_numbers<[1], [0], [0], [1], [0, 0, 1, 1], [], []>} : vector<128x32xbf16>, vector<32x8xbf16>, vector<128x8xf32> -> vector<128x8xf32>
    %77 = arith.addf %71, %76 : vector<128x8xf32>
    %c0_73 = arith.constant 0 : index
    %c0_74 = arith.constant 0 : index
    %78 = vector.load %arg9[%c0_73, %c0_74] : memref<1x8xf32, #tpu.memory_space<vmem>>, vector<1x8xf32>
    %79 = vector.broadcast %78 : vector<1x8xf32> to vector<128x8xf32>
    %80 = arith.addf %77, %79 : vector<128x8xf32>
    %81 = vector.extract_strided_slice %80 {offsets = [0, 0], sizes = [128, 4], strides = [1, 1]} : vector<128x8xf32> to vector<128x4xf32>
    %82 = vector.extract_strided_slice %80 {offsets = [0, 4], sizes = [128, 4], strides = [1, 1]} : vector<128x8xf32> to vector<128x4xf32>
    %c0_75 = arith.constant 0 : index
    %c0_76 = arith.constant 0 : index
    %c0_77 = arith.constant 0 : index
    %c0_78 = arith.constant 0 : index
    %83 = vector.load %arg2[%c0_75, %c0_76, %c0_77, %c0_78] : memref<1x8x16x4xf32, #tpu.memory_space<vmem>>, vector<1x8x16x4xf32>
    %84 = vector.shape_cast %83 : vector<1x8x16x4xf32> to vector<128x4xf32>
    %c0_79 = arith.constant 0 : index
    %c0_80 = arith.constant 0 : index
    %85 = vector.load %arg3[%c0_79, %c0_80] : memref<1x4xf32, #tpu.memory_space<vmem>>, vector<1x4xf32>
    %86 = vector.broadcast %85 : vector<1x4xf32> to vector<128x4xf32>
    %87 = arith.mulf %84, %86 : vector<128x4xf32>
    %c0_81 = arith.constant 0 : index
    %c0_82 = arith.constant 0 : index
    %88 = vector.load %arg4[%c0_81, %c0_82] : memref<1x4xf32, #tpu.memory_space<vmem>>, vector<1x4xf32>
    %89 = vector.broadcast %88 : vector<1x4xf32> to vector<128x4xf32>
    %90 = arith.addf %87, %89 : vector<128x4xf32>
    %91 = arith.mulf %90, %81 : vector<128x4xf32>
    %92 = arith.addf %90, %91 : vector<128x4xf32>
    %93 = arith.addf %92, %82 : vector<128x4xf32>
    %94 = vector.shape_cast %93 : vector<128x4xf32> to vector<1x8x16x4xf32>
    %c0_83 = arith.constant 0 : index
    %c0_84 = arith.constant 0 : index
    %c0_85 = arith.constant 0 : index
    %c0_86 = arith.constant 0 : index
    %95 = vector.load %arg10[%c0_83, %c0_84, %c0_85, %c0_86] : memref<1x8x16x4xf32, #tpu.memory_space<vmem>>, vector<1x8x16x4xf32>
    tpu.vector_store %arg10[%c0_83, %c0_84, %c0_85, %c0_86], %94 {strides = array<i32>} : memref<1x8x16x4xf32, #tpu.memory_space<vmem>>, vector<1x8x16x4xf32>,
    return
  }
  func.func @transform_0(%arg0: i32, %arg1: i32) -> (i32, i32, i32, i32) {
    %c0_i32 = arith.constant 0 : i32
    %c0_i32_0 = arith.constant 0 : i32
    %c0_i32_1 = arith.constant 0 : i32
    return %arg0, %arg1, %c0_i32, %c0_i32_0 : i32, i32, i32, i32
  }
  func.func @transform_1(%arg0: i32, %arg1: i32) -> (i32, i32) {
    %c0_i32 = arith.constant 0 : i32
    %c0_i32_0 = arith.constant 0 : i32
    %c0_i32_1 = arith.constant 0 : i32
    return %c0_i32, %c0_i32_0 : i32, i32
  }
  func.func @transform_2(%arg0: i32, %arg1: i32) -> (i32, i32) {
    %c0_i32 = arith.constant 0 : i32
    %c0_i32_0 = arith.constant 0 : i32
    %c0_i32_1 = arith.constant 0 : i32
    return %c0_i32, %c0_i32_0 : i32, i32
  }
  func.func @transform_3(%arg0: i32, %arg1: i32) -> (i32, i32, i32, i32) {
    %c0_i32 = arith.constant 0 : i32
    %c0_i32_0 = arith.constant 0 : i32
    %c0_i32_1 = arith.constant 0 : i32
    %c0_i32_2 = arith.constant 0 : i32
    return %arg0, %c0_i32, %c0_i32_0, %c0_i32_1 : i32, i32, i32, i32
  }
  func.func @transform_4(%arg0: i32, %arg1: i32) -> (i32, i32) {
    %c0_i32 = arith.constant 0 : i32
    %c0_i32_0 = arith.constant 0 : i32
    %c0_i32_1 = arith.constant 0 : i32
    return %c0_i32, %c0_i32_0 : i32, i32
  }
  func.func @transform_5(%arg0: i32, %arg1: i32) -> (i32, i32) {
    %c0_i32 = arith.constant 0 : i32
    %c0_i32_0 = arith.constant 0 : i32
    %c0_i32_1 = arith.constant 0 : i32
    return %c0_i32, %c0_i32_0 : i32, i32
  }
  func.func @transform_6(%arg0: i32, %arg1: i32) -> (i32, i32, i32) {
    %c0_i32 = arith.constant 0 : i32
    %c0_i32_0 = arith.constant 0 : i32
    %c0_i32_1 = arith.constant 0 : i32
    %c0_i32_2 = arith.constant 0 : i32
    return %c0_i32, %c0_i32_0, %c0_i32_1 : i32, i32, i32
  }
  func.func @transform_7(%arg0: i32, %arg1: i32) -> (i32, i32) {
    %c0_i32 = arith.constant 0 : i32
    %c0_i32_0 = arith.constant 0 : i32
    %c0_i32_1 = arith.constant 0 : i32
    return %c0_i32, %c0_i32_0 : i32, i32
  }
  func.func @transform_8(%arg0: i32, %arg1: i32) -> (i32, i32, i32, i32) {
    %c0_i32 = arith.constant 0 : i32
    %c0_i32_0 = arith.constant 0 : i32
    %c0_i32_1 = arith.constant 0 : i32
    return %arg0, %arg1, %c0_i32, %c0_i32_0 : i32, i32, i32, i32
  }
}

</mosaic_0001>

<llo_original>
// kernel: spade_pallas.2
$region0: #{spade_pallas.2}
  #allocation0 [shape = 'u32[]', space=smem, size = 0x4, offset = 0x4, fixed_abs, tag = 'smem constant byte address 0x4 - core index']
  #allocation1 [shape = 'u32[144,128]{1,0:T(1,128)}', space=vmem, size = 0x12000, scoped, tag = 'internal scratch']
  #allocation2 [shape = 'f32[1,4]{1,0:T(1,128)}', space=vmem, size = 0x200, scoped, tag = 'scratch operand']
  #allocation3 [shape = 'f32[1,4]{1,0:T(1,128)}', space=vmem, size = 0x200, scoped, tag = 'scratch operand']
  %s0 = inlined_call_operand.vmem [shape: f32[512,4], index: 0, kind: input, shape index: {}]
  %s1 = inlined_call_operand.vmem [shape: f32[1,4], index: 1, kind: input, shape index: {}]
  %s2 = inlined_call_operand.vmem [shape: f32[1,4], index: 2, kind: input, shape index: {}]
  %s3 = inlined_call_operand.vmem [shape: f32[1,4], index: 3, kind: output, shape index: {0}]
  %s4 = inlined_call_operand.vmem [shape: f32[1,4], index: 4, kind: output, shape index: {1}]
  %5 = xla_tuple %s3, %s4
  %s6 = sld [smem:[#allocation0]]
  $region61: #{spade_pallas.2} parent=0
    _
  %s8 = ssub.s32 1, %s6
  %s9 = scalar_select 0, %s8, %s6
  loop: start=0, step=1, limit=4
  $region2: #{spade_pallas.2} parent=0 // loop_pre_header
    _
  $region3: #{spade_pallas.2} parent=0 // loop_header
    %s11 = sphi 0, %s15
    %p12 = scmp.ge.s32.totalorder %s11, 4
    %s21 = sphi 0, %s23
    %s24 = sphi 0, %s21
    %s25 = sphi 0, %s24
    %s41 = sphi 0, %s25
    %s45 = sphi 0, %s45
    %s47 = sphi 0, %s45
    %s48 = sphi 0, %s47
    %s62 = sphi 0, %s48
    %s66 = sphi 0, %s66
    %s68 = sphi 0, %s66
    %s69 = sphi 0, %s68
    %s83 = sphi 0, %s69
    %s87 = sphi 0, %s87
    %s89 = sphi 0, %s87
    %s90 = sphi 0, %s89
    %s104 = sphi 0, %s90
    %s108 = sphi 0, %s108
    %s110 = sphi 0, %s108
    %s111 = sphi 0, %s110
    %s125 = sphi 0, %s111
  $region4: #{spade_pallas.2} parent=0 // loop_header_branch
    %14 = sbr.rel (%p12) target = $region8
  $region5: #{spade_pallas.2} parent=0 // loop_body
    %s16 = ssub.s32 %s11, 1
    %s17 = ssub.s32 %s11, 2
    %s18 = sadd.s32 %s11, 1
    %s19 = ssub.s32 %s11, %s18
    %p20 = scmp.eq.s32.totalorder %s19, 0
    %s22 = sadd.s32 %s21, 1
    %s23 = scalar_select %p20, %s21, %s22
    %p26 = pneg %p20
    %p27 = scmp.eq.s32.totalorder %s11, 1
    %p28 = por %p26, %p27
    %p29 = scmp.ne.s32.totalorder %s21, %s24
    %p30 = scmp.eq.s32.totalorder %s11, 0
    %p31 = por %p29, %p30
    %p32 = scmp.ne.s32.totalorder %s21, %s24
    %p33 = scmp.eq.s32.totalorder %s16, 1
    %p34 = por %p32, %p33
    %p35 = scmp.ne.s32.totalorder %s24, %s25
    %p36 = scmp.eq.s32.totalorder %s16, 0
    %p37 = por %p35, %p36
    %p38 = scmp.ne.s32.totalorder %s24, %s25
    %p39 = scmp.eq.s32.totalorder %s17, 1
    %p40 = por %p38, %p39
    %p42 = scmp.ne.s32.totalorder %s25, %s41
    %p43 = scmp.eq.s32.totalorder %s17, 0
    %p44 = por %p42, %p43
    %s46 = sadd.s32 %s45, 1
    %p49 = scmp.eq.s32.totalorder %s11, 1
    %p50 = scmp.ne.s32.totalorder %s45, %s47
    %p51 = scmp.eq.s32.totalorder %s11, 0
    %p52 = por %p50, %p51
    %p53 = scmp.ne.s32.totalorder %s45, %s47
    %p54 = scmp.eq.s32.totalorder %s16, 1
    %p55 = por %p53, %p54
    %p56 = scmp.ne.s32.totalorder %s47, %s48
    %p57 = scmp.eq.s32.totalorder %s16, 0
    %p58 = por %p56, %p57
    %p59 = scmp.ne.s32.totalorder %s47, %s48
    %p60 = scmp.eq.s32.totalorder %s17, 1
    %p61 = por %p59, %p60
    %p63 = scmp.ne.s32.totalorder %s48, %s62
    %p64 = scmp.eq.s32.totalorder %s17, 0
    %p65 = por %p63, %p64
    %s67 = sadd.s32 %s66, 1
    %p70 = scmp.eq.s32.totalorder %s11, 1
    %p71 = scmp.ne.s32.totalorder %s66, %s68
    %p72 = scmp.eq.s32.totalorder %s11, 0
    %p73 = por %p71, %p72
    %p74 = scmp.ne.s32.totalorder %s66, %s68
    %p75 = scmp.eq.s32.totalorder %s16, 1
    %p76 = por %p74, %p75
    %p77 = scmp.ne.s32.totalorder %s68, %s69
    %p78 = scmp.eq.s32.totalorder %s16, 0
    %p79 = por %p77, %p78
    %p80 = scmp.ne.s32.totalorder %s68, %s69
    %p81 = scmp.eq.s32.totalorder %s17, 1
    %p82 = por %p80, %p81
    %p84 = scmp.ne.s32.totalorder %s69, %s83
    %p85 = scmp.eq.s32.totalorder %s17, 0
    %p86 = por %p84, %p85
    %s88 = sadd.s32 %s87, 1
    %p91 = scmp.eq.s32.totalorder %s11, 1
    %p92 = scmp.ne.s32.totalorder %s87, %s89
    %p93 = scmp.eq.s32.totalorder %s11, 0
    %p94 = por %p92, %p93
    %p95 = scmp.ne.s32.totalorder %s87, %s89
    %p96 = scmp.eq.s32.totalorder %s16, 1
    %p97 = por %p95, %p96
    %p98 = scmp.ne.s32.totalorder %s89, %s90
    %p99 = scmp.eq.s32.totalorder %s16, 0
    %p100 = por %p98, %p99
    %p101 = scmp.ne.s32.totalorder %s89, %s90
    %p102 = scmp.eq.s32.totalorder %s17, 1
    %p103 = por %p101, %p102
    %p105 = scmp.ne.s32.totalorder %s90, %s104
    %p106 = scmp.eq.s32.totalorder %s17, 0
    %p107 = por %p105, %p106
    %s109 = sadd.s32 %s108, 1
    %p112 = scmp.eq.s32.totalorder %s11, 1
    %p113 = scmp.ne.s32.totalorder %s108, %s110
    %p114 = scmp.eq.s32.totalorder %s11, 0
    %p115 = por %p113, %p114
    %p116 = scmp.ne.s32.totalorder %s108, %s110
    %p117 = scmp.eq.s32.totalorder %s16, 1
    %p118 = por %p116, %p117
    %p119 = scmp.ne.s32.totalorder %s110, %s111
    %p120 = scmp.eq.s32.totalorder %s16, 0
    %p121 = por %p119, %p120
    %p122 = scmp.ne.s32.totalorder %s110, %s111
    %p123 = scmp.eq.s32.totalorder %s17, 1
    %p124 = por %p122, %p123
    %p126 = scmp.ne.s32.totalorder %s111, %s125
    %p127 = scmp.eq.s32.totalorder %s17, 0
    %p128 = por %p126, %p127
    %p129 = scmp.le.s32.totalorder 1, %s11
    %p130 = scmp.lt.s32.totalorder %s11, 3
    %p131 = pnand %p129, %p130
    %p132 = pneg %p131
    // Predicated region
    $region9: #{spade_pallas.2} parent=5 // pred_check
      _
    $region10: #{spade_pallas.2} parent=5 // pred_check_branch
      %134 = sbr.rel (%p131) target = $region12
    $region11: #{spade_pallas.2} parent=5 // pred_region
      %s135 = ssub.s32 %s11, 1
      // Predicated region
      $region13: #{spade_pallas.2} parent=11 // pred_check
        %p136 = pneg %p58
      $region14: #{spade_pallas.2} parent=11 // pred_check_branch
        %138 = sbr.rel (%p136) target = $region16
      $region15: #{spade_pallas.2} parent=11 // pred_region
        _
      $region16: #{spade_pallas.2} parent=11 // pred_fallthru
        _
      // Predicated region
      $region17: #{spade_pallas.2} parent=11 // pred_check
        %p139 = pneg %p79
      $region18: #{spade_pallas.2} parent=11 // pred_check_branch
        %141 = sbr.rel (%p139) target = $region20
      $region19: #{spade_pallas.2} parent=11 // pred_region
        _
      $region20: #{spade_pallas.2} parent=11 // pred_fallthru
        _
    $region12: #{spade_pallas.2} parent=5 // pred_fallthru
      _
    %p142 = scmp.lt.s32.totalorder %s11, 2
    // Predicated region
    $region21: #{spade_pallas.2} parent=5 // pred_check
      %p143 = pneg %p142
    $region22: #{spade_pallas.2} parent=5 // pred_check_branch
      %145 = sbr.rel (%p143) target = $region24
    $region23: #{spade_pallas.2} parent=5 // pred_region
      // Predicated region
      $region25: #{spade_pallas.2} parent=23 // pred_check
        %p146 = pneg %p31
      $region26: #{spade_pallas.2} parent=23 // pred_check_branch
        %148 = sbr.rel (%p146) target = $region28
      $region27: #{spade_pallas.2} parent=23 // pred_region
        %s149 = smul.u32 32, %s11
        %p150 = scmp.lt.s32.totalorder %s149, 63
        %s151 = scalar_select %p150, %s149, 63
        %s152 = smul.addr %s151, 8
        %s153 = scalar_lea.vmem %s0, %s152
        %s154 = smul.u32 32, %s11
      $region28: #{spade_pallas.2} parent=23 // pred_fallthru
        _
    $region24: #{spade_pallas.2} parent=5 // pred_fallthru
      _
    %p155 = scmp.le.s32.totalorder 1, %s11
    %p156 = scmp.lt.s32.totalorder %s11, 3
    %p157 = pnand %p155, %p156
    %p158 = pneg %p157
    // Predicated region
    $region29: #{spade_pallas.2} parent=5 // pred_check
      _
    $region30: #{spade_pallas.2} parent=5 // pred_check_branch
      %160 = sbr.rel (%p157) target = $region32
    $region31: #{spade_pallas.2} parent=5 // pred_region
      %s161 = ssub.s32 %s11, 1
      %s162 = smul.u32 32, %s16
      %p163 = scmp.lt.s32.totalorder %s162, 63
      %s164 = scalar_select %p163, %s162, 63
      %s165 = smul.addr %s164, 8
      %s166 = scalar_lea.vmem %s0, %s165
      %p167 = pneg %p37
      %p168 = pneg %p34
      %p169 = pneg %p58
      %p170 = pneg %p55
      %p171 = pneg %p79
      %p172 = pneg %p76
      %p173 = pneg %p100
      %p174 = pneg %p97
      %p175 = pneg %p121
      %p176 = pneg %p118
      %s177 = smul.u32 32, %s16
      %p178 = scmp.lt.s32.totalorder %s177, 63
      %s179 = scalar_select %p178, %s177, 63
      %s180 = smul.addr %s179, 8
      %s181 = scalar_lea.vmem %s0, %s180
      %s182 = smul.u32 32, %s16
      %p183 = scmp.eq.s32.totalorder %s16, 0
      // Predicated region
      $region33: #{spade_pallas.2} parent=31 // pred_check
        %p184 = pneg %p183
      $region34: #{spade_pallas.2} parent=31 // pred_check_branch
        %186 = sbr.rel (%p184) target = $region36
      $region35: #{spade_pallas.2} parent=31 // pred_region
        %vm187 = vcmask 24576
        %188 = vst.msk [vmem:[#allocation2] sm:$0x1] %vm187, 0.0
        %189 = vst.msk [vmem:[#allocation3] sm:$0x1] %vm187, 0.0
      $region36: #{spade_pallas.2} parent=31 // pred_fallthru
        _
      %v190 = vld [vmem:[%s181] sm:$0xff]
      %v191 = vld [vmem:[%s181 + $0x8] sm:$0xff]
      %v192 = vld [vmem:[%s181 + $0x10] sm:$0xff]
      %v193 = vld [vmem:[%s181 + $0x18] sm:$0xff]
      %v194 = vld [vmem:[%s181 + $0x20] sm:$0xff]
      %v195 = vld [vmem:[%s181 + $0x28] sm:$0xff]
      %v196 = vld [vmem:[%s181 + $0x30] sm:$0xff]
      %v197 = vld [vmem:[%s181 + $0x38] sm:$0xff]
      %v198 = vld [vmem:[%s181 + $0x40] sm:$0xff]
      %v199 = vld [vmem:[%s181 + $0x48] sm:$0xff]
      %v200 = vld [vmem:[%s181 + $0x50] sm:$0xff]
      %v201 = vld [vmem:[%s181 + $0x58] sm:$0xff]
      %v202 = vld [vmem:[%s181 + $0x60] sm:$0xff]
      %v203 = vld [vmem:[%s181 + $0x68] sm:$0xff]
      %v204 = vld [vmem:[%s181 + $0x70] sm:$0xff]
      %v205 = vld [vmem:[%s181 + $0x78] sm:$0xff]
      %v206 = vld [vmem:[%s181 + $0x80] sm:$0xff]
      %v207 = vld [vmem:[%s181 + $0x88] sm:$0xff]
      %v208 = vld [vmem:[%s181 + $0x90] sm:$0xff]
      %v209 = vld [vmem:[%s181 + $0x98] sm:$0xff]
      %v210 = vld [vmem:[%s181 + $0xa0] sm:$0xff]
      %v211 = vld [vmem:[%s181 + $0xa8] sm:$0xff]
      %v212 = vld [vmem:[%s181 + $0xb0] sm:$0xff]
      %v213 = vld [vmem:[%s181 + $0xb8] sm:$0xff]
      %v214 = vld [vmem:[%s181 + $0xc0] sm:$0xff]
      %v215 = vld [vmem:[%s181 + $0xc8] sm:$0xff]
      %v216 = vld [vmem:[%s181 + $0xd0] sm:$0xff]
      %v217 = vld [vmem:[%s181 + $0xd8] sm:$0xff]
      %v218 = vld [vmem:[%s181 + $0xe0] sm:$0xff]
      %v219 = vld [vmem:[%s181 + $0xe8] sm:$0xff]
      %v220 = vld [vmem:[%s181 + $0xf0] sm:$0xff]
      %v221 = vld [vmem:[%s181 + $0xf8] sm:$0xff]
      %v222 = vld [vmem:[#allocation2] sm:$0x1]
      %vm223 = vcmask 31744
      %v224 = vsel %vm223, %v190, 0.0
      %v225 = vsel %vm223, %v191, 0.0
      %v226 = vadd.f32 %v224, %v225
      %v227 = vsel %vm223, %v192, 0.0
      %v228 = vadd.f32 %v226, %v227
      %v229 = vsel %vm223, %v193, 0.0
      %v230 = vadd.f32 %v228, %v229
      %v231 = vsel %vm223, %v194, 0.0
      %v232 = vadd.f32 %v230, %v231
      %v233 = vsel %vm223, %v195, 0.0
      %v234 = vadd.f32 %v232, %v233
      %v235 = vsel %vm223, %v196, 0.0
      %v236 = vadd.f32 %v234, %v235
      %v237 = vsel %vm223, %v197, 0.0
      %v238 = vadd.f32 %v236, %v237
      %v239 = vsel %vm223, %v198, 0.0
      %v240 = vadd.f32 %v238, %v239
      %v241 = vsel %vm223, %v199, 0.0
      %v242 = vadd.f32 %v240, %v241
      %v243 = vsel %vm223, %v200, 0.0
      %v244 = vadd.f32 %v242, %v243
      %v245 = vsel %vm223, %v201, 0.0
      %v246 = vadd.f32 %v244, %v245
      %v247 = vsel %vm223, %v202, 0.0
      %v248 = vadd.f32 %v246, %v247
      %v249 = vsel %vm223, %v203, 0.0
      %v250 = vadd.f32 %v248, %v249
      %v251 = vsel %vm223, %v204, 0.0
      %v252 = vadd.f32 %v250, %v251
      %v253 = vsel %vm223, %v205, 0.0
      %v254 = vadd.f32 %v252, %v253
      %v255 = vsel %vm223, %v206, 0.0
      %v256 = vadd.f32 %v254, %v255
      %v257 = vsel %vm223, %v207, 0.0
      %v258 = vadd.f32 %v256, %v257
      %v259 = vsel %vm223, %v208, 0.0
      %v260 = vadd.f32 %v258, %v259
      %v261 = vsel %vm223, %v209, 0.0
      %v262 = vadd.f32 %v260, %v261
      %v263 = vsel %vm223, %v210, 0.0
      %v264 = vadd.f32 %v262, %v263
      %v265 = vsel %vm223, %v211, 0.0
      %v266 = vadd.f32 %v264, %v265
      %v267 = vsel %vm223, %v212, 0.0
      %v268 = vadd.f32 %v266, %v267
      %v269 = vsel %vm223, %v213, 0.0
      %v270 = vadd.f32 %v268, %v269
      %v271 = vsel %vm223, %v214, 0.0
      %v272 = vadd.f32 %v270, %v271
      %v273 = vsel %vm223, %v215, 0.0
      %v274 = vadd.f32 %v272, %v273
      %v275 = vsel %vm223, %v216, 0.0
      %v276 = vadd.f32 %v274, %v275
      %v277 = vsel %vm223, %v217, 0.0
      %v278 = vadd.f32 %v276, %v277
      %v279 = vsel %vm223, %v218, 0.0
      %v280 = vadd.f32 %v278, %v279
      %v281 = vsel %vm223, %v219, 0.0
      %v282 = vadd.f32 %v280, %v281
      %v283 = vsel %vm223, %v220, 0.0
      %v284 = vadd.f32 %v282, %v283
      %v285 = vsel %vm223, %v221, 0.0
      %v286 = vadd.f32 %v284, %v285
      %v287 = vrot.slane %v286, 4
      %v288 = vadd.f32 %v286, %v287
      %v289 = vrot.slane %v288, 2
      %v290 = vadd.f32 %v288, %v289
      %v291 = vrot.slane %v290, 1
      %v292 = vadd.f32 %v290, %v291
      %v293 = vadd.f32 %v222, %v292
      %vm294 = vcmask 24576
      %295 = vst.msk [vmem:[#allocation2] sm:$0x1] %vm294, %v293
      %v296 = vld [vmem:[#allocation3] sm:$0x1]
      %v297 = vmul.f32 %v190, %v190
      %v298 = vmul.f32 %v191, %v191
      %v299 = vmul.f32 %v192, %v192
      %v300 = vmul.f32 %v193, %v193
      %v301 = vmul.f32 %v194, %v194
      %v302 = vmul.f32 %v195, %v195
      %v303 = vmul.f32 %v196, %v196
      %v304 = vmul.f32 %v197, %v197
      %v305 = vmul.f32 %v198, %v198
      %v306 = vmul.f32 %v199, %v199
      %v307 = vmul.f32 %v200, %v200
      %v308 = vmul.f32 %v201, %v201
      %v309 = vmul.f32 %v202, %v202
      %v310 = vmul.f32 %v203, %v203
      %v311 = vmul.f32 %v204, %v204
      %v312 = vmul.f32 %v205, %v205
      %v313 = vmul.f32 %v206, %v206
      %v314 = vmul.f32 %v207, %v207
      %v315 = vmul.f32 %v208, %v208
      %v316 = vmul.f32 %v209, %v209
      %v317 = vmul.f32 %v210, %v210
      %v318 = vmul.f32 %v211, %v211
      %v319 = vmul.f32 %v212, %v212
      %v320 = vmul.f32 %v213, %v213
      %v321 = vmul.f32 %v214, %v214
      %v322 = vmul.f32 %v215, %v215
      %v323 = vmul.f32 %v216, %v216
      %v324 = vmul.f32 %v217, %v217
      %v325 = vmul.f32 %v218, %v218
      %v326 = vmul.f32 %v219, %v219
      %v327 = vmul.f32 %v220, %v220
      %v328 = vmul.f32 %v221, %v221
      %v329 = vsel %vm223, %v297, 0.0
      %v330 = vsel %vm223, %v298, 0.0
      %v331 = vadd.f32 %v329, %v330
      %v332 = vsel %vm223, %v299, 0.0
      %v333 = vadd.f32 %v331, %v332
      %v334 = vsel %vm223, %v300, 0.0
      %v335 = vadd.f32 %v333, %v334
      %v336 = vsel %vm223, %v301, 0.0
      %v337 = vadd.f32 %v335, %v336
      %v338 = vsel %vm223, %v302, 0.0
      %v339 = vadd.f32 %v337, %v338
      %v340 = vsel %vm223, %v303, 0.0
      %v341 = vadd.f32 %v339, %v340
      %v342 = vsel %vm223, %v304, 0.0
      %v343 = vadd.f32 %v341, %v342
      %v344 = vsel %vm223, %v305, 0.0
      %v345 = vadd.f32 %v343, %v344
      %v346 = vsel %vm223, %v306, 0.0
      %v347 = vadd.f32 %v345, %v346
      %v348 = vsel %vm223, %v307, 0.0
      %v349 = vadd.f32 %v347, %v348
      %v350 = vsel %vm223, %v308, 0.0
      %v351 = vadd.f32 %v349, %v350
      %v352 = vsel %vm223, %v309, 0.0
      %v353 = vadd.f32 %v351, %v352
      %v354 = vsel %vm223, %v310, 0.0
      %v355 = vadd.f32 %v353, %v354
      %v356 = vsel %vm223, %v311, 0.0
      %v357 = vadd.f32 %v355, %v356
      %v358 = vsel %vm223, %v312, 0.0
      %v359 = vadd.f32 %v357, %v358
      %v360 = vsel %vm223, %v313, 0.0
      %v361 = vadd.f32 %v359, %v360
      %v362 = vsel %vm223, %v314, 0.0
      %v363 = vadd.f32 %v361, %v362
      %v364 = vsel %vm223, %v315, 0.0
      %v365 = vadd.f32 %v363, %v364
      %v366 = vsel %vm223, %v316, 0.0
      %v367 = vadd.f32 %v365, %v366
      %v368 = vsel %vm223, %v317, 0.0
      %v369 = vadd.f32 %v367, %v368
      %v370 = vsel %vm223, %v318, 0.0
      %v371 = vadd.f32 %v369, %v370
      %v372 = vsel %vm223, %v319, 0.0
      %v373 = vadd.f32 %v371, %v372
      %v374 = vsel %vm223, %v320, 0.0
      %v375 = vadd.f32 %v373, %v374
      %v376 = vsel %vm223, %v321, 0.0
      %v377 = vadd.f32 %v375, %v376
      %v378 = vsel %vm223, %v322, 0.0
      %v379 = vadd.f32 %v377, %v378
      %v380 = vsel %vm223, %v323, 0.0
      %v381 = vadd.f32 %v379, %v380
      %v382 = vsel %vm223, %v324, 0.0
      %v383 = vadd.f32 %v381, %v382
      %v384 = vsel %vm223, %v325, 0.0
      %v385 = vadd.f32 %v383, %v384
      %v386 = vsel %vm223, %v326, 0.0
      %v387 = vadd.f32 %v385, %v386
      %v388 = vsel %vm223, %v327, 0.0
      %v389 = vadd.f32 %v387, %v388
      %v390 = vsel %vm223, %v328, 0.0
      %v391 = vadd.f32 %v389, %v390
      %v392 = vrot.slane %v391, 4
      %v393 = vadd.f32 %v391, %v392
      %v394 = vrot.slane %v393, 2
      %v395 = vadd.f32 %v393, %v394
      %v396 = vrot.slane %v395, 1
      %v397 = vadd.f32 %v395, %v396
      %v398 = vadd.f32 %v296, %v397
      %399 = vst.msk [vmem:[#allocation3] sm:$0x1] %vm294, %v398
      %p400 = scmp.eq.s32.totalorder %s16, 1
      // Predicated region
      $region37: #{spade_pallas.2} parent=31 // pred_check
        %p401 = pneg %p400
      $region38: #{spade_pallas.2} parent=31 // pred_check_branch
        %403 = sbr.rel (%p401) target = $region40
      $region39: #{spade_pallas.2} parent=31 // pred_region
        %v404 = vld [vmem:[#allocation2] sm:$0x1]
        %v405 = vmul.f32 %v404, 0.001953125
        %v406 = vld [vmem:[#allocation3] sm:$0x1]
        %v407 = vmul.f32 %v406, 0.001953125
        %v408 = vmul.f32 %v405, %v405
        %v409 = vsub.f32 %v407, %v408
        %v410 = vld [vmem:[%s1] sm:$0x1]
        %v411 = vadd.f32 %v409, 1e-05
        %v412 = vrsqrt.pop %v411
        %v413 = vmul.f32 %v410, %v412
        %414 = vst.msk [vmem:[%s3] sm:$0x1] %vm294, %v413
        %v415 = vld [vmem:[%s2] sm:$0x1]
        %v416 = vmul.f32 %v405, %v413
        %v417 = vsub.f32 %v415, %v416
        %418 = vst.msk [vmem:[%s4] sm:$0x1] %vm294, %v417
      $region40: #{spade_pallas.2} parent=31 // pred_fallthru
        _
      // Predicated region
      $region41: #{spade_pallas.2} parent=31 // pred_check
        %p419 = pneg %p97
      $region42: #{spade_pallas.2} parent=31 // pred_check_branch
        %421 = sbr.rel (%p419) target = $region44
      $region43: #{spade_pallas.2} parent=31 // pred_region
        _
      $region44: #{spade_pallas.2} parent=31 // pred_fallthru
        _
      // Predicated region
      $region45: #{spade_pallas.2} parent=31 // pred_check
        %p422 = pneg %p118
      $region46: #{spade_pallas.2} parent=31 // pred_check_branch
        %424 = sbr.rel (%p422) target = $region48
      $region47: #{spade_pallas.2} parent=31 // pred_region
        _
      $region48: #{spade_pallas.2} parent=31 // pred_fallthru
        _
      // Predicated region
      $region49: #{spade_pallas.2} parent=31 // pred_check
        %p425 = pneg %p97
      $region50: #{spade_pallas.2} parent=31 // pred_check_branch
        %427 = sbr.rel (%p425) target = $region52
      $region51: #{spade_pallas.2} parent=31 // pred_region
        _
      $region52: #{spade_pallas.2} parent=31 // pred_fallthru
        _
      // Predicated region
      $region53: #{spade_pallas.2} parent=31 // pred_check
        %p428 = pneg %p118
      $region54: #{spade_pallas.2} parent=31 // pred_check_branch
        %430 = sbr.rel (%p428) target = $region56
      $region55: #{spade_pallas.2} parent=31 // pred_region
        _
      $region56: #{spade_pallas.2} parent=31 // pred_fallthru
        _
    $region32: #{spade_pallas.2} parent=5 // pred_fallthru
      _
    %p431 = scmp.le.s32.totalorder 2, %s11
    // Predicated region
    $region57: #{spade_pallas.2} parent=5 // pred_check
      %p432 = pneg %p431
    $region58: #{spade_pallas.2} parent=5 // pred_check_branch
      %434 = sbr.rel (%p432) target = $region60
    $region59: #{spade_pallas.2} parent=5 // pred_region
      %s435 = ssub.s32 %s11, 2
    $region60: #{spade_pallas.2} parent=5 // pred_fallthru
      _
  $region6: #{spade_pallas.2} parent=0 // loop_footer
    %s15 = sadd.s32 1, %s11
  $region7: #{spade_pallas.2} parent=0 // loop_footer_branch
    %10 = sbr.rel target = $region3
  $region8: #{spade_pallas.2} parent=0 // loop_exit
    _

// kernel: spade_pallas.3
$region0: #{spade_pallas.3}
  #allocation0 [shape = 'u32[]', space=smem, size = 0x4, offset = 0x4, fixed_abs, tag = 'smem constant byte address 0x4 - core index']
  #allocation1 [shape = 'u32[144,128]{1,0:T(1,128)}', space=vmem, size = 0x12000, scoped, tag = 'internal scratch']
  #allocation2 [shape = 'bf16[10,18,32]{2,1,0:T(8,128)(2,1)}', space=vmem, size = 0xf000, scoped, tag = 'scratch operand']
  %s0 = inlined_call_operand.vmem [shape: f32[2,16,16,4], index: 0, kind: input, shape index: {}]
  %s1 = inlined_call_operand.vmem [shape: f32[1,4], index: 1, kind: input, shape index: {}]
  %s2 = inlined_call_operand.vmem [shape: f32[1,4], index: 2, kind: input, shape index: {}]
  %s3 = inlined_call_operand.vmem [shape: bf16[2,18,16,27], index: 3, kind: input, shape index: {}]
  %s4 = inlined_call_operand.vmem [shape: bf16[27,32], index: 4, kind: input, shape index: {}]
  %s5 = inlined_call_operand.vmem [shape: f32[1,32], index: 5, kind: input, shape index: {}]
  %s6 = inlined_call_operand.vmem [shape: bf16[9,32,8], index: 6, kind: input, shape index: {}]
  %s7 = inlined_call_operand.vmem [shape: f32[1,8], index: 7, kind: input, shape index: {}]
  %s8 = inlined_call_operand.vmem [shape: f32[2,16,16,4], index: 8, kind: output, shape index: {}]
  %s9 = sld [smem:[#allocation0]]
  $region73: #{spade_pallas.3} parent=0
    _
  %s11 = ssub.s32 1, %s9
  %s12 = scalar_select 0, %s11, %s9
  loop: start=0, step=1, limit=6
  $region2: #{spade_pallas.3} parent=0 // loop_pre_header
    _
  $region3: #{spade_pallas.3} parent=0 // loop_header
    %s14 = sphi 0, %s18
    %p15 = scmp.ge.s32.totalorder %s14, 6
    %s21 = sphi 0, %s33
    %s22 = sphi 0, %s29
    %s23 = sphi 0, %s21
    %s24 = sphi 0, %s22
    %s25 = sphi 0, %s23
    %s26 = sphi 0, %s24
    %s38 = sphi 0, %s40
    %s41 = sphi 0, %s38
    %s42 = sphi 0, %s41
    %s58 = sphi 0, %s42
    %s62 = sphi 0, %s62
    %s64 = sphi 0, %s62
    %s65 = sphi 0, %s64
    %s79 = sphi 0, %s65
    %s83 = sphi 0, %s83
    %s85 = sphi 0, %s83
    %s86 = sphi 0, %s85
    %s100 = sphi 0, %s86
    %s106 = sphi 0, %s108
    %s109 = sphi 0, %s106
    %s110 = sphi 0, %s109
    %s126 = sphi 0, %s110
    %s130 = sphi 0, %s130
    %s132 = sphi 0, %s130
    %s133 = sphi 0, %s132
    %s147 = sphi 0, %s133
    %s151 = sphi 0, %s151
    %s153 = sphi 0, %s151
    %s154 = sphi 0, %s153
    %s168 = sphi 0, %s154
    %s172 = sphi 0, %s172
    %s174 = sphi 0, %s172
    %s175 = sphi 0, %s174
    %s189 = sphi 0, %s175
    %s193 = sphi 0, %s193
    %s195 = sphi 0, %s193
    %s196 = sphi 0, %s195
    %s210 = sphi 0, %s196
    %s218 = sphi 0, %s220
    %s221 = sphi 0, %s218
    %s222 = sphi 0, %s221
    %s238 = sphi 0, %s222
  $region4: #{spade_pallas.3} parent=0 // loop_header_branch
    %17 = sbr.rel (%p15) target = $region8
  $region5: #{spade_pallas.3} parent=0 // loop_body
    %s19 = ssub.s32 %s14, 1
    %s20 = ssub.s32 %s14, 2
    %s27 = sadd.s32 1, %s22
    %p28 = scmp.ge.s32.totalorder %s27, 2
    %s29 = scalar_select %p28, 0, %s27
    %s30 = sadd.s32 1, %s21
    %s31 = scalar_select %p28, %s30, %s21
    %p32 = scmp.ge.s32.totalorder %s31, 2
    %s33 = scalar_select %p32, 0, %s31
    %s34 = ssub.s32 %s21, %s33
    %s35 = ssub.s32 %s22, %s29
    %s36 = sor.u32 %s34, %s35
    %p37 = scmp.eq.s32.totalorder %s36, 0
    %s39 = sadd.s32 %s38, 1
    %s40 = scalar_select %p37, %s38, %s39
    %p43 = pneg %p37
    %p44 = scmp.eq.s32.totalorder %s14, 3
    %p45 = por %p43, %p44
    %p46 = scmp.ne.s32.totalorder %s38, %s41
    %p47 = scmp.eq.s32.totalorder %s14, 0
    %p48 = por %p46, %p47
    %p49 = scmp.ne.s32.totalorder %s38, %s41
    %p50 = scmp.eq.s32.totalorder %s19, 3
    %p51 = por %p49, %p50
    %p52 = scmp.ne.s32.totalorder %s41, %s42
    %p53 = scmp.eq.s32.totalorder %s19, 0
    %p54 = por %p52, %p53
    %p55 = scmp.ne.s32.totalorder %s41, %s42
    %p56 = scmp.eq.s32.totalorder %s20, 3
    %p57 = por %p55, %p56
    %p59 = scmp.ne.s32.totalorder %s42, %s58
    %p60 = scmp.eq.s32.totalorder %s20, 0
    %p61 = por %p59, %p60
    %s63 = sadd.s32 %s62, 1
    %p66 = scmp.eq.s32.totalorder %s14, 3
    %p67 = scmp.ne.s32.totalorder %s62, %s64
    %p68 = scmp.eq.s32.totalorder %s14, 0
    %p69 = por %p67, %p68
    %p70 = scmp.ne.s32.totalorder %s62, %s64
    %p71 = scmp.eq.s32.totalorder %s19, 3
    %p72 = por %p70, %p71
    %p73 = scmp.ne.s32.totalorder %s64, %s65
    %p74 = scmp.eq.s32.totalorder %s19, 0
    %p75 = por %p73, %p74
    %p76 = scmp.ne.s32.totalorder %s64, %s65
    %p77 = scmp.eq.s32.totalorder %s20, 3
    %p78 = por %p76, %p77
    %p80 = scmp.ne.s32.totalorder %s65, %s79
    %p81 = scmp.eq.s32.totalorder %s20, 0
    %p82 = por %p80, %p81
    %s84 = sadd.s32 %s83, 1
    %p87 = scmp.eq.s32.totalorder %s14, 3
    %p88 = scmp.ne.s32.totalorder %s83, %s85
    %p89 = scmp.eq.s32.totalorder %s14, 0
    %p90 = por %p88, %p89
    %p91 = scmp.ne.s32.totalorder %s83, %s85
    %p92 = scmp.eq.s32.totalorder %s19, 3
    %p93 = por %p91, %p92
    %p94 = scmp.ne.s32.totalorder %s85, %s86
    %p95 = scmp.eq.s32.totalorder %s19, 0
    %p96 = por %p94, %p95
    %p97 = scmp.ne.s32.totalorder %s85, %s86
    %p98 = scmp.eq.s32.totalorder %s20, 3
    %p99 = por %p97, %p98
    %p101 = scmp.ne.s32.totalorder %s86, %s100
    %p102 = scmp.eq.s32.totalorder %s20, 0
    %p103 = por %p101, %p102
    %s104 = ssub.s32 %s21, %s33
    %p105 = scmp.eq.s32.totalorder %s104, 0
    %s107 = sadd.s32 %s106, 1
    %s108 = scalar_select %p105, %s106, %s107
    %p111 = pneg %p105
    %p112 = scmp.eq.s32.totalorder %s14, 3
    %p113 = por %p111, %p112
    %p114 = scmp.ne.s32.totalorder %s106, %s109
    %p115 = scmp.eq.s32.totalorder %s14, 0
    %p116 = por %p114, %p115
    %p117 = scmp.ne.s32.totalorder %s106, %s109
    %p118 = scmp.eq.s32.totalorder %s19, 3
    %p119 = por %p117, %p118
    %p120 = scmp.ne.s32.totalorder %s109, %s110
    %p121 = scmp.eq.s32.totalorder %s19, 0
    %p122 = por %p120, %p121
    %p123 = scmp.ne.s32.totalorder %s109, %s110
    %p124 = scmp.eq.s32.totalorder %s20, 3
    %p125 = por %p123, %p124
    %p127 = scmp.ne.s32.totalorder %s110, %s126
    %p128 = scmp.eq.s32.totalorder %s20, 0
    %p129 = por %p127, %p128
    %s131 = sadd.s32 %s130, 1
    %p134 = scmp.eq.s32.totalorder %s14, 3
    %p135 = scmp.ne.s32.totalorder %s130, %s132
    %p136 = scmp.eq.s32.totalorder %s14, 0
    %p137 = por %p135, %p136
    %p138 = scmp.ne.s32.totalorder %s130, %s132
    %p139 = scmp.eq.s32.totalorder %s19, 3
    %p140 = por %p138, %p139
    %p141 = scmp.ne.s32.totalorder %s132, %s133
    %p142 = scmp.eq.s32.totalorder %s19, 0
    %p143 = por %p141, %p142
    %p144 = scmp.ne.s32.totalorder %s132, %s133
    %p145 = scmp.eq.s32.totalorder %s20, 3
    %p146 = por %p144, %p145
    %p148 = scmp.ne.s32.totalorder %s133, %s147
    %p149 = scmp.eq.s32.totalorder %s20, 0
    %p150 = por %p148, %p149
    %s152 = sadd.s32 %s151, 1
    %p155 = scmp.eq.s32.totalorder %s14, 3
    %p156 = scmp.ne.s32.totalorder %s151, %s153
    %p157 = scmp.eq.s32.totalorder %s14, 0
    %p158 = por %p156, %p157
    %p159 = scmp.ne.s32.totalorder %s151, %s153
    %p160 = scmp.eq.s32.totalorder %s19, 3
    %p161 = por %p159, %p160
    %p162 = scmp.ne.s32.totalorder %s153, %s154
    %p163 = scmp.eq.s32.totalorder %s19, 0
    %p164 = por %p162, %p163
    %p165 = scmp.ne.s32.totalorder %s153, %s154
    %p166 = scmp.eq.s32.totalorder %s20, 3
    %p167 = por %p165, %p166
    %p169 = scmp.ne.s32.totalorder %s154, %s168
    %p170 = scmp.eq.s32.totalorder %s20, 0
    %p171 = por %p169, %p170
    %s173 = sadd.s32 %s172, 1
    %p176 = scmp.eq.s32.totalorder %s14, 3
    %p177 = scmp.ne.s32.totalorder %s172, %s174
    %p178 = scmp.eq.s32.totalorder %s14, 0
    %p179 = por %p177, %p178
    %p180 = scmp.ne.s32.totalorder %s172, %s174
    %p181 = scmp.eq.s32.totalorder %s19, 3
    %p182 = por %p180, %p181
    %p183 = scmp.ne.s32.totalorder %s174, %s175
    %p184 = scmp.eq.s32.totalorder %s19, 0
    %p185 = por %p183, %p184
    %p186 = scmp.ne.s32.totalorder %s174, %s175
    %p187 = scmp.eq.s32.totalorder %s20, 3
    %p188 = por %p186, %p187
    %p190 = scmp.ne.s32.totalorder %s175, %s189
    %p191 = scmp.eq.s32.totalorder %s20, 0
    %p192 = por %p190, %p191
    %s194 = sadd.s32 %s193, 1
    %p197 = scmp.eq.s32.totalorder %s14, 3
    %p198 = scmp.ne.s32.totalorder %s193, %s195
    %p199 = scmp.eq.s32.totalorder %s14, 0
    %p200 = por %p198, %p199
    %p201 = scmp.ne.s32.totalorder %s193, %s195
    %p202 = scmp.eq.s32.totalorder %s19, 3
    %p203 = por %p201, %p202
    %p204 = scmp.ne.s32.totalorder %s195, %s196
    %p205 = scmp.eq.s32.totalorder %s19, 0
    %p206 = por %p204, %p205
    %p207 = scmp.ne.s32.totalorder %s195, %s196
    %p208 = scmp.eq.s32.totalorder %s20, 3
    %p209 = por %p207, %p208
    %p211 = scmp.ne.s32.totalorder %s196, %s210
    %p212 = scmp.eq.s32.totalorder %s20, 0
    %p213 = por %p211, %p212
    %s214 = ssub.s32 %s21, %s33
    %s215 = ssub.s32 %s22, %s29
    %s216 = sor.u32 %s214, %s215
    %p217 = scmp.eq.s32.totalorder %s216, 0
    %s219 = sadd.s32 %s218, 1
    %s220 = scalar_select %p217, %s218, %s219
    %p223 = pneg %p217
    %p224 = scmp.eq.s32.totalorder %s14, 3
    %p225 = por %p223, %p224
    %p226 = scmp.ne.s32.totalorder %s218, %s221
    %p227 = scmp.eq.s32.totalorder %s14, 0
    %p228 = por %p226, %p227
    %p229 = scmp.ne.s32.totalorder %s218, %s221
    %p230 = scmp.eq.s32.totalorder %s19, 3
    %p231 = por %p229, %p230
    %p232 = scmp.ne.s32.totalorder %s221, %s222
    %p233 = scmp.eq.s32.totalorder %s19, 0
    %p234 = por %p232, %p233
    %p235 = scmp.ne.s32.totalorder %s221, %s222
    %p236 = scmp.eq.s32.totalorder %s20, 3
    %p237 = por %p235, %p236
    %p239 = scmp.ne.s32.totalorder %s222, %s238
    %p240 = scmp.eq.s32.totalorder %s20, 0
    %p241 = por %p239, %p240
    %p242 = scmp.le.s32.totalorder 1, %s14
    %p243 = scmp.lt.s32.totalorder %s14, 5
    %p244 = pnand %p242, %p243
    %p245 = pneg %p244
    // Predicated region
    $region9: #{spade_pallas.3} parent=5 // pred_check
      _
    $region10: #{spade_pallas.3} parent=5 // pred_check_branch
      %247 = sbr.rel (%p244) target = $region12
    $region11: #{spade_pallas.3} parent=5 // pred_region
      %s248 = ssub.s32 %s14, 1
      // Predicated region
      $region13: #{spade_pallas.3} parent=11 // pred_check
        %p249 = pneg %p75
      $region14: #{spade_pallas.3} parent=11 // pred_check_branch
        %251 = sbr.rel (%p249) target = $region16
      $region15: #{spade_pallas.3} parent=11 // pred_region
        _
      $region16: #{spade_pallas.3} parent=11 // pred_fallthru
        _
      // Predicated region
      $region17: #{spade_pallas.3} parent=11 // pred_check
        %p252 = pneg %p96
      $region18: #{spade_pallas.3} parent=11 // pred_check_branch
        %254 = sbr.rel (%p252) target = $region20
      $region19: #{spade_pallas.3} parent=11 // pred_region
        _
      $region20: #{spade_pallas.3} parent=11 // pred_fallthru
        _
      // Predicated region
      $region21: #{spade_pallas.3} parent=11 // pred_check
        %p255 = pneg %p143
      $region22: #{spade_pallas.3} parent=11 // pred_check_branch
        %257 = sbr.rel (%p255) target = $region24
      $region23: #{spade_pallas.3} parent=11 // pred_region
        _
      $region24: #{spade_pallas.3} parent=11 // pred_fallthru
        _
      // Predicated region
      $region25: #{spade_pallas.3} parent=11 // pred_check
        %p258 = pneg %p164
      $region26: #{spade_pallas.3} parent=11 // pred_check_branch
        %260 = sbr.rel (%p258) target = $region28
      $region27: #{spade_pallas.3} parent=11 // pred_region
        _
      $region28: #{spade_pallas.3} parent=11 // pred_fallthru
        _
      // Predicated region
      $region29: #{spade_pallas.3} parent=11 // pred_check
        %p261 = pneg %p185
      $region30: #{spade_pallas.3} parent=11 // pred_check_branch
        %263 = sbr.rel (%p261) target = $region32
      $region31: #{spade_pallas.3} parent=11 // pred_region
        _
      $region32: #{spade_pallas.3} parent=11 // pred_fallthru
        _
      // Predicated region
      $region33: #{spade_pallas.3} parent=11 // pred_check
        %p264 = pneg %p206
      $region34: #{spade_pallas.3} parent=11 // pred_check_branch
        %266 = sbr.rel (%p264) target = $region36
      $region35: #{spade_pallas.3} parent=11 // pred_region
        _
      $region36: #{spade_pallas.3} parent=11 // pred_fallthru
        _
    $region12: #{spade_pallas.3} parent=5 // pred_fallthru
      _
    %p267 = scmp.lt.s32.totalorder %s14, 4
    // Predicated region
    $region37: #{spade_pallas.3} parent=5 // pred_check
      %p268 = pneg %p267
    $region38: #{spade_pallas.3} parent=5 // pred_check_branch
      %270 = sbr.rel (%p268) target = $region40
    $region39: #{spade_pallas.3} parent=5 // pred_region
      // Predicated region
      $region41: #{spade_pallas.3} parent=39 // pred_check
        %p271 = pneg %p48
      $region42: #{spade_pallas.3} parent=39 // pred_check_branch
        %273 = sbr.rel (%p271) target = $region44
      $region43: #{spade_pallas.3} parent=39 // pred_region
        %s274 = smul.u32 8, %s22
        %p275 = scmp.lt.s32.totalorder %s21, 1
        %s276 = scalar_select %p275, %s21, 1
        %p277 = scmp.lt.s32.totalorder %s274, 15
        %s278 = scalar_select %p277, %s274, 15
        %s279 = smul.addr %s278, 2
        %s280 = smul.addr %s276, 32
        %s281 = sadd.s32 %s279, %s280
        %s282 = smul.addr %s281, 8
        %s283 = scalar_lea.vmem %s0, %s282
        %s284 = smul.u32 8, %s22
      $region44: #{spade_pallas.3} parent=39 // pred_fallthru
        _
      // Predicated region
      $region45: #{spade_pallas.3} parent=39 // pred_check
        %p285 = pneg %p116
      $region46: #{spade_pallas.3} parent=39 // pred_check_branch
        %287 = sbr.rel (%p285) target = $region48
      $region47: #{spade_pallas.3} parent=39 // pred_region
        %p288 = scmp.lt.s32.totalorder %s21, 1
        %s289 = scalar_select %p288, %s21, 1
        %s290 = smul.addr %s289, 36
        %s291 = smul.addr %s290, 4
        %s292 = scalar_lea.vmem %s3, %s291
      $region48: #{spade_pallas.3} parent=39 // pred_fallthru
        _
    $region40: #{spade_pallas.3} parent=5 // pred_fallthru
      _
    %p293 = scmp.le.s32.totalorder 1, %s14
    %p294 = scmp.lt.s32.totalorder %s14, 5
    %p295 = pnand %p293, %p294
    %p296 = pneg %p295
    // Predicated region
    $region49: #{spade_pallas.3} parent=5 // pred_check
      _
    $region50: #{spade_pallas.3} parent=5 // pred_check_branch
      %298 = sbr.rel (%p295) target = $region52
    $region51: #{spade_pallas.3} parent=5 // pred_region
      %s299 = ssub.s32 %s14, 1
      %s300 = smul.u32 8, %s24
      %p301 = scmp.lt.s32.totalorder %s23, 1
      %s302 = scalar_select %p301, %s23, 1
      %p303 = scmp.lt.s32.totalorder %s300, 15
      %s304 = scalar_select %p303, %s300, 15
      %s305 = smul.addr %s304, 2
      %s306 = smul.addr %s302, 32
      %s307 = sadd.s32 %s305, %s306
      %s308 = smul.addr %s307, 8
      %s309 = scalar_lea.vmem %s0, %s308
      %p310 = pneg %p54
      %p311 = pneg %p51
      %p312 = pneg %p75
      %p313 = pneg %p72
      %p314 = pneg %p96
      %p315 = pneg %p93
      %p316 = scmp.lt.s32.totalorder %s23, 1
      %s317 = scalar_select %p316, %s23, 1
      %s318 = smul.addr %s317, 36
      %s319 = smul.addr %s318, 4
      %s320 = scalar_lea.vmem %s3, %s319
      %p321 = pneg %p122
      %p322 = pneg %p119
      %p323 = pneg %p143
      %p324 = pneg %p140
      %p325 = pneg %p164
      %p326 = pneg %p161
      %p327 = pneg %p185
      %p328 = pneg %p182
      %p329 = pneg %p206
      %p330 = pneg %p203
      %p331 = pneg %p234
      %p332 = pneg %p231
      %s333 = smul.u32 8, %s24
      %p334 = scmp.lt.s32.totalorder %s23, 1
      %s335 = scalar_select %p334, %s23, 1
      %p336 = scmp.lt.s32.totalorder %s333, 15
      %s337 = scalar_select %p336, %s333, 15
      %s338 = smul.addr %s337, 2
      %s339 = smul.addr %s335, 32
      %s340 = sadd.s32 %s338, %s339
      %s341 = smul.addr %s340, 8
      %s342 = scalar_lea.vmem %s8, %s341
      %s343 = smul.u32 8, %s24
      %p344 = scmp.lt.s32.totalorder %s23, 1
      %s345 = scalar_select %p344, %s23, 1
      %p346 = scmp.lt.s32.totalorder %s343, 15
      %s347 = scalar_select %p346, %s343, 15
      %s348 = smul.addr %s347, 2
      %s349 = smul.addr %s345, 32
      %s350 = sadd.s32 %s348, %s349
      %s351 = smul.addr %s350, 8
      %s352 = scalar_lea.vmem %s0, %s351
      %s353 = smul.u32 8, %s24
      %p354 = scmp.lt.s32.totalorder %s23, 1
      %s355 = scalar_select %p354, %s23, 1
      %s356 = smul.addr %s355, 36
      %s357 = smul.addr %s356, 4
      %s358 = scalar_lea.vmem %s3, %s357
      %s359 = smul.u32 8, %s24
      %p360 = scmp.lt.s32.totalorder %s23, 1
      %s361 = scalar_select %p360, %s23, 1
      %p362 = scmp.lt.s32.totalorder %s359, 15
      %s363 = scalar_select %p362, %s359, 15
      %s364 = smul.addr %s363, 2
      %s365 = smul.addr %s361, 32
      %s366 = sadd.s32 %s364, %s365
      %s367 = smul.addr %s366, 8
      %s368 = scalar_lea.vmem %s8, %s367
      %s369 = smul.u32 8, %s24
      %s371 = smul.u32 %s24, 8
      %s372 = smul.u32 %s371, 2
      %s373 = smul.addr %s372, 4
      %s374 = scalar_lea.vmem %s358, %s373
      %v375 = vld [vmem:[%s374] sm:$0xf]
      %v376 = vld [vmem:[%s374 + $0x4] sm:$0xf]
      %v377 = vld [vmem:[%s374 + $0x8] sm:$0xf]
      %v378 = vld [vmem:[%s374 + $0xc] sm:$0xf]
      %v379 = vld [vmem:[%s374 + $0x10] sm:$0xf]
      %v380 = vld [vmem:[%s374 + $0x14] sm:$0xf]
      %v381 = vld [vmem:[%s374 + $0x18] sm:$0xf]
      %v382 = vld [vmem:[%s374 + $0x1c] sm:$0xf]
      %v383 = vld [vmem:[%s374 + $0x20] sm:$0xf]
      %v384 = vld [vmem:[%s374 + $0x24] sm:$0xf]
      %v385 = vld [vmem:[%s374 + $0x28] sm:$0xf]
      %v386 = vld [vmem:[%s374 + $0x2c] sm:$0xf]
      %v387 = vld [vmem:[%s374 + $0x30] sm:$0xf]
      %v388 = vld [vmem:[%s374 + $0x34] sm:$0xf]
      %v389 = vld [vmem:[%s374 + $0x38] sm:$0xf]
      %v390 = vld [vmem:[%s374 + $0x3c] sm:$0xf]
      %v391 = vld [vmem:[%s374 + $0x40] sm:$0xf]
      %v392 = vld [vmem:[%s374 + $0x44] sm:$0xf]
      %v393 = vld [vmem:[%s374 + $0x48] sm:$0xf]
      %v394 = vld [vmem:[%s374 + $0x4c] sm:$0xf]
      %v395 = vld [vmem:[%s4] sm:$0xf]
      %v396 = vld [vmem:[%s4 + $0x4] sm:$0xf]
      %v397 = vld [vmem:[%s4 + $0x8] sm:$0xf]
      %v398 = vld [vmem:[%s4 + $0xc] sm:$0x3]
      %v399 = vld [vmem:[%s5] sm:$0x1]
      %v401 = vlaneseq
      %v402 = vshrl.u32 %v401, 7
      %v403 = vsub.s32 0, %v402
      %v404 = vrot.slane %v399, %v403
      %v426 = vunpack.c.l.b16 %v375
      %v427 = vunpack.c.l.b16 %v376
      %v428 = vunpack.c.l.b16 %v377
      %v429 = vunpack.c.l.b16 %v378
      %v430 = vunpack.c.l.b16 %v379
      %v431 = vunpack.c.l.b16 %v380
      %v432 = vunpack.c.l.b16 %v381
      %v433 = vunpack.c.l.b16 %v382
      %v434 = vunpack.c.l.b16 %v383
      %v435 = vunpack.c.l.b16 %v384
      %v436 = vunpack.c.l.b16 %v385
      %v437 = vunpack.c.l.b16 %v386
      %v438 = vunpack.c.l.b16 %v387
      %v439 = vunpack.c.l.b16 %v388
      %v440 = vunpack.c.l.b16 %v389
      %v441 = vunpack.c.l.b16 %v390
      %v442 = vunpack.c.l.b16 %v391
      %v443 = vunpack.c.l.b16 %v392
      %v444 = vunpack.c.l.b16 %v393
      %v445 = vunpack.c.l.b16 %v394
      %v446 = vpack.c.b16 %v427, %v426
      %v447 = vpack.c.b16 %v429, %v428
      %v448 = vpack.c.b16 %v431, %v430
      %v449 = vpack.c.b16 %v433, %v432
      %v450 = vpack.c.b16 %v435, %v434
      %v451 = vpack.c.b16 %v437, %v436
      %v452 = vpack.c.b16 %v439, %v438
      %v453 = vpack.c.b16 %v441, %v440
      %v454 = vpack.c.b16 %v443, %v442
      %v455 = vpack.c.b16 %v445, %v444
      %v460 = vunpack.c.l.b16 %v395
      %v461 = vunpack.c.l.b16 %v396
      %v462 = vunpack.c.l.b16 %v397
      %v463 = vunpack.c.l.b16 %v398
      %v464 = vpack.c.b16 %v461, %v460
      %v465 = vpack.c.b16 %v463, %v462
      %vm467 = vcmask 220160
      %v469 = vsel %vm467, %v446, 0
      %v472 = vsel %vm467, %v447, 0
      %v475 = vsel %vm467, %v448, 0
      %v478 = vsel %vm467, %v449, 0
      %v481 = vsel %vm467, %v450, 0
      %v484 = vsel %vm467, %v451, 0
      %v487 = vsel %vm467, %v452, 0
      %v490 = vsel %vm467, %v453, 0
      %v493 = vsel %vm467, %v454, 0
      %v496 = vsel %vm467, %v455, 0
      %vm498 = vcmask 1044480
      %vm499 = vcmask 1045504
      %v500 = vsel %vm498, 4294967295, 65535
      %v501 = vsel %vm499, %v500, 0
      %v503 = vand.u32 %v465, %v501
      %505 = vmatprep.subr.bf16.mxu0 0
      %506 = vmatpush1.bf16.msra.mxu0 0
      %507 = vmatprep.subr.bf16.mxu0 0
      %508 = vmatpush1.bf16.msra.mxu0 0
      %509 = vmatprep.subr.bf16.mxu0 0
      %510 = vmatpush1.bf16.msra.mxu0 0
      %511 = vmatprep.subr.bf16.mxu0 0
      %512 = vmatpush1.bf16.msra.mxu0 0
      %513 = vmatprep.subr.bf16.mxu0 0
      %514 = vmatpush1.bf16.msra.mxu0 0
      %515 = vmatprep.subr.bf16.mxu0 0
      %516 = vmatpush1.bf16.msra.mxu0 0
      %517 = vmatprep.subr.bf16.mxu0 0
      %518 = vmatpush1.bf16.msra.mxu0 %v503
      %519 = vmatprep.subr.bf16.mxu0 0
      %520 = vmatpush1.bf16.msra.mxu0 %v464
      %521 = vmatprep.subr.bf16.mxu0 0
      %522 = vmatpush2.bf16.msra.mxu0 0
      %523 = vmatprep.subr.bf16.mxu0 0
      %524 = vmatpush2.bf16.msra.mxu0 0
      %525 = vmatprep.subr.bf16.mxu0 0
      %526 = vmatpush2.bf16.msra.mxu0 0
      %527 = vmatprep.subr.bf16.mxu0 0
      %528 = vmatpush2.bf16.msra.mxu0 0
      %529 = vmatprep.subr.bf16.mxu0 0
      %530 = vmatpush2.bf16.msra.mxu0 0
      %531 = vmatprep.subr.bf16.mxu0 0
      %532 = vmatpush2.bf16.msra.mxu0 0
      %533 = vmatprep.subr.bf16.mxu0 0
      %534 = vmatpush2.bf16.msra.mxu0 0
      %535 = vmatprep.subr.bf16.mxu0 0
      %536 = vmatpush2.bf16.msra.mxu0 0
      %537 = vmatprep.mubr.bf16.mxu0 0
      %538 = vmatmul.mubr.bf16.gmra.mxu0 %v469
      %v539 = vpop.f32.mrf.mxu0
      %v540 = vadd.f32 %v404, %v539
      %v541 = vpop.f32.mrf.mxu0
      %v542 = vpop.f32.mrf.mxu0
      %v543 = vadd.f32 %v404, %v542
      %v544 = vpop.f32.mrf.mxu0
      %545 = vmatprep.mubr.bf16.mxu0 0
      %546 = vmatmul.mubr.bf16.gmra.mxu0 %v472
      %v547 = vpop.f32.mrf.mxu0
      %v548 = vadd.f32 %v404, %v547
      %v549 = vpop.f32.mrf.mxu0
      %v550 = vpop.f32.mrf.mxu0
      %v551 = vadd.f32 %v404, %v550
      %v552 = vpop.f32.mrf.mxu0
      %553 = vmatprep.mubr.bf16.mxu0 0
      %554 = vmatmul.mubr.bf16.gmra.mxu0 %v475
      %v555 = vpop.f32.mrf.mxu0
      %v556 = vadd.f32 %v404, %v555
      %v557 = vpop.f32.mrf.mxu0
      %v558 = vpop.f32.mrf.mxu0
      %v559 = vadd.f32 %v404, %v558
      %v560 = vpop.f32.mrf.mxu0
      %561 = vmatprep.mubr.bf16.mxu0 0
      %562 = vmatmul.mubr.bf16.gmra.mxu0 %v478
      %v563 = vpop.f32.mrf.mxu0
      %v564 = vadd.f32 %v404, %v563
      %v565 = vpop.f32.mrf.mxu0
      %v566 = vpop.f32.mrf.mxu0
      %v567 = vadd.f32 %v404, %v566
      %v568 = vpop.f32.mrf.mxu0
      %569 = vmatprep.mubr.bf16.mxu0 0
      %570 = vmatmul.mubr.bf16.gmra.mxu0 %v481
      %v571 = vpop.f32.mrf.mxu0
      %v572 = vadd.f32 %v404, %v571
      %v573 = vpop.f32.mrf.mxu0
      %v574 = vpop.f32.mrf.mxu0
      %v575 = vadd.f32 %v404, %v574
      %v576 = vpop.f32.mrf.mxu0
      %577 = vmatprep.mubr.bf16.mxu0 0
      %578 = vmatmul.mubr.bf16.gmra.mxu0 %v484
      %v579 = vpop.f32.mrf.mxu0
      %v580 = vadd.f32 %v404, %v579
      %v581 = vpop.f32.mrf.mxu0
      %v582 = vpop.f32.mrf.mxu0
      %v583 = vadd.f32 %v404, %v582
      %v584 = vpop.f32.mrf.mxu0
      %585 = vmatprep.mubr.bf16.mxu0 0
      %586 = vmatmul.mubr.bf16.gmra.mxu0 %v487
      %v587 = vpop.f32.mrf.mxu0
      %v588 = vadd.f32 %v404, %v587
      %v589 = vpop.f32.mrf.mxu0
      %v590 = vpop.f32.mrf.mxu0
      %v591 = vadd.f32 %v404, %v590
      %v592 = vpop.f32.mrf.mxu0
      %593 = vmatprep.mubr.bf16.mxu0 0
      %594 = vmatmul.mubr.bf16.gmra.mxu0 %v490
      %v595 = vpop.f32.mrf.mxu0
      %v596 = vadd.f32 %v404, %v595
      %v597 = vpop.f32.mrf.mxu0
      %v598 = vpop.f32.mrf.mxu0
      %v599 = vadd.f32 %v404, %v598
      %v600 = vpop.f32.mrf.mxu0
      %601 = vmatprep.mubr.bf16.mxu0 0
      %602 = vmatmul.mubr.bf16.gmra.mxu0 %v493
      %v603 = vpop.f32.mrf.mxu0
      %v604 = vadd.f32 %v404, %v603
      %v605 = vpop.f32.mrf.mxu0
      %v606 = vpop.f32.mrf.mxu0
      %v607 = vadd.f32 %v404, %v606
      %v608 = vpop.f32.mrf.mxu0
      %609 = vmatprep.mubr.bf16.mxu0 0
      %610 = vmatmul.mubr.bf16.gmra.mxu0 %v496
      %v611 = vpop.f32.mrf.mxu0
      %v612 = vadd.f32 %v404, %v611
      %v613 = vpop.f32.mrf.mxu0
      %v614 = vpop.f32.mrf.mxu0
      %v615 = vadd.f32 %v404, %v614
      %v616 = vpop.f32.mrf.mxu0
      %617 = vdwg.mxu0
      %v618 = vpack.c.bf16 %v543, %v540
      %v619 = vpack.c.bf16 %v551, %v548
      %v620 = vpack.c.bf16 %v559, %v556
      %v621 = vpack.c.bf16 %v567, %v564
      %v622 = vpack.c.bf16 %v575, %v572
      %v623 = vpack.c.bf16 %v583, %v580
      %v624 = vpack.c.bf16 %v591, %v588
      %v625 = vpack.c.bf16 %v599, %v596
      %v626 = vpack.c.bf16 %v607, %v604
      %v627 = vpack.c.bf16 %v615, %v612
      %vm628 = vcmask 253952
      %vm629 = vsmask.f32 256
      %vm630 = vmand %vm628, %vm629
      %v631 = vld [vmem:[#allocation2] sm:$0x1]
      %v632 = vsel %vm630, 0, %v631
      %633 = vst [vmem:[#allocation2] sm:$0x1] %v632
      %v634 = vld [vmem:[#allocation2 + $0xc] sm:$0x1]
      %v635 = vsel %vm630, 0, %v634
      %636 = vst [vmem:[#allocation2 + $0xc] sm:$0x1] %v635
      %v637 = vld [vmem:[#allocation2 + $0x18] sm:$0x1]
      %v638 = vsel %vm630, 0, %v637
      %639 = vst [vmem:[#allocation2 + $0x18] sm:$0x1] %v638
      %v640 = vld [vmem:[#allocation2 + $0x24] sm:$0x1]
      %v641 = vsel %vm630, 0, %v640
      %642 = vst [vmem:[#allocation2 + $0x24] sm:$0x1] %v641
      %v643 = vld [vmem:[#allocation2 + $0x30] sm:$0x1]
      %v644 = vsel %vm630, 0, %v643
      %645 = vst [vmem:[#allocation2 + $0x30] sm:$0x1] %v644
      %v646 = vld [vmem:[#allocation2 + $0x3c] sm:$0x1]
      %v647 = vsel %vm630, 0, %v646
      %648 = vst [vmem:[#allocation2 + $0x3c] sm:$0x1] %v647
      %v649 = vld [vmem:[#allocation2 + $0x48] sm:$0x1]
      %v650 = vsel %vm630, 0, %v649
      %651 = vst [vmem:[#allocation2 + $0x48] sm:$0x1] %v650
      %v652 = vld [vmem:[#allocation2 + $0x54] sm:$0x1]
      %v653 = vsel %vm630, 0, %v652
      %654 = vst [vmem:[#allocation2 + $0x54] sm:$0x1] %v653
      %v655 = vld [vmem:[#allocation2 + $0x60] sm:$0x1]
      %v656 = vsel %vm630, 0, %v655
      %657 = vst [vmem:[#allocation2 + $0x60] sm:$0x1] %v656
      %v658 = vld [vmem:[#allocation2 + $0x6c] sm:$0x1]
      %v659 = vsel %vm630, 0, %v658
      %660 = vst [vmem:[#allocation2 + $0x6c] sm:$0x1] %v659
      %vm661 = vsmask.f32 7938
      %vm662 = vmand %vm628, %vm661
      %v663 = vld [vmem:[#allocation2 + $0x8] sm:$0x1]
      %v664 = vsel %vm662, 0, %v663
      %665 = vst [vmem:[#allocation2 + $0x8] sm:$0x1] %v664
      %v666 = vld [vmem:[#allocation2 + $0x14] sm:$0x1]
      %v667 = vsel %vm662, 0, %v666
      %668 = vst [vmem:[#allocation2 + $0x14] sm:$0x1] %v667
      %v669 = vld [vmem:[#allocation2 + $0x20] sm:$0x1]
      %v670 = vsel %vm662, 0, %v669
      %671 = vst [vmem:[#allocation2 + $0x20] sm:$0x1] %v670
      %v672 = vld [vmem:[#allocation2 + $0x2c] sm:$0x1]
      %v673 = vsel %vm662, 0, %v672
      %674 = vst [vmem:[#allocation2 + $0x2c] sm:$0x1] %v673
      %v675 = vld [vmem:[#allocation2 + $0x38] sm:$0x1]
      %v676 = vsel %vm662, 0, %v675
      %677 = vst [vmem:[#allocation2 + $0x38] sm:$0x1] %v676
      %v678 = vld [vmem:[#allocation2 + $0x44] sm:$0x1]
      %v679 = vsel %vm662, 0, %v678
      %680 = vst [vmem:[#allocation2 + $0x44] sm:$0x1] %v679
      %v681 = vld [vmem:[#allocation2 + $0x50] sm:$0x1]
      %v682 = vsel %vm662, 0, %v681
      %683 = vst [vmem:[#allocation2 + $0x50] sm:$0x1] %v682
      %v684 = vld [vmem:[#allocation2 + $0x5c] sm:$0x1]
      %v685 = vsel %vm662, 0, %v684
      %686 = vst [vmem:[#allocation2 + $0x5c] sm:$0x1] %v685
      %v687 = vld [vmem:[#allocation2 + $0x68] sm:$0x1]
      %v688 = vsel %vm662, 0, %v687
      %689 = vst [vmem:[#allocation2 + $0x68] sm:$0x1] %v688
      %v690 = vld [vmem:[#allocation2 + $0x74] sm:$0x1]
      %v691 = vsel %vm662, 0, %v690
      %692 = vst [vmem:[#allocation2 + $0x74] sm:$0x1] %v691
      %v703 = vunpack.c.l.b16 %v618
      %v704 = vunpack.c.h.b16 %v618
      %v705 = vunpack.c.l.b16 %v619
      %v706 = vunpack.c.h.b16 %v619
      %v707 = vunpack.c.l.b16 %v620
      %v708 = vunpack.c.h.b16 %v620
      %v709 = vunpack.c.l.b16 %v621
      %v710 = vunpack.c.h.b16 %v621
      %v711 = vunpack.c.l.b16 %v622
      %v712 = vunpack.c.h.b16 %v622
      %v713 = vunpack.c.l.b16 %v623
      %v714 = vunpack.c.h.b16 %v623
      %v715 = vunpack.c.l.b16 %v624
      %v716 = vunpack.c.h.b16 %v624
      %v717 = vunpack.c.l.b16 %v625
      %v718 = vunpack.c.h.b16 %v625
      %v719 = vunpack.c.l.b16 %v626
      %v720 = vunpack.c.h.b16 %v626
      %v721 = vunpack.c.l.b16 %v627
      %v722 = vunpack.c.h.b16 %v627
      %v723 = vpack.c.b16 %v703, %v703
      %v724 = vpack.c.b16 %v704, %v704
      %v725 = vpack.c.b16 %v705, %v705
      %v726 = vpack.c.b16 %v706, %v706
      %v727 = vpack.c.b16 %v707, %v707
      %v728 = vpack.c.b16 %v708, %v708
      %v729 = vpack.c.b16 %v709, %v709
      %v730 = vpack.c.b16 %v710, %v710
      %v731 = vpack.c.b16 %v711, %v711
      %v732 = vpack.c.b16 %v712, %v712
      %v733 = vpack.c.b16 %v713, %v713
      %v734 = vpack.c.b16 %v714, %v714
      %v735 = vpack.c.b16 %v715, %v715
      %v736 = vpack.c.b16 %v716, %v716
      %v737 = vpack.c.b16 %v717, %v717
      %v738 = vpack.c.b16 %v718, %v718
      %v739 = vpack.c.b16 %v719, %v719
      %v740 = vpack.c.b16 %v720, %v720
      %v741 = vpack.c.b16 %v721, %v721
      %v742 = vpack.c.b16 %v722, %v722
      %vm743 = vsmask.f32 4368
      %vm744 = vmor %vm629, %vm743
      %v746 = vshrl.u32 %v723, 16
      %v748 = vrot.slane %v746, 7
      %v749 = vshll.u32 %v723, 16
      %v751 = vor.u32 %v748, %v749
      %v752 = vrot.slane %v748, 4
      %v754 = vshrl.u32 %v724, 16
      %v756 = vrot.slane %v754, 7
      %v757 = vshll.u32 %v724, 16
      %v759 = vor.u32 %v756, %v757
      %v760 = vsel %vm744, %v752, %v759
      %v761 = vrot.slane %v756, 4
      %v763 = vshrl.u32 %v725, 16
      %v765 = vrot.slane %v763, 7
      %v766 = vshll.u32 %v725, 16
      %v768 = vor.u32 %v765, %v766
      %v769 = vrot.slane %v765, 4
      %v771 = vshrl.u32 %v726, 16
      %v773 = vrot.slane %v771, 7
      %v774 = vshll.u32 %v726, 16
      %v776 = vor.u32 %v773, %v774
      %v777 = vsel %vm744, %v769, %v776
      %v778 = vrot.slane %v773, 4
      %v780 = vshrl.u32 %v727, 16
      %v782 = vrot.slane %v780, 7
      %v783 = vshll.u32 %v727, 16
      %v785 = vor.u32 %v782, %v783
      %v786 = vrot.slane %v782, 4
      %v788 = vshrl.u32 %v728, 16
      %v790 = vrot.slane %v788, 7
      %v791 = vshll.u32 %v728, 16
      %v793 = vor.u32 %v790, %v791
      %v794 = vsel %vm744, %v786, %v793
      %v795 = vrot.slane %v790, 4
      %v797 = vshrl.u32 %v729, 16
      %v799 = vrot.slane %v797, 7
      %v800 = vshll.u32 %v729, 16
      %v802 = vor.u32 %v799, %v800
      %v803 = vrot.slane %v799, 4
      %v805 = vshrl.u32 %v730, 16
      %v807 = vrot.slane %v805, 7
      %v808 = vshll.u32 %v730, 16
      %v810 = vor.u32 %v807, %v808
      %v811 = vsel %vm744, %v803, %v810
      %v812 = vrot.slane %v807, 4
      %v814 = vshrl.u32 %v731, 16
      %v816 = vrot.slane %v814, 7
      %v817 = vshll.u32 %v731, 16
      %v819 = vor.u32 %v816, %v817
      %v820 = vrot.slane %v816, 4
      %v822 = vshrl.u32 %v732, 16
      %v824 = vrot.slane %v822, 7
      %v825 = vshll.u32 %v732, 16
      %v827 = vor.u32 %v824, %v825
      %v828 = vsel %vm744, %v820, %v827
      %v829 = vrot.slane %v824, 4
      %v831 = vshrl.u32 %v733, 16
      %v833 = vrot.slane %v831, 7
      %v834 = vshll.u32 %v733, 16
      %v836 = vor.u32 %v833, %v834
      %v837 = vrot.slane %v833, 4
      %v839 = vshrl.u32 %v734, 16
      %v841 = vrot.slane %v839, 7
      %v842 = vshll.u32 %v734, 16
      %v844 = vor.u32 %v841, %v842
      %v845 = vsel %vm744, %v837, %v844
      %v846 = vrot.slane %v841, 4
      %v848 = vshrl.u32 %v735, 16
      %v850 = vrot.slane %v848, 7
      %v851 = vshll.u32 %v735, 16
      %v853 = vor.u32 %v850, %v851
      %v854 = vrot.slane %v850, 4
      %v856 = vshrl.u32 %v736, 16
      %v858 = vrot.slane %v856, 7
      %v859 = vshll.u32 %v736, 16
      %v861 = vor.u32 %v858, %v859
      %v862 = vsel %vm744, %v854, %v861
      %v863 = vrot.slane %v858, 4
      %v865 = vshrl.u32 %v737, 16
      %v867 = vrot.slane %v865, 7
      %v868 = vshll.u32 %v737, 16
      %v870 = vor.u32 %v867, %v868
      %v871 = vrot.slane %v867, 4
      %v873 = vshrl.u32 %v738, 16
      %v875 = vrot.slane %v873, 7
      %v876 = vshll.u32 %v738, 16
      %v878 = vor.u32 %v875, %v876
      %v879 = vsel %vm744, %v871, %v878
      %v880 = vrot.slane %v875, 4
      %v882 = vshrl.u32 %v739, 16
      %v884 = vrot.slane %v882, 7
      %v885 = vshll.u32 %v739, 16
      %v887 = vor.u32 %v884, %v885
      %v888 = vrot.slane %v884, 4
      %v890 = vshrl.u32 %v740, 16
      %v892 = vrot.slane %v890, 7
      %v893 = vshll.u32 %v740, 16
      %v895 = vor.u32 %v892, %v893
      %v896 = vsel %vm744, %v888, %v895
      %v897 = vrot.slane %v892, 4
      %v899 = vshrl.u32 %v741, 16
      %v901 = vrot.slane %v899, 7
      %v902 = vshll.u32 %v741, 16
      %v904 = vor.u32 %v901, %v902
      %v905 = vrot.slane %v901, 4
      %v907 = vshrl.u32 %v742, 16
      %v909 = vrot.slane %v907, 7
      %v910 = vshll.u32 %v742, 16
      %v912 = vor.u32 %v909, %v910
      %v913 = vsel %vm744, %v905, %v912
      %v914 = vrot.slane %v909, 4
      %vm945 = vcmask 257024
      %vm946 = vmand %vm945, %vm661
      %v947 = vld [vmem:[#allocation2] sm:$0xf]
      %v948 = vsel %vm946, %v751, %v947
      %949 = vst [vmem:[#allocation2] sm:$0xf] %v948
      %vm950 = vcmask 257024
      %951 = vst.msk [vmem:[#allocation2 + $0x4] sm:$0xf] %vm950, %v760
      %v952 = vld [vmem:[#allocation2 + $0x8] sm:$0x1]
      %v953 = vsel %vm630, %v761, %v952
      %954 = vst [vmem:[#allocation2 + $0x8] sm:$0x1] %v953
      %v955 = vld [vmem:[#allocation2 + $0xc] sm:$0xf]
      %v956 = vsel %vm946, %v768, %v955
      %957 = vst [vmem:[#allocation2 + $0xc] sm:$0xf] %v956
      %958 = vst.msk [vmem:[#allocation2 + $0x10] sm:$0xf] %vm950, %v777
      %v959 = vld [vmem:[#allocation2 + $0x14] sm:$0x1]
      %v960 = vsel %vm630, %v778, %v959
      %961 = vst [vmem:[#allocation2 + $0x14] sm:$0x1] %v960
      %v962 = vld [vmem:[#allocation2 + $0x18] sm:$0xf]
      %v963 = vsel %vm946, %v785, %v962
      %964 = vst [vmem:[#allocation2 + $0x18] sm:$0xf] %v963
      %965 = vst.msk [vmem:[#allocation2 + $0x1c] sm:$0xf] %vm950, %v794
      %v966 = vld [vmem:[#allocation2 + $0x20] sm:$0x1]
      %v967 = vsel %vm630, %v795, %v966
      %968 = vst [vmem:[#allocation2 + $0x20] sm:$0x1] %v967
      %v969 = vld [vmem:[#allocation2 + $0x24] sm:$0xf]
      %v970 = vsel %vm946, %v802, %v969
      %971 = vst [vmem:[#allocation2 + $0x24] sm:$0xf] %v970
      %972 = vst.msk [vmem:[#allocation2 + $0x28] sm:$0xf] %vm950, %v811
      %v973 = vld [vmem:[#allocation2 + $0x2c] sm:$0x1]
      %v974 = vsel %vm630, %v812, %v973
      %975 = vst [vmem:[#allocation2 + $0x2c] sm:$0x1] %v974
      %v976 = vld [vmem:[#allocation2 + $0x30] sm:$0xf]
      %v977 = vsel %vm946, %v819, %v976
      %978 = vst [vmem:[#allocation2 + $0x30] sm:$0xf] %v977
      %979 = vst.msk [vmem:[#allocation2 + $0x34] sm:$0xf] %vm950, %v828
      %v980 = vld [vmem:[#allocation2 + $0x38] sm:$0x1]
      %v981 = vsel %vm630, %v829, %v980
      %982 = vst [vmem:[#allocation2 + $0x38] sm:$0x1] %v981
      %v983 = vld [vmem:[#allocation2 + $0x3c] sm:$0xf]
      %v984 = vsel %vm946, %v836, %v983
      %985 = vst [vmem:[#allocation2 + $0x3c] sm:$0xf] %v984
      %986 = vst.msk [vmem:[#allocation2 + $0x40] sm:$0xf] %vm950, %v845
      %v987 = vld [vmem:[#allocation2 + $0x44] sm:$0x1]
      %v988 = vsel %vm630, %v846, %v987
      %989 = vst [vmem:[#allocation2 + $0x44] sm:$0x1] %v988
      %v990 = vld [vmem:[#allocation2 + $0x48] sm:$0xf]
      %v991 = vsel %vm946, %v853, %v990
      %992 = vst [vmem:[#allocation2 + $0x48] sm:$0xf] %v991
      %993 = vst.msk [vmem:[#allocation2 + $0x4c] sm:$0xf] %vm950, %v862
      %v994 = vld [vmem:[#allocation2 + $0x50] sm:$0x1]
      %v995 = vsel %vm630, %v863, %v994
      %996 = vst [vmem:[#allocation2 + $0x50] sm:$0x1] %v995
      %v997 = vld [vmem:[#allocation2 + $0x54] sm:$0xf]
      %v998 = vsel %vm946, %v870, %v997
      %999 = vst [vmem:[#allocation2 + $0x54] sm:$0xf] %v998
      %1000 = vst.msk [vmem:[#allocation2 + $0x58] sm:$0xf] %vm950, %v879
      %v1001 = vld [vmem:[#allocation2 + $0x5c] sm:$0x1]
      %v1002 = vsel %vm630, %v880, %v1001
      %1003 = vst [vmem:[#allocation2 + $0x5c] sm:$0x1] %v1002
      %v1004 = vld [vmem:[#allocation2 + $0x60] sm:$0xf]
      %v1005 = vsel %vm946, %v887, %v1004
      %1006 = vst [vmem:[#allocation2 + $0x60] sm:$0xf] %v1005
      %1007 = vst.msk [vmem:[#allocation2 + $0x64] sm:$0xf] %vm950, %v896
      %v1008 = vld [vmem:[#allocation2 + $0x68] sm:$0x1]
      %v1009 = vsel %vm630, %v897, %v1008
      %1010 = vst [vmem:[#allocation2 + $0x68] sm:$0x1] %v1009
      %v1011 = vld [vmem:[#allocation2 + $0x6c] sm:$0xf]
      %v1012 = vsel %vm946, %v904, %v1011
      %1013 = vst [vmem:[#allocation2 + $0x6c] sm:$0xf] %v1012
      %1014 = vst.msk [vmem:[#allocation2 + $0x70] sm:$0xf] %vm950, %v913
      %v1015 = vld [vmem:[#allocation2 + $0x74] sm:$0x1]
      %v1016 = vsel %vm630, %v914, %v1015
      %1017 = vst [vmem:[#allocation2 + $0x74] sm:$0x1] %v1016
      %p1018 = scmp.eq.s32.totalorder %s24, 0
      // Predicated region
      $region53: #{spade_pallas.3} parent=51 // pred_check
        %p1019 = pneg %p1018
      $region54: #{spade_pallas.3} parent=51 // pred_check_branch
        %1021 = sbr.rel (%p1019) target = $region56
      $region55: #{spade_pallas.3} parent=51 // pred_region
        %1022 = vst.msk [vmem:[#allocation2] sm:$0xf] %vm950, 0
        %1023 = vst.msk [vmem:[#allocation2 + $0x4] sm:$0xf] %vm950, 0
        %vm1024 = vcmask 253952
        %1025 = vst.msk [vmem:[#allocation2 + $0x8] sm:$0x1] %vm1024, 0
      $region56: #{spade_pallas.3} parent=51 // pred_fallthru
        _
      %p1026 = scmp.eq.s32.totalorder %s24, 1
      // Predicated region
      $region57: #{spade_pallas.3} parent=51 // pred_check
        %p1027 = pneg %p1026
      $region58: #{spade_pallas.3} parent=51 // pred_check_branch
        %1029 = sbr.rel (%p1027) target = $region60
      $region59: #{spade_pallas.3} parent=51 // pred_region
        %s1030 = scalar_lea.vmem [#allocation2], 108
        %1031 = vst.msk [vmem:[%s1030] sm:$0xf] %vm950, 0
        %1032 = vst.msk [vmem:[%s1030 + $0x4] sm:$0xf] %vm950, 0
        %vm1033 = vcmask 253952
        %1034 = vst.msk [vmem:[%s1030 + $0x8] sm:$0x1] %vm1033, 0
      $region60: #{spade_pallas.3} parent=51 // pred_fallthru
        _
      %v1035 = vld [vmem:[#allocation2] sm:$0xf]
      %v1036 = vld [vmem:[#allocation2 + $0x4] sm:$0xf]
      %v1037 = vld [vmem:[#allocation2 + $0xc] sm:$0xf]
      %v1038 = vld [vmem:[#allocation2 + $0x10] sm:$0xf]
      %v1039 = vld [vmem:[#allocation2 + $0x18] sm:$0xf]
      %v1040 = vld [vmem:[#allocation2 + $0x1c] sm:$0xf]
      %v1041 = vld [vmem:[#allocation2 + $0x24] sm:$0xf]
      %v1042 = vld [vmem:[#allocation2 + $0x28] sm:$0xf]
      %v1043 = vld [vmem:[#allocation2 + $0x30] sm:$0xf]
      %v1044 = vld [vmem:[#allocation2 + $0x34] sm:$0xf]
      %v1045 = vld [vmem:[#allocation2 + $0x3c] sm:$0xf]
      %v1046 = vld [vmem:[#allocation2 + $0x40] sm:$0xf]
      %v1047 = vld [vmem:[#allocation2 + $0x48] sm:$0xf]
      %v1048 = vld [vmem:[#allocation2 + $0x4c] sm:$0xf]
      %v1049 = vld [vmem:[#allocation2 + $0x54] sm:$0xf]
      %v1050 = vld [vmem:[#allocation2 + $0x58] sm:$0xf]
      %v1051 = vld [vmem:[%s6] sm:$0xf]
      %v1052 = vld [vmem:[%s6 + $0x4] sm:$0xf]
      %v1053 = vld [vmem:[%s6 + $0x8] sm:$0xf]
      %v1054 = vld [vmem:[%s6 + $0xc] sm:$0xf]
      %v1055 = vld [vmem:[#allocation2 + $0x8] sm:$0x1]
      %v1056 = vld [vmem:[#allocation2 + $0x14] sm:$0x1]
      %v1057 = vld [vmem:[#allocation2 + $0x20] sm:$0x1]
      %v1058 = vld [vmem:[#allocation2 + $0x2c] sm:$0x1]
      %v1059 = vld [vmem:[#allocation2 + $0x38] sm:$0x1]
      %v1060 = vld [vmem:[#allocation2 + $0x44] sm:$0x1]
      %v1061 = vld [vmem:[#allocation2 + $0x50] sm:$0x1]
      %v1062 = vld [vmem:[#allocation2 + $0x5c] sm:$0x1]
      %vm1063 = vsmask.f32 3328
      %vm1064 = vsmask.f32 7440
      %vm1065 = vmor %vm1063, %vm1064
      %v1067 = vshrl.u32 %v1035, 16
      %v1069 = vrot.slane %v1067, 4
      %v1070 = vshll.u32 %v1035, 16
      %v1072 = vrot.slane %v1070, 5
      %v1073 = vor.u32 %v1069, %v1072
      %v1074 = vrot.slane %v1073, 4
      %v1076 = vshll.u32 %v1036, 16
      %v1078 = vrot.slane %v1076, 5
      %v1079 = vsel %vm1065, %v1074, %v1078
      %v1080 = vshrl.u32 %v1036, 16
      %v1082 = vrot.slane %v1080, 4
      %v1083 = vor.u32 %v1082, %v1078
      %v1084 = vrot.slane %v1083, 4
      %v1086 = vshll.u32 %v1055, 16
      %v1088 = vrot.slane %v1086, 5
      %v1089 = vsel %vm1065, %v1084, %v1088
      %v1091 = vshrl.u32 %v1037, 16
      %v1093 = vrot.slane %v1091, 4
      %v1094 = vshll.u32 %v1037, 16
      %v1096 = vrot.slane %v1094, 5
      %v1097 = vor.u32 %v1093, %v1096
      %v1098 = vrot.slane %v1097, 4
      %v1100 = vshll.u32 %v1038, 16
      %v1102 = vrot.slane %v1100, 5
      %v1103 = vsel %vm1065, %v1098, %v1102
      %v1104 = vshrl.u32 %v1038, 16
      %v1106 = vrot.slane %v1104, 4
      %v1107 = vor.u32 %v1106, %v1102
      %v1108 = vrot.slane %v1107, 4
      %v1110 = vshll.u32 %v1056, 16
      %v1112 = vrot.slane %v1110, 5
      %v1113 = vsel %vm1065, %v1108, %v1112
      %v1115 = vshrl.u32 %v1039, 16
      %v1117 = vrot.slane %v1115, 4
      %v1118 = vshll.u32 %v1039, 16
      %v1120 = vrot.slane %v1118, 5
      %v1121 = vor.u32 %v1117, %v1120
      %v1122 = vrot.slane %v1121, 4
      %v1124 = vshll.u32 %v1040, 16
      %v1126 = vrot.slane %v1124, 5
      %v1127 = vsel %vm1065, %v1122, %v1126
      %v1128 = vshrl.u32 %v1040, 16
      %v1130 = vrot.slane %v1128, 4
      %v1131 = vor.u32 %v1130, %v1126
      %v1132 = vrot.slane %v1131, 4
      %v1134 = vshll.u32 %v1057, 16
      %v1136 = vrot.slane %v1134, 5
      %v1137 = vsel %vm1065, %v1132, %v1136
      %v1139 = vshrl.u32 %v1041, 16
      %v1141 = vrot.slane %v1139, 4
      %v1142 = vshll.u32 %v1041, 16
      %v1144 = vrot.slane %v1142, 5
      %v1145 = vor.u32 %v1141, %v1144
      %v1146 = vrot.slane %v1145, 4
      %v1148 = vshll.u32 %v1042, 16
      %v1150 = vrot.slane %v1148, 5
      %v1151 = vsel %vm1065, %v1146, %v1150
      %v1152 = vshrl.u32 %v1042, 16
      %v1154 = vrot.slane %v1152, 4
      %v1155 = vor.u32 %v1154, %v1150
      %v1156 = vrot.slane %v1155, 4
      %v1158 = vshll.u32 %v1058, 16
      %v1160 = vrot.slane %v1158, 5
      %v1161 = vsel %vm1065, %v1156, %v1160
      %v1163 = vshrl.u32 %v1043, 16
      %v1165 = vrot.slane %v1163, 4
      %v1166 = vshll.u32 %v1043, 16
      %v1168 = vrot.slane %v1166, 5
      %v1169 = vor.u32 %v1165, %v1168
      %v1170 = vrot.slane %v1169, 4
      %v1172 = vshll.u32 %v1044, 16
      %v1174 = vrot.slane %v1172, 5
      %v1175 = vsel %vm1065, %v1170, %v1174
      %v1176 = vshrl.u32 %v1044, 16
      %v1178 = vrot.slane %v1176, 4
      %v1179 = vor.u32 %v1178, %v1174
      %v1180 = vrot.slane %v1179, 4
      %v1182 = vshll.u32 %v1059, 16
      %v1184 = vrot.slane %v1182, 5
      %v1185 = vsel %vm1065, %v1180, %v1184
      %v1187 = vshrl.u32 %v1045, 16
      %v1189 = vrot.slane %v1187, 4
      %v1190 = vshll.u32 %v1045, 16
      %v1192 = vrot.slane %v1190, 5
      %v1193 = vor.u32 %v1189, %v1192
      %v1194 = vrot.slane %v1193, 4
      %v1196 = vshll.u32 %v1046, 16
      %v1198 = vrot.slane %v1196, 5
      %v1199 = vsel %vm1065, %v1194, %v1198
      %v1200 = vshrl.u32 %v1046, 16
      %v1202 = vrot.slane %v1200, 4
      %v1203 = vor.u32 %v1202, %v1198
      %v1204 = vrot.slane %v1203, 4
      %v1206 = vshll.u32 %v1060, 16
      %v1208 = vrot.slane %v1206, 5
      %v1209 = vsel %vm1065, %v1204, %v1208
      %v1211 = vshrl.u32 %v1047, 16
      %v1213 = vrot.slane %v1211, 4
      %v1214 = vshll.u32 %v1047, 16
      %v1216 = vrot.slane %v1214, 5
      %v1217 = vor.u32 %v1213, %v1216
      %v1218 = vrot.slane %v1217, 4
      %v1220 = vshll.u32 %v1048, 16
      %v1222 = vrot.slane %v1220, 5
      %v1223 = vsel %vm1065, %v1218, %v1222
      %v1224 = vshrl.u32 %v1048, 16
      %v1226 = vrot.slane %v1224, 4
      %v1227 = vor.u32 %v1226, %v1222
      %v1228 = vrot.slane %v1227, 4
      %v1230 = vshll.u32 %v1061, 16
      %v1232 = vrot.slane %v1230, 5
      %v1233 = vsel %vm1065, %v1228, %v1232
      %v1235 = vshrl.u32 %v1049, 16
      %v1237 = vrot.slane %v1235, 4
      %v1238 = vshll.u32 %v1049, 16
      %v1240 = vrot.slane %v1238, 5
      %v1241 = vor.u32 %v1237, %v1240
      %v1242 = vrot.slane %v1241, 4
      %v1244 = vshll.u32 %v1050, 16
      %v1246 = vrot.slane %v1244, 5
      %v1247 = vsel %vm1065, %v1242, %v1246
      %v1248 = vshrl.u32 %v1050, 16
      %v1250 = vrot.slane %v1248, 4
      %v1251 = vor.u32 %v1250, %v1246
      %v1252 = vrot.slane %v1251, 4
      %v1254 = vshll.u32 %v1062, 16
      %v1256 = vrot.slane %v1254, 5
      %v1257 = vsel %vm1065, %v1252, %v1256
      %s1258 = scalar_lea.vmem %s6, 16
      %v1259 = vld [vmem:[%s1258] sm:$0xf]
      %v1260 = vld [vmem:[%s1258 + $0x4] sm:$0xf]
      %v1261 = vld [vmem:[%s1258 + $0x8] sm:$0xf]
      %v1262 = vld [vmem:[%s1258 + $0xc] sm:$0xf]
      %v1263 = vunpack.c.l.b16 %v1079
      %v1264 = vunpack.c.l.b16 %v1089
      %v1265 = vunpack.c.l.b16 %v1103
      %v1266 = vunpack.c.l.b16 %v1113
      %v1267 = vunpack.c.l.b16 %v1127
      %v1268 = vunpack.c.l.b16 %v1137
      %v1269 = vunpack.c.l.b16 %v1151
      %v1270 = vunpack.c.l.b16 %v1161
      %v1271 = vunpack.c.l.b16 %v1175
      %v1272 = vunpack.c.l.b16 %v1185
      %v1273 = vunpack.c.l.b16 %v1199
      %v1274 = vunpack.c.l.b16 %v1209
      %v1275 = vunpack.c.l.b16 %v1223
      %v1276 = vunpack.c.l.b16 %v1233
      %v1277 = vunpack.c.l.b16 %v1247
      %v1278 = vunpack.c.l.b16 %v1257
      %v1279 = vpack.c.b16 %v1264, %v1263
      %v1280 = vpack.c.b16 %v1266, %v1265
      %v1281 = vpack.c.b16 %v1268, %v1267
      %v1282 = vpack.c.b16 %v1270, %v1269
      %v1283 = vpack.c.b16 %v1272, %v1271
      %v1284 = vpack.c.b16 %v1274, %v1273
      %v1285 = vpack.c.b16 %v1276, %v1275
      %v1286 = vpack.c.b16 %v1278, %v1277
      %v1291 = vunpack.c.l.b16 %v1259
      %v1292 = vunpack.c.l.b16 %v1260
      %v1293 = vunpack.c.l.b16 %v1261
      %v1294 = vunpack.c.l.b16 %v1262
      %v1295 = vpack.c.b16 %v1292, %v1291
      %v1296 = vpack.c.b16 %v1294, %v1293
      %vm1299 = vcmask 261120
      %v1301 = vsel %vm1299, %v1279, 0
      %v1304 = vsel %vm1299, %v1280, 0
      %v1307 = vsel %vm1299, %v1281, 0
      %v1310 = vsel %vm1299, %v1282, 0
      %v1313 = vsel %vm1299, %v1283, 0
      %v1316 = vsel %vm1299, %v1284, 0
      %v1319 = vsel %vm1299, %v1285, 0
      %v1322 = vsel %vm1299, %v1286, 0
      %1324 = vmatprep.subr.bf16.mxu0 0
      %1325 = vmatpush1.bf16.msra.mxu0 0
      %1326 = vmatprep.subr.bf16.mxu0 0
      %1327 = vmatpush1.bf16.msra.mxu0 0
      %1328 = vmatprep.subr.bf16.mxu0 0
      %1329 = vmatpush1.bf16.msra.mxu0 0
      %1330 = vmatprep.subr.bf16.mxu0 0
      %1331 = vmatpush1.bf16.msra.mxu0 0
      %1332 = vmatprep.subr.bf16.mxu0 0
      %1333 = vmatpush1.bf16.msra.mxu0 0
      %1334 = vmatprep.subr.bf16.mxu0 0
      %1335 = vmatpush1.bf16.msra.mxu0 0
      %1336 = vmatprep.subr.bf16.mxu0 0
      %1337 = vmatpush1.bf16.msra.mxu0 %v1296
      %1338 = vmatprep.subr.bf16.mxu0 0
      %1339 = vmatpush1.bf16.msra.mxu0 %v1295
      %1340 = vmatprep.subr.bf16.mxu0 0
      %1341 = vmatpush2.bf16.msra.mxu0 0
      %1342 = vmatprep.subr.bf16.mxu0 0
      %1343 = vmatpush2.bf16.msra.mxu0 0
      %1344 = vmatprep.subr.bf16.mxu0 0
      %1345 = vmatpush2.bf16.msra.mxu0 0
      %1346 = vmatprep.subr.bf16.mxu0 0
      %1347 = vmatpush2.bf16.msra.mxu0 0
      %1348 = vmatprep.subr.bf16.mxu0 0
      %1349 = vmatpush2.bf16.msra.mxu0 0
      %1350 = vmatprep.subr.bf16.mxu0 0
      %1351 = vmatpush2.bf16.msra.mxu0 0
      %1352 = vmatprep.subr.bf16.mxu0 0
      %1353 = vmatpush2.bf16.msra.mxu0 0
      %1354 = vmatprep.subr.bf16.mxu0 0
      %1355 = vmatpush2.bf16.msra.mxu0 0
      %1356 = vmatprep.mubr.bf16.mxu0 0
      %1357 = vmatmul.mubr.bf16.gmra.mxu0 %v1301
      %v1358 = vpop.f32.mrf.mxu0
      %v1359 = vadd.f32 0.0, %v1358
      %v1360 = vpop.f32.mrf.mxu0
      %v1361 = vpop.f32.mrf.mxu0
      %v1362 = vadd.f32 0.0, %v1361
      %v1363 = vpop.f32.mrf.mxu0
      %1364 = vmatprep.mubr.bf16.mxu0 0
      %1365 = vmatmul.mubr.bf16.gmra.mxu0 %v1304
      %v1366 = vpop.f32.mrf.mxu0
      %v1367 = vadd.f32 0.0, %v1366
      %v1368 = vpop.f32.mrf.mxu0
      %v1369 = vpop.f32.mrf.mxu0
      %v1370 = vadd.f32 0.0, %v1369
      %v1371 = vpop.f32.mrf.mxu0
      %1372 = vmatprep.mubr.bf16.mxu0 0
      %1373 = vmatmul.mubr.bf16.gmra.mxu0 %v1307
      %v1374 = vpop.f32.mrf.mxu0
      %v1375 = vadd.f32 0.0, %v1374
      %v1376 = vpop.f32.mrf.mxu0
      %v1377 = vpop.f32.mrf.mxu0
      %v1378 = vadd.f32 0.0, %v1377
      %v1379 = vpop.f32.mrf.mxu0
      %1380 = vmatprep.mubr.bf16.mxu0 0
      %1381 = vmatmul.mubr.bf16.gmra.mxu0 %v1310
      %v1382 = vpop.f32.mrf.mxu0
      %v1383 = vadd.f32 0.0, %v1382
      %v1384 = vpop.f32.mrf.mxu0
      %v1385 = vpop.f32.mrf.mxu0
      %v1386 = vadd.f32 0.0, %v1385
      %v1387 = vpop.f32.mrf.mxu0
      %1388 = vmatprep.mubr.bf16.mxu0 0
      %1389 = vmatmul.mubr.bf16.gmra.mxu0 %v1313
      %v1390 = vpop.f32.mrf.mxu0
      %v1391 = vadd.f32 0.0, %v1390
      %v1392 = vpop.f32.mrf.mxu0
      %v1393 = vpop.f32.mrf.mxu0
      %v1394 = vadd.f32 0.0, %v1393
      %v1395 = vpop.f32.mrf.mxu0
      %1396 = vmatprep.mubr.bf16.mxu0 0
      %1397 = vmatmul.mubr.bf16.gmra.mxu0 %v1316
      %v1398 = vpop.f32.mrf.mxu0
      %v1399 = vadd.f32 0.0, %v1398
      %v1400 = vpop.f32.mrf.mxu0
      %v1401 = vpop.f32.mrf.mxu0
      %v1402 = vadd.f32 0.0, %v1401
      %v1403 = vpop.f32.mrf.mxu0
      %1404 = vmatprep.mubr.bf16.mxu0 0
      %1405 = vmatmul.mubr.bf16.gmra.mxu0 %v1319
      %v1406 = vpop.f32.mrf.mxu0
      %v1407 = vadd.f32 0.0, %v1406
      %v1408 = vpop.f32.mrf.mxu0
      %v1409 = vpop.f32.mrf.mxu0
      %v1410 = vadd.f32 0.0, %v1409
      %v1411 = vpop.f32.mrf.mxu0
      %1412 = vmatprep.mubr.bf16.mxu0 0
      %1413 = vmatmul.mubr.bf16.gmra.mxu0 %v1322
      %v1414 = vpop.f32.mrf.mxu0
      %v1415 = vadd.f32 0.0, %v1414
      %v1416 = vpop.f32.mrf.mxu0
      %v1417 = vpop.f32.mrf.mxu0
      %v1418 = vadd.f32 0.0, %v1417
      %v1419 = vpop.f32.mrf.mxu0
      %1420 = vdwg.mxu0
      %v1437 = vunpack.c.l.b16 %v1035
      %v1438 = vunpack.c.l.b16 %v1036
      %v1439 = vunpack.c.l.b16 %v1037
      %v1440 = vunpack.c.l.b16 %v1038
      %v1441 = vunpack.c.l.b16 %v1039
      %v1442 = vunpack.c.l.b16 %v1040
      %v1443 = vunpack.c.l.b16 %v1041
      %v1444 = vunpack.c.l.b16 %v1042
      %v1445 = vunpack.c.l.b16 %v1043
      %v1446 = vunpack.c.l.b16 %v1044
      %v1447 = vunpack.c.l.b16 %v1045
      %v1448 = vunpack.c.l.b16 %v1046
      %v1449 = vunpack.c.l.b16 %v1047
      %v1450 = vunpack.c.l.b16 %v1048
      %v1451 = vunpack.c.l.b16 %v1049
      %v1452 = vunpack.c.l.b16 %v1050
      %v1453 = vpack.c.b16 %v1438, %v1437
      %v1454 = vpack.c.b16 %v1440, %v1439
      %v1455 = vpack.c.b16 %v1442, %v1441
      %v1456 = vpack.c.b16 %v1444, %v1443
      %v1457 = vpack.c.b16 %v1446, %v1445
      %v1458 = vpack.c.b16 %v1448, %v1447
      %v1459 = vpack.c.b16 %v1450, %v1449
      %v1460 = vpack.c.b16 %v1452, %v1451
      %v1465 = vunpack.c.l.b16 %v1051
      %v1466 = vunpack.c.l.b16 %v1052
      %v1467 = vunpack.c.l.b16 %v1053
      %v1468 = vunpack.c.l.b16 %v1054
      %v1469 = vpack.c.b16 %v1466, %v1465
      %v1470 = vpack.c.b16 %v1468, %v1467
      %v1474 = vsel %vm1299, %v1453, 0
      %v1477 = vsel %vm1299, %v1454, 0
      %v1480 = vsel %vm1299, %v1455, 0
      %v1483 = vsel %vm1299, %v1456, 0
      %v1486 = vsel %vm1299, %v1457, 0
      %v1489 = vsel %vm1299, %v1458, 0
      %v1492 = vsel %vm1299, %v1459, 0
      %v1495 = vsel %vm1299, %v1460, 0
      %1497 = vmatprep.subr.bf16.mxu0 0
      %1498 = vmatpush1.bf16.msra.mxu0 0
      %1499 = vmatprep.subr.bf16.mxu0 0
      %1500 = vmatpush1.bf16.msra.mxu0 0
      %1501 = vmatprep.subr.bf16.mxu0 0
      %1502 = vmatpush1.bf16.msra.mxu0 0
      %1503 = vmatprep.subr.bf16.mxu0 0
      %1504 = vmatpush1.bf16.msra.mxu0 0
      %1505 = vmatprep.subr.bf16.mxu0 0
      %1506 = vmatpush1.bf16.msra.mxu0 0
      %1507 = vmatprep.subr.bf16.mxu0 0
      %1508 = vmatpush1.bf16.msra.mxu0 0
      %1509 = vmatprep.subr.bf16.mxu0 0
      %1510 = vmatpush1.bf16.msra.mxu0 %v1470
      %1511 = vmatprep.subr.bf16.mxu0 0
      %1512 = vmatpush1.bf16.msra.mxu0 %v1469
      %1513 = vmatprep.subr.bf16.mxu0 0
      %1514 = vmatpush2.bf16.msra.mxu0 0
      %1515 = vmatprep.subr.bf16.mxu0 0
      %1516 = vmatpush2.bf16.msra.mxu0 0
      %1517 = vmatprep.subr.bf16.mxu0 0
      %1518 = vmatpush2.bf16.msra.mxu0 0
      %1519 = vmatprep.subr.bf16.mxu0 0
      %1520 = vmatpush2.bf16.msra.mxu0 0
      %1521 = vmatprep.subr.bf16.mxu0 0
      %1522 = vmatpush2.bf16.msra.mxu0 0
      %1523 = vmatprep.subr.bf16.mxu0 0
      %1524 = vmatpush2.bf16.msra.mxu0 0
      %1525 = vmatprep.subr.bf16.mxu0 0
      %1526 = vmatpush2.bf16.msra.mxu0 0
      %1527 = vmatprep.subr.bf16.mxu0 0
      %1528 = vmatpush2.bf16.msra.mxu0 0
      %1529 = vmatprep.mubr.bf16.mxu0 0
      %1530 = vmatmul.mubr.bf16.gmra.mxu0 %v1474
      %v1531 = vpop.f32.mrf.mxu0
      %v1532 = vadd.f32 %v1359, %v1531
      %v1533 = vpop.f32.mrf.mxu0
      %v1534 = vpop.f32.mrf.mxu0
      %v1535 = vadd.f32 %v1362, %v1534
      %v1536 = vpop.f32.mrf.mxu0
      %1537 = vmatprep.mubr.bf16.mxu0 0
      %1538 = vmatmul.mubr.bf16.gmra.mxu0 %v1477
      %v1539 = vpop.f32.mrf.mxu0
      %v1540 = vadd.f32 %v1367, %v1539
      %v1541 = vpop.f32.mrf.mxu0
      %v1542 = vpop.f32.mrf.mxu0
      %v1543 = vadd.f32 %v1370, %v1542
      %v1544 = vpop.f32.mrf.mxu0
      %1545 = vmatprep.mubr.bf16.mxu0 0
      %1546 = vmatmul.mubr.bf16.gmra.mxu0 %v1480
      %v1547 = vpop.f32.mrf.mxu0
      %v1548 = vadd.f32 %v1375, %v1547
      %v1549 = vpop.f32.mrf.mxu0
      %v1550 = vpop.f32.mrf.mxu0
      %v1551 = vadd.f32 %v1378, %v1550
      %v1552 = vpop.f32.mrf.mxu0
      %1553 = vmatprep.mubr.bf16.mxu0 0
      %1554 = vmatmul.mubr.bf16.gmra.mxu0 %v1483
      %v1555 = vpop.f32.mrf.mxu0
      %v1556 = vadd.f32 %v1383, %v1555
      %v1557 = vpop.f32.mrf.mxu0
      %v1558 = vpop.f32.mrf.mxu0
      %v1559 = vadd.f32 %v1386, %v1558
      %v1560 = vpop.f32.mrf.mxu0
      %1561 = vmatprep.mubr.bf16.mxu0 0
      %1562 = vmatmul.mubr.bf16.gmra.mxu0 %v1486
      %v1563 = vpop.f32.mrf.mxu0
      %v1564 = vadd.f32 %v1391, %v1563
      %v1565 = vpop.f32.mrf.mxu0
      %v1566 = vpop.f32.mrf.mxu0
      %v1567 = vadd.f32 %v1394, %v1566
      %v1568 = vpop.f32.mrf.mxu0
      %1569 = vmatprep.mubr.bf16.mxu0 0
      %1570 = vmatmul.mubr.bf16.gmra.mxu0 %v1489
      %v1571 = vpop.f32.mrf.mxu0
      %v1572 = vadd.f32 %v1399, %v1571
      %v1573 = vpop.f32.mrf.mxu0
      %v1574 = vpop.f32.mrf.mxu0
      %v1575 = vadd.f32 %v1402, %v1574
      %v1576 = vpop.f32.mrf.mxu0
      %1577 = vmatprep.mubr.bf16.mxu0 0
      %1578 = vmatmul.mubr.bf16.gmra.mxu0 %v1492
      %v1579 = vpop.f32.mrf.mxu0
      %v1580 = vadd.f32 %v1407, %v1579
      %v1581 = vpop.f32.mrf.mxu0
      %v1582 = vpop.f32.mrf.mxu0
      %v1583 = vadd.f32 %v1410, %v1582
      %v1584 = vpop.f32.mrf.mxu0
      %1585 = vmatprep.mubr.bf16.mxu0 0
      %1586 = vmatmul.mubr.bf16.gmra.mxu0 %v1495
      %v1587 = vpop.f32.mrf.mxu0
      %v1588 = vadd.f32 %v1415, %v1587
      %v1589 = vpop.f32.mrf.mxu0
      %v1590 = vpop.f32.mrf.mxu0
      %v1591 = vadd.f32 %v1418, %v1590
      %v1592 = vpop.f32.mrf.mxu0
      %1593 = vdwg.mxu0
      %v1594 = vld [vmem:[#allocation2] sm:$0xe]
      %v1595 = vld [vmem:[#allocation2 + $0xc] sm:$0xe]
      %v1596 = vld [vmem:[#allocation2 + $0x18] sm:$0xe]
      %v1597 = vld [vmem:[#allocation2 + $0x24] sm:$0xe]
      %v1598 = vld [vmem:[#allocation2 + $0x30] sm:$0xe]
      %v1599 = vld [vmem:[#allocation2 + $0x3c] sm:$0xe]
      %v1600 = vld [vmem:[#allocation2 + $0x48] sm:$0xe]
      %v1601 = vld [vmem:[#allocation2 + $0x54] sm:$0xe]
      %vm1618 = vcmask 1042432
      %vm1619 = vcmask 1046532
      %vm1620 = vmor %vm1618, %vm1619
      %v1621 = vrot.slane %v1594, 5
      %v1622 = vrot.slane %v1621, 4
      %v1623 = vrot.slane %v1036, 5
      %v1624 = vsel %vm1620, %v1622, %v1623
      %v1625 = vrot.slane %v1623, 4
      %v1626 = vrot.slane %v1055, 5
      %v1627 = vsel %vm1620, %v1625, %v1626
      %v1628 = vrot.slane %v1595, 5
      %v1629 = vrot.slane %v1628, 4
      %v1630 = vrot.slane %v1038, 5
      %v1631 = vsel %vm1620, %v1629, %v1630
      %v1632 = vrot.slane %v1630, 4
      %v1633 = vrot.slane %v1056, 5
      %v1634 = vsel %vm1620, %v1632, %v1633
      %v1635 = vrot.slane %v1596, 5
      %v1636 = vrot.slane %v1635, 4
      %v1637 = vrot.slane %v1040, 5
      %v1638 = vsel %vm1620, %v1636, %v1637
      %v1639 = vrot.slane %v1637, 4
      %v1640 = vrot.slane %v1057, 5
      %v1641 = vsel %vm1620, %v1639, %v1640
      %v1642 = vrot.slane %v1597, 5
      %v1643 = vrot.slane %v1642, 4
      %v1644 = vrot.slane %v1042, 5
      %v1645 = vsel %vm1620, %v1643, %v1644
      %v1646 = vrot.slane %v1644, 4
      %v1647 = vrot.slane %v1058, 5
      %v1648 = vsel %vm1620, %v1646, %v1647
      %v1649 = vrot.slane %v1598, 5
      %v1650 = vrot.slane %v1649, 4
      %v1651 = vrot.slane %v1044, 5
      %v1652 = vsel %vm1620, %v1650, %v1651
      %v1653 = vrot.slane %v1651, 4
      %v1654 = vrot.slane %v1059, 5
      %v1655 = vsel %vm1620, %v1653, %v1654
      %v1656 = vrot.slane %v1599, 5
      %v1657 = vrot.slane %v1656, 4
      %v1658 = vrot.slane %v1046, 5
      %v1659 = vsel %vm1620, %v1657, %v1658
      %v1660 = vrot.slane %v1658, 4
      %v1661 = vrot.slane %v1060, 5
      %v1662 = vsel %vm1620, %v1660, %v1661
      %v1663 = vrot.slane %v1600, 5
      %v1664 = vrot.slane %v1663, 4
      %v1665 = vrot.slane %v1048, 5
      %v1666 = vsel %vm1620, %v1664, %v1665
      %v1667 = vrot.slane %v1665, 4
      %v1668 = vrot.slane %v1061, 5
      %v1669 = vsel %vm1620, %v1667, %v1668
      %v1670 = vrot.slane %v1601, 5
      %v1671 = vrot.slane %v1670, 4
      %v1672 = vrot.slane %v1050, 5
      %v1673 = vsel %vm1620, %v1671, %v1672
      %v1674 = vrot.slane %v1672, 4
      %v1675 = vrot.slane %v1062, 5
      %v1676 = vsel %vm1620, %v1674, %v1675
      %s1677 = scalar_lea.vmem %s6, 32
      %v1678 = vld [vmem:[%s1677] sm:$0xf]
      %v1679 = vld [vmem:[%s1677 + $0x4] sm:$0xf]
      %v1680 = vld [vmem:[%s1677 + $0x8] sm:$0xf]
      %v1681 = vld [vmem:[%s1677 + $0xc] sm:$0xf]
      %v1682 = vunpack.c.l.b16 %v1624
      %v1683 = vunpack.c.l.b16 %v1627
      %v1684 = vunpack.c.l.b16 %v1631
      %v1685 = vunpack.c.l.b16 %v1634
      %v1686 = vunpack.c.l.b16 %v1638
      %v1687 = vunpack.c.l.b16 %v1641
      %v1688 = vunpack.c.l.b16 %v1645
      %v1689 = vunpack.c.l.b16 %v1648
      %v1690 = vunpack.c.l.b16 %v1652
      %v1691 = vunpack.c.l.b16 %v1655
      %v1692 = vunpack.c.l.b16 %v1659
      %v1693 = vunpack.c.l.b16 %v1662
      %v1694 = vunpack.c.l.b16 %v1666
      %v1695 = vunpack.c.l.b16 %v1669
      %v1696 = vunpack.c.l.b16 %v1673
      %v1697 = vunpack.c.l.b16 %v1676
      %v1698 = vpack.c.b16 %v1683, %v1682
      %v1699 = vpack.c.b16 %v1685, %v1684
      %v1700 = vpack.c.b16 %v1687, %v1686
      %v1701 = vpack.c.b16 %v1689, %v1688
      %v1702 = vpack.c.b16 %v1691, %v1690
      %v1703 = vpack.c.b16 %v1693, %v1692
      %v1704 = vpack.c.b16 %v1695, %v1694
      %v1705 = vpack.c.b16 %v1697, %v1696
      %v1710 = vunpack.c.l.b16 %v1678
      %v1711 = vunpack.c.l.b16 %v1679
      %v1712 = vunpack.c.l.b16 %v1680
      %v1713 = vunpack.c.l.b16 %v1681
      %v1714 = vpack.c.b16 %v1711, %v1710
      %v1715 = vpack.c.b16 %v1713, %v1712
      %v1719 = vsel %vm1299, %v1698, 0
      %v1722 = vsel %vm1299, %v1699, 0
      %v1725 = vsel %vm1299, %v1700, 0
      %v1728 = vsel %vm1299, %v1701, 0
      %v1731 = vsel %vm1299, %v1702, 0
      %v1734 = vsel %vm1299, %v1703, 0
      %v1737 = vsel %vm1299, %v1704, 0
      %v1740 = vsel %vm1299, %v1705, 0
      %1742 = vmatprep.subr.bf16.mxu0 0
      %1743 = vmatpush1.bf16.msra.mxu0 0
      %1744 = vmatprep.subr.bf16.mxu0 0
      %1745 = vmatpush1.bf16.msra.mxu0 0
      %1746 = vmatprep.subr.bf16.mxu0 0
      %1747 = vmatpush1.bf16.msra.mxu0 0
      %1748 = vmatprep.subr.bf16.mxu0 0
      %1749 = vmatpush1.bf16.msra.mxu0 0
      %1750 = vmatprep.subr.bf16.mxu0 0
      %1751 = vmatpush1.bf16.msra.mxu0 0
      %1752 = vmatprep.subr.bf16.mxu0 0
      %1753 = vmatpush1.bf16.msra.mxu0 0
      %1754 = vmatprep.subr.bf16.mxu0 0
      %1755 = vmatpush1.bf16.msra.mxu0 %v1715
      %1756 = vmatprep.subr.bf16.mxu0 0
      %1757 = vmatpush1.bf16.msra.mxu0 %v1714
      %1758 = vmatprep.subr.bf16.mxu0 0
      %1759 = vmatpush2.bf16.msra.mxu0 0
      %1760 = vmatprep.subr.bf16.mxu0 0
      %1761 = vmatpush2.bf16.msra.mxu0 0
      %1762 = vmatprep.subr.bf16.mxu0 0
      %1763 = vmatpush2.bf16.msra.mxu0 0
      %1764 = vmatprep.subr.bf16.mxu0 0
      %1765 = vmatpush2.bf16.msra.mxu0 0
      %1766 = vmatprep.subr.bf16.mxu0 0
      %1767 = vmatpush2.bf16.msra.mxu0 0
      %1768 = vmatprep.subr.bf16.mxu0 0
      %1769 = vmatpush2.bf16.msra.mxu0 0
      %1770 = vmatprep.subr.bf16.mxu0 0
      %1771 = vmatpush2.bf16.msra.mxu0 0
      %1772 = vmatprep.subr.bf16.mxu0 0
      %1773 = vmatpush2.bf16.msra.mxu0 0
      %1774 = vmatprep.mubr.bf16.mxu0 0
      %1775 = vmatmul.mubr.bf16.gmra.mxu0 %v1719
      %v1776 = vpop.f32.mrf.mxu0
      %v1777 = vadd.f32 0.0, %v1776
      %v1778 = vpop.f32.mrf.mxu0
      %v1779 = vpop.f32.mrf.mxu0
      %v1780 = vadd.f32 0.0, %v1779
      %v1781 = vpop.f32.mrf.mxu0
      %1782 = vmatprep.mubr.bf16.mxu0 0
      %1783 = vmatmul.mubr.bf16.gmra.mxu0 %v1722
      %v1784 = vpop.f32.mrf.mxu0
      %v1785 = vadd.f32 0.0, %v1784
      %v1786 = vpop.f32.mrf.mxu0
      %v1787 = vpop.f32.mrf.mxu0
      %v1788 = vadd.f32 0.0, %v1787
      %v1789 = vpop.f32.mrf.mxu0
      %1790 = vmatprep.mubr.bf16.mxu0 0
      %1791 = vmatmul.mubr.bf16.gmra.mxu0 %v1725
      %v1792 = vpop.f32.mrf.mxu0
      %v1793 = vadd.f32 0.0, %v1792
      %v1794 = vpop.f32.mrf.mxu0
      %v1795 = vpop.f32.mrf.mxu0
      %v1796 = vadd.f32 0.0, %v1795
      %v1797 = vpop.f32.mrf.mxu0
      %1798 = vmatprep.mubr.bf16.mxu0 0
      %1799 = vmatmul.mubr.bf16.gmra.mxu0 %v1728
      %v1800 = vpop.f32.mrf.mxu0
      %v1801 = vadd.f32 0.0, %v1800
      %v1802 = vpop.f32.mrf.mxu0
      %v1803 = vpop.f32.mrf.mxu0
      %v1804 = vadd.f32 0.0, %v1803
      %v1805 = vpop.f32.mrf.mxu0
      %1806 = vmatprep.mubr.bf16.mxu0 0
      %1807 = vmatmul.mubr.bf16.gmra.mxu0 %v1731
      %v1808 = vpop.f32.mrf.mxu0
      %v1809 = vadd.f32 0.0, %v1808
      %v1810 = vpop.f32.mrf.mxu0
      %v1811 = vpop.f32.mrf.mxu0
      %v1812 = vadd.f32 0.0, %v1811
      %v1813 = vpop.f32.mrf.mxu0
      %1814 = vmatprep.mubr.bf16.mxu0 0
      %1815 = vmatmul.mubr.bf16.gmra.mxu0 %v1734
      %v1816 = vpop.f32.mrf.mxu0
      %v1817 = vadd.f32 0.0, %v1816
      %v1818 = vpop.f32.mrf.mxu0
      %v1819 = vpop.f32.mrf.mxu0
      %v1820 = vadd.f32 0.0, %v1819
      %v1821 = vpop.f32.mrf.mxu0
      %1822 = vmatprep.mubr.bf16.mxu0 0
      %1823 = vmatmul.mubr.bf16.gmra.mxu0 %v1737
      %v1824 = vpop.f32.mrf.mxu0
      %v1825 = vadd.f32 0.0, %v1824
      %v1826 = vpop.f32.mrf.mxu0
      %v1827 = vpop.f32.mrf.mxu0
      %v1828 = vadd.f32 0.0, %v1827
      %v1829 = vpop.f32.mrf.mxu0
      %1830 = vmatprep.mubr.bf16.mxu0 0
      %1831 = vmatmul.mubr.bf16.gmra.mxu0 %v1740
      %v1832 = vpop.f32.mrf.mxu0
      %v1833 = vadd.f32 0.0, %v1832
      %v1834 = vpop.f32.mrf.mxu0
      %v1835 = vpop.f32.mrf.mxu0
      %v1836 = vadd.f32 0.0, %v1835
      %v1837 = vpop.f32.mrf.mxu0
      %1838 = vdwg.mxu0
      %v1839 = vadd.f32 %v1532, %v1777
      %v1840 = vadd.f32 %v1535, %v1780
      %v1841 = vadd.f32 %v1540, %v1785
      %v1842 = vadd.f32 %v1543, %v1788
      %v1843 = vadd.f32 %v1548, %v1793
      %v1844 = vadd.f32 %v1551, %v1796
      %v1845 = vadd.f32 %v1556, %v1801
      %v1846 = vadd.f32 %v1559, %v1804
      %v1847 = vadd.f32 %v1564, %v1809
      %v1848 = vadd.f32 %v1567, %v1812
      %v1849 = vadd.f32 %v1572, %v1817
      %v1850 = vadd.f32 %v1575, %v1820
      %v1851 = vadd.f32 %v1580, %v1825
      %v1852 = vadd.f32 %v1583, %v1828
      %v1853 = vadd.f32 %v1588, %v1833
      %v1854 = vadd.f32 %v1591, %v1836
      %s1855 = scalar_lea.vmem [#allocation2], 12
      %v1856 = vld [vmem:[%s1855] sm:$0xf]
      %v1857 = vld [vmem:[%s1855 + $0x4] sm:$0xf]
      %v1858 = vld [vmem:[%s1855 + $0xc] sm:$0xf]
      %v1859 = vld [vmem:[%s1855 + $0x10] sm:$0xf]
      %v1860 = vld [vmem:[%s1855 + $0x18] sm:$0xf]
      %v1861 = vld [vmem:[%s1855 + $0x1c] sm:$0xf]
      %v1862 = vld [vmem:[%s1855 + $0x24] sm:$0xf]
      %v1863 = vld [vmem:[%s1855 + $0x28] sm:$0xf]
      %v1864 = vld [vmem:[%s1855 + $0x30] sm:$0xf]
      %v1865 = vld [vmem:[%s1855 + $0x34] sm:$0xf]
      %v1866 = vld [vmem:[%s1855 + $0x3c] sm:$0xf]
      %v1867 = vld [vmem:[%s1855 + $0x40] sm:$0xf]
      %v1868 = vld [vmem:[%s1855 + $0x48] sm:$0xf]
      %v1869 = vld [vmem:[%s1855 + $0x4c] sm:$0xf]
      %v1870 = vld [vmem:[%s1855 + $0x54] sm:$0xf]
      %v1871 = vld [vmem:[%s1855 + $0x58] sm:$0xf]
      %s1872 = scalar_lea.vmem %s6, 48
      %v1873 = vld [vmem:[%s1872] sm:$0xf]
      %v1874 = vld [vmem:[%s1872 + $0x4] sm:$0xf]
      %v1875 = vld [vmem:[%s1872 + $0x8] sm:$0xf]
      %v1876 = vld [vmem:[%s1872 + $0xc] sm:$0xf]
      %v1893 = vunpack.c.l.b16 %v1856
      %v1894 = vunpack.c.l.b16 %v1857
      %v1895 = vunpack.c.l.b16 %v1858
      %v1896 = vunpack.c.l.b16 %v1859
      %v1897 = vunpack.c.l.b16 %v1860
      %v1898 = vunpack.c.l.b16 %v1861
      %v1899 = vunpack.c.l.b16 %v1862
      %v1900 = vunpack.c.l.b16 %v1863
      %v1901 = vunpack.c.l.b16 %v1864
      %v1902 = vunpack.c.l.b16 %v1865
      %v1903 = vunpack.c.l.b16 %v1866
      %v1904 = vunpack.c.l.b16 %v1867
      %v1905 = vunpack.c.l.b16 %v1868
      %v1906 = vunpack.c.l.b16 %v1869
      %v1907 = vunpack.c.l.b16 %v1870
      %v1908 = vunpack.c.l.b16 %v1871
      %v1909 = vpack.c.b16 %v1894, %v1893
      %v1910 = vpack.c.b16 %v1896, %v1895
      %v1911 = vpack.c.b16 %v1898, %v1897
      %v1912 = vpack.c.b16 %v1900, %v1899
      %v1913 = vpack.c.b16 %v1902, %v1901
      %v1914 = vpack.c.b16 %v1904, %v1903
      %v1915 = vpack.c.b16 %v1906, %v1905
      %v1916 = vpack.c.b16 %v1908, %v1907
      %v1921 = vunpack.c.l.b16 %v1873
      %v1922 = vunpack.c.l.b16 %v1874
      %v1923 = vunpack.c.l.b16 %v1875
      %v1924 = vunpack.c.l.b16 %v1876
      %v1925 = vpack.c.b16 %v1922, %v1921
      %v1926 = vpack.c.b16 %v1924, %v1923
      %v1930 = vsel %vm1299, %v1909, 0
      %v1933 = vsel %vm1299, %v1910, 0
      %v1936 = vsel %vm1299, %v1911, 0
      %v1939 = vsel %vm1299, %v1912, 0
      %v1942 = vsel %vm1299, %v1913, 0
      %v1945 = vsel %vm1299, %v1914, 0
      %v1948 = vsel %vm1299, %v1915, 0
      %v1951 = vsel %vm1299, %v1916, 0
      %1953 = vmatprep.subr.bf16.mxu0 0
      %1954 = vmatpush1.bf16.msra.mxu0 0
      %1955 = vmatprep.subr.bf16.mxu0 0
      %1956 = vmatpush1.bf16.msra.mxu0 0
      %1957 = vmatprep.subr.bf16.mxu0 0
      %1958 = vmatpush1.bf16.msra.mxu0 0
      %1959 = vmatprep.subr.bf16.mxu0 0
      %1960 = vmatpush1.bf16.msra.mxu0 0
      %1961 = vmatprep.subr.bf16.mxu0 0
      %1962 = vmatpush1.bf16.msra.mxu0 0
      %1963 = vmatprep.subr.bf16.mxu0 0
      %1964 = vmatpush1.bf16.msra.mxu0 0
      %1965 = vmatprep.subr.bf16.mxu0 0
      %1966 = vmatpush1.bf16.msra.mxu0 %v1926
      %1967 = vmatprep.subr.bf16.mxu0 0
      %1968 = vmatpush1.bf16.msra.mxu0 %v1925
      %1969 = vmatprep.subr.bf16.mxu0 0
      %1970 = vmatpush2.bf16.msra.mxu0 0
      %1971 = vmatprep.subr.bf16.mxu0 0
      %1972 = vmatpush2.bf16.msra.mxu0 0
      %1973 = vmatprep.subr.bf16.mxu0 0
      %1974 = vmatpush2.bf16.msra.mxu0 0
      %1975 = vmatprep.subr.bf16.mxu0 0
      %1976 = vmatpush2.bf16.msra.mxu0 0
      %1977 = vmatprep.subr.bf16.mxu0 0
      %1978 = vmatpush2.bf16.msra.mxu0 0
      %1979 = vmatprep.subr.bf16.mxu0 0
      %1980 = vmatpush2.bf16.msra.mxu0 0
      %1981 = vmatprep.subr.bf16.mxu0 0
      %1982 = vmatpush2.bf16.msra.mxu0 0
      %1983 = vmatprep.subr.bf16.mxu0 0
      %1984 = vmatpush2.bf16.msra.mxu0 0
      %1985 = vmatprep.mubr.bf16.mxu0 0
      %1986 = vmatmul.mubr.bf16.gmra.mxu0 %v1930
      %v1987 = vpop.f32.mrf.mxu0
      %v1988 = vadd.f32 0.0, %v1987
      %v1989 = vpop.f32.mrf.mxu0
      %v1990 = vpop.f32.mrf.mxu0
      %v1991 = vadd.f32 0.0, %v1990
      %v1992 = vpop.f32.mrf.mxu0
      %1993 = vmatprep.mubr.bf16.mxu0 0
      %1994 = vmatmul.mubr.bf16.gmra.mxu0 %v1933
      %v1995 = vpop.f32.mrf.mxu0
      %v1996 = vadd.f32 0.0, %v1995
      %v1997 = vpop.f32.mrf.mxu0
      %v1998 = vpop.f32.mrf.mxu0
      %v1999 = vadd.f32 0.0, %v1998
      %v2000 = vpop.f32.mrf.mxu0
      %2001 = vmatprep.mubr.bf16.mxu0 0
      %2002 = vmatmul.mubr.bf16.gmra.mxu0 %v1936
      %v2003 = vpop.f32.mrf.mxu0
      %v2004 = vadd.f32 0.0, %v2003
      %v2005 = vpop.f32.mrf.mxu0
      %v2006 = vpop.f32.mrf.mxu0
      %v2007 = vadd.f32 0.0, %v2006
      %v2008 = vpop.f32.mrf.mxu0
      %2009 = vmatprep.mubr.bf16.mxu0 0
      %2010 = vmatmul.mubr.bf16.gmra.mxu0 %v1939
      %v2011 = vpop.f32.mrf.mxu0
      %v2012 = vadd.f32 0.0, %v2011
      %v2013 = vpop.f32.mrf.mxu0
      %v2014 = vpop.f32.mrf.mxu0
      %v2015 = vadd.f32 0.0, %v2014
      %v2016 = vpop.f32.mrf.mxu0
      %2017 = vmatprep.mubr.bf16.mxu0 0
      %2018 = vmatmul.mubr.bf16.gmra.mxu0 %v1942
      %v2019 = vpop.f32.mrf.mxu0
      %v2020 = vadd.f32 0.0, %v2019
      %v2021 = vpop.f32.mrf.mxu0
      %v2022 = vpop.f32.mrf.mxu0
      %v2023 = vadd.f32 0.0, %v2022
      %v2024 = vpop.f32.mrf.mxu0
      %2025 = vmatprep.mubr.bf16.mxu0 0
      %2026 = vmatmul.mubr.bf16.gmra.mxu0 %v1945
      %v2027 = vpop.f32.mrf.mxu0
      %v2028 = vadd.f32 0.0, %v2027
      %v2029 = vpop.f32.mrf.mxu0
      %v2030 = vpop.f32.mrf.mxu0
      %v2031 = vadd.f32 0.0, %v2030
      %v2032 = vpop.f32.mrf.mxu0
      %2033 = vmatprep.mubr.bf16.mxu0 0
      %2034 = vmatmul.mubr.bf16.gmra.mxu0 %v1948
      %v2035 = vpop.f32.mrf.mxu0
      %v2036 = vadd.f32 0.0, %v2035
      %v2037 = vpop.f32.mrf.mxu0
      %v2038 = vpop.f32.mrf.mxu0
      %v2039 = vadd.f32 0.0, %v2038
      %v2040 = vpop.f32.mrf.mxu0
      %2041 = vmatprep.mubr.bf16.mxu0 0
      %2042 = vmatmul.mubr.bf16.gmra.mxu0 %v1951
      %v2043 = vpop.f32.mrf.mxu0
      %v2044 = vadd.f32 0.0, %v2043
      %v2045 = vpop.f32.mrf.mxu0
      %v2046 = vpop.f32.mrf.mxu0
      %v2047 = vadd.f32 0.0, %v2046
      %v2048 = vpop.f32.mrf.mxu0
      %2049 = vdwg.mxu0
      %v2050 = vadd.f32 %v1839, %v1988
      %v2051 = vadd.f32 %v1840, %v1991
      %v2052 = vadd.f32 %v1841, %v1996
      %v2053 = vadd.f32 %v1842, %v1999
      %v2054 = vadd.f32 %v1843, %v2004
      %v2055 = vadd.f32 %v1844, %v2007
      %v2056 = vadd.f32 %v1845, %v2012
      %v2057 = vadd.f32 %v1846, %v2015
      %v2058 = vadd.f32 %v1847, %v2020
      %v2059 = vadd.f32 %v1848, %v2023
      %v2060 = vadd.f32 %v1849, %v2028
      %v2061 = vadd.f32 %v1850, %v2031
      %v2062 = vadd.f32 %v1851, %v2036
      %v2063 = vadd.f32 %v1852, %v2039
      %v2064 = vadd.f32 %v1853, %v2044
      %v2065 = vadd.f32 %v1854, %v2047
      %v2066 = vld [vmem:[%s1855] sm:$0xf]
      %v2067 = vld [vmem:[%s1855 + $0x4] sm:$0xf]
      %v2068 = vld [vmem:[%s1855 + $0x8] sm:$0x1]
      %v2069 = vld [vmem:[%s1855 + $0xc] sm:$0xf]
      %v2070 = vld [vmem:[%s1855 + $0x10] sm:$0xf]
      %v2071 = vld [vmem:[%s1855 + $0x14] sm:$0x1]
      %v2072 = vld [vmem:[%s1855 + $0x18] sm:$0xf]
      %v2073 = vld [vmem:[%s1855 + $0x1c] sm:$0xf]
      %v2074 = vld [vmem:[%s1855 + $0x20] sm:$0x1]
      %v2075 = vld [vmem:[%s1855 + $0x24] sm:$0xf]
      %v2076 = vld [vmem:[%s1855 + $0x28] sm:$0xf]
      %v2077 = vld [vmem:[%s1855 + $0x2c] sm:$0x1]
      %v2078 = vld [vmem:[%s1855 + $0x30] sm:$0xf]
      %v2079 = vld [vmem:[%s1855 + $0x34] sm:$0xf]
      %v2080 = vld [vmem:[%s1855 + $0x38] sm:$0x1]
      %v2081 = vld [vmem:[%s1855 + $0x3c] sm:$0xf]
      %v2082 = vld [vmem:[%s1855 + $0x40] sm:$0xf]
      %v2083 = vld [vmem:[%s1855 + $0x44] sm:$0x1]
      %v2084 = vld [vmem:[%s1855 + $0x48] sm:$0xf]
      %v2085 = vld [vmem:[%s1855 + $0x4c] sm:$0xf]
      %v2086 = vld [vmem:[%s1855 + $0x50] sm:$0x1]
      %v2087 = vld [vmem:[%s1855 + $0x54] sm:$0xf]
      %v2088 = vld [vmem:[%s1855 + $0x58] sm:$0xf]
      %v2089 = vld [vmem:[%s1855 + $0x5c] sm:$0x1]
      %v2091 = vshrl.u32 %v2066, 16
      %v2093 = vrot.slane %v2091, 4
      %v2094 = vshll.u32 %v2066, 16
      %v2096 = vrot.slane %v2094, 5
      %v2097 = vor.u32 %v2093, %v2096
      %v2098 = vrot.slane %v2097, 4
      %v2100 = vshll.u32 %v2067, 16
      %v2102 = vrot.slane %v2100, 5
      %v2103 = vsel %vm1065, %v2098, %v2102
      %v2104 = vshrl.u32 %v2067, 16
      %v2106 = vrot.slane %v2104, 4
      %v2107 = vor.u32 %v2106, %v2102
      %v2108 = vrot.slane %v2107, 4
      %v2110 = vshll.u32 %v2068, 16
      %v2112 = vrot.slane %v2110, 5
      %v2113 = vsel %vm1065, %v2108, %v2112
      %v2115 = vshrl.u32 %v2069, 16
      %v2117 = vrot.slane %v2115, 4
      %v2118 = vshll.u32 %v2069, 16
      %v2120 = vrot.slane %v2118, 5
      %v2121 = vor.u32 %v2117, %v2120
      %v2122 = vrot.slane %v2121, 4
      %v2124 = vshll.u32 %v2070, 16
      %v2126 = vrot.slane %v2124, 5
      %v2127 = vsel %vm1065, %v2122, %v2126
      %v2128 = vshrl.u32 %v2070, 16
      %v2130 = vrot.slane %v2128, 4
      %v2131 = vor.u32 %v2130, %v2126
      %v2132 = vrot.slane %v2131, 4
      %v2134 = vshll.u32 %v2071, 16
      %v2136 = vrot.slane %v2134, 5
      %v2137 = vsel %vm1065, %v2132, %v2136
      %v2139 = vshrl.u32 %v2072, 16
      %v2141 = vrot.slane %v2139, 4
      %v2142 = vshll.u32 %v2072, 16
      %v2144 = vrot.slane %v2142, 5
      %v2145 = vor.u32 %v2141, %v2144
      %v2146 = vrot.slane %v2145, 4
      %v2148 = vshll.u32 %v2073, 16
      %v2150 = vrot.slane %v2148, 5
      %v2151 = vsel %vm1065, %v2146, %v2150
      %v2152 = vshrl.u32 %v2073, 16
      %v2154 = vrot.slane %v2152, 4
      %v2155 = vor.u32 %v2154, %v2150
      %v2156 = vrot.slane %v2155, 4
      %v2158 = vshll.u32 %v2074, 16
      %v2160 = vrot.slane %v2158, 5
      %v2161 = vsel %vm1065, %v2156, %v2160
      %v2163 = vshrl.u32 %v2075, 16
      %v2165 = vrot.slane %v2163, 4
      %v2166 = vshll.u32 %v2075, 16
      %v2168 = vrot.slane %v2166, 5
      %v2169 = vor.u32 %v2165, %v2168
      %v2170 = vrot.slane %v2169, 4
      %v2172 = vshll.u32 %v2076, 16
      %v2174 = vrot.slane %v2172, 5
      %v2175 = vsel %vm1065, %v2170, %v2174
      %v2176 = vshrl.u32 %v2076, 16
      %v2178 = vrot.slane %v2176, 4
      %v2179 = vor.u32 %v2178, %v2174
      %v2180 = vrot.slane %v2179, 4
      %v2182 = vshll.u32 %v2077, 16
      %v2184 = vrot.slane %v2182, 5
      %v2185 = vsel %vm1065, %v2180, %v2184
      %v2187 = vshrl.u32 %v2078, 16
      %v2189 = vrot.slane %v2187, 4
      %v2190 = vshll.u32 %v2078, 16
      %v2192 = vrot.slane %v2190, 5
      %v2193 = vor.u32 %v2189, %v2192
      %v2194 = vrot.slane %v2193, 4
      %v2196 = vshll.u32 %v2079, 16
      %v2198 = vrot.slane %v2196, 5
      %v2199 = vsel %vm1065, %v2194, %v2198
      %v2200 = vshrl.u32 %v2079, 16
      %v2202 = vrot.slane %v2200, 4
      %v2203 = vor.u32 %v2202, %v2198
      %v2204 = vrot.slane %v2203, 4
      %v2206 = vshll.u32 %v2080, 16
      %v2208 = vrot.slane %v2206, 5
      %v2209 = vsel %vm1065, %v2204, %v2208
      %v2211 = vshrl.u32 %v2081, 16
      %v2213 = vrot.slane %v2211, 4
      %v2214 = vshll.u32 %v2081, 16
      %v2216 = vrot.slane %v2214, 5
      %v2217 = vor.u32 %v2213, %v2216
      %v2218 = vrot.slane %v2217, 4
      %v2220 = vshll.u32 %v2082, 16
      %v2222 = vrot.slane %v2220, 5
      %v2223 = vsel %vm1065, %v2218, %v2222
      %v2224 = vshrl.u32 %v2082, 16
      %v2226 = vrot.slane %v2224, 4
      %v2227 = vor.u32 %v2226, %v2222
      %v2228 = vrot.slane %v2227, 4
      %v2230 = vshll.u32 %v2083, 16
      %v2232 = vrot.slane %v2230, 5
      %v2233 = vsel %vm1065, %v2228, %v2232
      %v2235 = vshrl.u32 %v2084, 16
      %v2237 = vrot.slane %v2235, 4
      %v2238 = vshll.u32 %v2084, 16
      %v2240 = vrot.slane %v2238, 5
      %v2241 = vor.u32 %v2237, %v2240
      %v2242 = vrot.slane %v2241, 4
      %v2244 = vshll.u32 %v2085, 16
      %v2246 = vrot.slane %v2244, 5
      %v2247 = vsel %vm1065, %v2242, %v2246
      %v2248 = vshrl.u32 %v2085, 16
      %v2250 = vrot.slane %v2248, 4
      %v2251 = vor.u32 %v2250, %v2246
      %v2252 = vrot.slane %v2251, 4
      %v2254 = vshll.u32 %v2086, 16
      %v2256 = vrot.slane %v2254, 5
      %v2257 = vsel %vm1065, %v2252, %v2256
      %v2259 = vshrl.u32 %v2087, 16
      %v2261 = vrot.slane %v2259, 4
      %v2262 = vshll.u32 %v2087, 16
      %v2264 = vrot.slane %v2262, 5
      %v2265 = vor.u32 %v2261, %v2264
      %v2266 = vrot.slane %v2265, 4
      %v2268 = vshll.u32 %v2088, 16
      %v2270 = vrot.slane %v2268, 5
      %v2271 = vsel %vm1065, %v2266, %v2270
      %v2272 = vshrl.u32 %v2088, 16
      %v2274 = vrot.slane %v2272, 4
      %v2275 = vor.u32 %v2274, %v2270
      %v2276 = vrot.slane %v2275, 4
      %v2278 = vshll.u32 %v2089, 16
      %v2280 = vrot.slane %v2278, 5
      %v2281 = vsel %vm1065, %v2276, %v2280
      %s2282 = scalar_lea.vmem %s6, 64
      %v2283 = vld [vmem:[%s2282] sm:$0xf]
      %v2284 = vld [vmem:[%s2282 + $0x4] sm:$0xf]
      %v2285 = vld [vmem:[%s2282 + $0x8] sm:$0xf]
      %v2286 = vld [vmem:[%s2282 + $0xc] sm:$0xf]
      %v2287 = vunpack.c.l.b16 %v2103
      %v2288 = vunpack.c.l.b16 %v2113
      %v2289 = vunpack.c.l.b16 %v2127
      %v2290 = vunpack.c.l.b16 %v2137
      %v2291 = vunpack.c.l.b16 %v2151
      %v2292 = vunpack.c.l.b16 %v2161
      %v2293 = vunpack.c.l.b16 %v2175
      %v2294 = vunpack.c.l.b16 %v2185
      %v2295 = vunpack.c.l.b16 %v2199
      %v2296 = vunpack.c.l.b16 %v2209
      %v2297 = vunpack.c.l.b16 %v2223
      %v2298 = vunpack.c.l.b16 %v2233
      %v2299 = vunpack.c.l.b16 %v2247
      %v2300 = vunpack.c.l.b16 %v2257
      %v2301 = vunpack.c.l.b16 %v2271
      %v2302 = vunpack.c.l.b16 %v2281
      %v2303 = vpack.c.b16 %v2288, %v2287
      %v2304 = vpack.c.b16 %v2290, %v2289
      %v2305 = vpack.c.b16 %v2292, %v2291
      %v2306 = vpack.c.b16 %v2294, %v2293
      %v2307 = vpack.c.b16 %v2296, %v2295
      %v2308 = vpack.c.b16 %v2298, %v2297
      %v2309 = vpack.c.b16 %v2300, %v2299
      %v2310 = vpack.c.b16 %v2302, %v2301
      %v2315 = vunpack.c.l.b16 %v2283
      %v2316 = vunpack.c.l.b16 %v2284
      %v2317 = vunpack.c.l.b16 %v2285
      %v2318 = vunpack.c.l.b16 %v2286
      %v2319 = vpack.c.b16 %v2316, %v2315
      %v2320 = vpack.c.b16 %v2318, %v2317
      %v2324 = vsel %vm1299, %v2303, 0
      %v2327 = vsel %vm1299, %v2304, 0
      %v2330 = vsel %vm1299, %v2305, 0
      %v2333 = vsel %vm1299, %v2306, 0
      %v2336 = vsel %vm1299, %v2307, 0
      %v2339 = vsel %vm1299, %v2308, 0
      %v2342 = vsel %vm1299, %v2309, 0
      %v2345 = vsel %vm1299, %v2310, 0
      %2347 = vmatprep.subr.bf16.mxu0 0
      %2348 = vmatpush1.bf16.msra.mxu0 0
      %2349 = vmatprep.subr.bf16.mxu0 0
      %2350 = vmatpush1.bf16.msra.mxu0 0
      %2351 = vmatprep.subr.bf16.mxu0 0
      %2352 = vmatpush1.bf16.msra.mxu0 0
      %2353 = vmatprep.subr.bf16.mxu0 0
      %2354 = vmatpush1.bf16.msra.mxu0 0
      %2355 = vmatprep.subr.bf16.mxu0 0
      %2356 = vmatpush1.bf16.msra.mxu0 0
      %2357 = vmatprep.subr.bf16.mxu0 0
      %2358 = vmatpush1.bf16.msra.mxu0 0
      %2359 = vmatprep.subr.bf16.mxu0 0
      %2360 = vmatpush1.bf16.msra.mxu0 %v2320
      %2361 = vmatprep.subr.bf16.mxu0 0
      %2362 = vmatpush1.bf16.msra.mxu0 %v2319
      %2363 = vmatprep.subr.bf16.mxu0 0
      %2364 = vmatpush2.bf16.msra.mxu0 0
      %2365 = vmatprep.subr.bf16.mxu0 0
      %2366 = vmatpush2.bf16.msra.mxu0 0
      %2367 = vmatprep.subr.bf16.mxu0 0
      %2368 = vmatpush2.bf16.msra.mxu0 0
      %2369 = vmatprep.subr.bf16.mxu0 0
      %2370 = vmatpush2.bf16.msra.mxu0 0
      %2371 = vmatprep.subr.bf16.mxu0 0
      %2372 = vmatpush2.bf16.msra.mxu0 0
      %2373 = vmatprep.subr.bf16.mxu0 0
      %2374 = vmatpush2.bf16.msra.mxu0 0
      %2375 = vmatprep.subr.bf16.mxu0 0
      %2376 = vmatpush2.bf16.msra.mxu0 0
      %2377 = vmatprep.subr.bf16.mxu0 0
      %2378 = vmatpush2.bf16.msra.mxu0 0
      %2379 = vmatprep.mubr.bf16.mxu0 0
      %2380 = vmatmul.mubr.bf16.gmra.mxu0 %v2324
      %v2381 = vpop.f32.mrf.mxu0
      %v2382 = vadd.f32 0.0, %v2381
      %v2383 = vpop.f32.mrf.mxu0
      %v2384 = vpop.f32.mrf.mxu0
      %v2385 = vadd.f32 0.0, %v2384
      %v2386 = vpop.f32.mrf.mxu0
      %2387 = vmatprep.mubr.bf16.mxu0 0
      %2388 = vmatmul.mubr.bf16.gmra.mxu0 %v2327
      %v2389 = vpop.f32.mrf.mxu0
      %v2390 = vadd.f32 0.0, %v2389
      %v2391 = vpop.f32.mrf.mxu0
      %v2392 = vpop.f32.mrf.mxu0
      %v2393 = vadd.f32 0.0, %v2392
      %v2394 = vpop.f32.mrf.mxu0
      %2395 = vmatprep.mubr.bf16.mxu0 0
      %2396 = vmatmul.mubr.bf16.gmra.mxu0 %v2330
      %v2397 = vpop.f32.mrf.mxu0
      %v2398 = vadd.f32 0.0, %v2397
      %v2399 = vpop.f32.mrf.mxu0
      %v2400 = vpop.f32.mrf.mxu0
      %v2401 = vadd.f32 0.0, %v2400
      %v2402 = vpop.f32.mrf.mxu0
      %2403 = vmatprep.mubr.bf16.mxu0 0
      %2404 = vmatmul.mubr.bf16.gmra.mxu0 %v2333
      %v2405 = vpop.f32.mrf.mxu0
      %v2406 = vadd.f32 0.0, %v2405
      %v2407 = vpop.f32.mrf.mxu0
      %v2408 = vpop.f32.mrf.mxu0
      %v2409 = vadd.f32 0.0, %v2408
      %v2410 = vpop.f32.mrf.mxu0
      %2411 = vmatprep.mubr.bf16.mxu0 0
      %2412 = vmatmul.mubr.bf16.gmra.mxu0 %v2336
      %v2413 = vpop.f32.mrf.mxu0
      %v2414 = vadd.f32 0.0, %v2413
      %v2415 = vpop.f32.mrf.mxu0
      %v2416 = vpop.f32.mrf.mxu0
      %v2417 = vadd.f32 0.0, %v2416
      %v2418 = vpop.f32.mrf.mxu0
      %2419 = vmatprep.mubr.bf16.mxu0 0
      %2420 = vmatmul.mubr.bf16.gmra.mxu0 %v2339
      %v2421 = vpop.f32.mrf.mxu0
      %v2422 = vadd.f32 0.0, %v2421
      %v2423 = vpop.f32.mrf.mxu0
      %v2424 = vpop.f32.mrf.mxu0
      %v2425 = vadd.f32 0.0, %v2424
      %v2426 = vpop.f32.mrf.mxu0
      %2427 = vmatprep.mubr.bf16.mxu0 0
      %2428 = vmatmul.mubr.bf16.gmra.mxu0 %v2342
      %v2429 = vpop.f32.mrf.mxu0
      %v2430 = vadd.f32 0.0, %v2429
      %v2431 = vpop.f32.mrf.mxu0
      %v2432 = vpop.f32.mrf.mxu0
      %v2433 = vadd.f32 0.0, %v2432
      %v2434 = vpop.f32.mrf.mxu0
      %2435 = vmatprep.mubr.bf16.mxu0 0
      %2436 = vmatmul.mubr.bf16.gmra.mxu0 %v2345
      %v2437 = vpop.f32.mrf.mxu0
      %v2438 = vadd.f32 0.0, %v2437
      %v2439 = vpop.f32.mrf.mxu0
      %v2440 = vpop.f32.mrf.mxu0
      %v2441 = vadd.f32 0.0, %v2440
      %v2442 = vpop.f32.mrf.mxu0
      %2443 = vdwg.mxu0
      %v2444 = vadd.f32 %v2050, %v2382
      %v2445 = vadd.f32 %v2051, %v2385
      %v2446 = vadd.f32 %v2052, %v2390
      %v2447 = vadd.f32 %v2053, %v2393
      %v2448 = vadd.f32 %v2054, %v2398
      %v2449 = vadd.f32 %v2055, %v2401
      %v2450 = vadd.f32 %v2056, %v2406
      %v2451 = vadd.f32 %v2057, %v2409
      %v2452 = vadd.f32 %v2058, %v2414
      %v2453 = vadd.f32 %v2059, %v2417
      %v2454 = vadd.f32 %v2060, %v2422
      %v2455 = vadd.f32 %v2061, %v2425
      %v2456 = vadd.f32 %v2062, %v2430
      %v2457 = vadd.f32 %v2063, %v2433
      %v2458 = vadd.f32 %v2064, %v2438
      %v2459 = vadd.f32 %v2065, %v2441
      %v2460 = vld [vmem:[%s1855] sm:$0xe]
      %v2461 = vld [vmem:[%s1855 + $0xc] sm:$0xe]
      %v2462 = vld [vmem:[%s1855 + $0x18] sm:$0xe]
      %v2463 = vld [vmem:[%s1855 + $0x24] sm:$0xe]
      %v2464 = vld [vmem:[%s1855 + $0x30] sm:$0xe]
      %v2465 = vld [vmem:[%s1855 + $0x3c] sm:$0xe]
      %v2466 = vld [vmem:[%s1855 + $0x48] sm:$0xe]
      %v2467 = vld [vmem:[%s1855 + $0x54] sm:$0xe]
      %v2492 = vrot.slane %v2460, 5
      %v2493 = vrot.slane %v2492, 4
      %v2494 = vrot.slane %v2067, 5
      %v2495 = vsel %vm1620, %v2493, %v2494
      %v2496 = vrot.slane %v2494, 4
      %v2497 = vrot.slane %v2068, 5
      %v2498 = vsel %vm1620, %v2496, %v2497
      %v2499 = vrot.slane %v2461, 5
      %v2500 = vrot.slane %v2499, 4
      %v2501 = vrot.slane %v2070, 5
      %v2502 = vsel %vm1620, %v2500, %v2501
      %v2503 = vrot.slane %v2501, 4
      %v2504 = vrot.slane %v2071, 5
      %v2505 = vsel %vm1620, %v2503, %v2504
      %v2506 = vrot.slane %v2462, 5
      %v2507 = vrot.slane %v2506, 4
      %v2508 = vrot.slane %v2073, 5
      %v2509 = vsel %vm1620, %v2507, %v2508
      %v2510 = vrot.slane %v2508, 4
      %v2511 = vrot.slane %v2074, 5
      %v2512 = vsel %vm1620, %v2510, %v2511
      %v2513 = vrot.slane %v2463, 5
      %v2514 = vrot.slane %v2513, 4
      %v2515 = vrot.slane %v2076, 5
      %v2516 = vsel %vm1620, %v2514, %v2515
      %v2517 = vrot.slane %v2515, 4
      %v2518 = vrot.slane %v2077, 5
      %v2519 = vsel %vm1620, %v2517, %v2518
      %v2520 = vrot.slane %v2464, 5
      %v2521 = vrot.slane %v2520, 4
      %v2522 = vrot.slane %v2079, 5
      %v2523 = vsel %vm1620, %v2521, %v2522
      %v2524 = vrot.slane %v2522, 4
      %v2525 = vrot.slane %v2080, 5
      %v2526 = vsel %vm1620, %v2524, %v2525
      %v2527 = vrot.slane %v2465, 5
      %v2528 = vrot.slane %v2527, 4
      %v2529 = vrot.slane %v2082, 5
      %v2530 = vsel %vm1620, %v2528, %v2529
      %v2531 = vrot.slane %v2529, 4
      %v2532 = vrot.slane %v2083, 5
      %v2533 = vsel %vm1620, %v2531, %v2532
      %v2534 = vrot.slane %v2466, 5
      %v2535 = vrot.slane %v2534, 4
      %v2536 = vrot.slane %v2085, 5
      %v2537 = vsel %vm1620, %v2535, %v2536
      %v2538 = vrot.slane %v2536, 4
      %v2539 = vrot.slane %v2086, 5
      %v2540 = vsel %vm1620, %v2538, %v2539
      %v2541 = vrot.slane %v2467, 5
      %v2542 = vrot.slane %v2541, 4
      %v2543 = vrot.slane %v2088, 5
      %v2544 = vsel %vm1620, %v2542, %v2543
      %v2545 = vrot.slane %v2543, 4
      %v2546 = vrot.slane %v2089, 5
      %v2547 = vsel %vm1620, %v2545, %v2546
      %s2548 = scalar_lea.vmem %s6, 80
      %v2549 = vld [vmem:[%s2548] sm:$0xf]
      %v2550 = vld [vmem:[%s2548 + $0x4] sm:$0xf]
      %v2551 = vld [vmem:[%s2548 + $0x8] sm:$0xf]
      %v2552 = vld [vmem:[%s2548 + $0xc] sm:$0xf]
      %v2553 = vunpack.c.l.b16 %v2495
      %v2554 = vunpack.c.l.b16 %v2498
      %v2555 = vunpack.c.l.b16 %v2502
      %v2556 = vunpack.c.l.b16 %v2505
      %v2557 = vunpack.c.l.b16 %v2509
      %v2558 = vunpack.c.l.b16 %v2512
      %v2559 = vunpack.c.l.b16 %v2516
      %v2560 = vunpack.c.l.b16 %v2519
      %v2561 = vunpack.c.l.b16 %v2523
      %v2562 = vunpack.c.l.b16 %v2526
      %v2563 = vunpack.c.l.b16 %v2530
      %v2564 = vunpack.c.l.b16 %v2533
      %v2565 = vunpack.c.l.b16 %v2537
      %v2566 = vunpack.c.l.b16 %v2540
      %v2567 = vunpack.c.l.b16 %v2544
      %v2568 = vunpack.c.l.b16 %v2547
      %v2569 = vpack.c.b16 %v2554, %v2553
      %v2570 = vpack.c.b16 %v2556, %v2555
      %v2571 = vpack.c.b16 %v2558, %v2557
      %v2572 = vpack.c.b16 %v2560, %v2559
      %v2573 = vpack.c.b16 %v2562, %v2561
      %v2574 = vpack.c.b16 %v2564, %v2563
      %v2575 = vpack.c.b16 %v2566, %v2565
      %v2576 = vpack.c.b16 %v2568, %v2567
      %v2581 = vunpack.c.l.b16 %v2549
      %v2582 = vunpack.c.l.b16 %v2550
      %v2583 = vunpack.c.l.b16 %v2551
      %v2584 = vunpack.c.l.b16 %v2552
      %v2585 = vpack.c.b16 %v2582, %v2581
      %v2586 = vpack.c.b16 %v2584, %v2583
      %v2590 = vsel %vm1299, %v2569, 0
      %v2593 = vsel %vm1299, %v2570, 0
      %v2596 = vsel %vm1299, %v2571, 0
      %v2599 = vsel %vm1299, %v2572, 0
      %v2602 = vsel %vm1299, %v2573, 0
      %v2605 = vsel %vm1299, %v2574, 0
      %v2608 = vsel %vm1299, %v2575, 0
      %v2611 = vsel %vm1299, %v2576, 0
      %2613 = vmatprep.subr.bf16.mxu0 0
      %2614 = vmatpush1.bf16.msra.mxu0 0
      %2615 = vmatprep.subr.bf16.mxu0 0
      %2616 = vmatpush1.bf16.msra.mxu0 0
      %2617 = vmatprep.subr.bf16.mxu0 0
      %2618 = vmatpush1.bf16.msra.mxu0 0
      %2619 = vmatprep.subr.bf16.mxu0 0
      %2620 = vmatpush1.bf16.msra.mxu0 0
      %2621 = vmatprep.subr.bf16.mxu0 0
      %2622 = vmatpush1.bf16.msra.mxu0 0
      %2623 = vmatprep.subr.bf16.mxu0 0
      %2624 = vmatpush1.bf16.msra.mxu0 0
      %2625 = vmatprep.subr.bf16.mxu0 0
      %2626 = vmatpush1.bf16.msra.mxu0 %v2586
      %2627 = vmatprep.subr.bf16.mxu0 0
      %2628 = vmatpush1.bf16.msra.mxu0 %v2585
      %2629 = vmatprep.subr.bf16.mxu0 0
      %2630 = vmatpush2.bf16.msra.mxu0 0
      %2631 = vmatprep.subr.bf16.mxu0 0
      %2632 = vmatpush2.bf16.msra.mxu0 0
      %2633 = vmatprep.subr.bf16.mxu0 0
      %2634 = vmatpush2.bf16.msra.mxu0 0
      %2635 = vmatprep.subr.bf16.mxu0 0
      %2636 = vmatpush2.bf16.msra.mxu0 0
      %2637 = vmatprep.subr.bf16.mxu0 0
      %2638 = vmatpush2.bf16.msra.mxu0 0
      %2639 = vmatprep.subr.bf16.mxu0 0
      %2640 = vmatpush2.bf16.msra.mxu0 0
      %2641 = vmatprep.subr.bf16.mxu0 0
      %2642 = vmatpush2.bf16.msra.mxu0 0
      %2643 = vmatprep.subr.bf16.mxu0 0
      %2644 = vmatpush2.bf16.msra.mxu0 0
      %2645 = vmatprep.mubr.bf16.mxu0 0
      %2646 = vmatmul.mubr.bf16.gmra.mxu0 %v2590
      %v2647 = vpop.f32.mrf.mxu0
      %v2648 = vadd.f32 0.0, %v2647
      %v2649 = vpop.f32.mrf.mxu0
      %v2650 = vpop.f32.mrf.mxu0
      %v2651 = vadd.f32 0.0, %v2650
      %v2652 = vpop.f32.mrf.mxu0
      %2653 = vmatprep.mubr.bf16.mxu0 0
      %2654 = vmatmul.mubr.bf16.gmra.mxu0 %v2593
      %v2655 = vpop.f32.mrf.mxu0
      %v2656 = vadd.f32 0.0, %v2655
      %v2657 = vpop.f32.mrf.mxu0
      %v2658 = vpop.f32.mrf.mxu0
      %v2659 = vadd.f32 0.0, %v2658
      %v2660 = vpop.f32.mrf.mxu0
      %2661 = vmatprep.mubr.bf16.mxu0 0
      %2662 = vmatmul.mubr.bf16.gmra.mxu0 %v2596
      %v2663 = vpop.f32.mrf.mxu0
      %v2664 = vadd.f32 0.0, %v2663
      %v2665 = vpop.f32.mrf.mxu0
      %v2666 = vpop.f32.mrf.mxu0
      %v2667 = vadd.f32 0.0, %v2666
      %v2668 = vpop.f32.mrf.mxu0
      %2669 = vmatprep.mubr.bf16.mxu0 0
      %2670 = vmatmul.mubr.bf16.gmra.mxu0 %v2599
      %v2671 = vpop.f32.mrf.mxu0
      %v2672 = vadd.f32 0.0, %v2671
      %v2673 = vpop.f32.mrf.mxu0
      %v2674 = vpop.f32.mrf.mxu0
      %v2675 = vadd.f32 0.0, %v2674
      %v2676 = vpop.f32.mrf.mxu0
      %2677 = vmatprep.mubr.bf16.mxu0 0
      %2678 = vmatmul.mubr.bf16.gmra.mxu0 %v2602
      %v2679 = vpop.f32.mrf.mxu0
      %v2680 = vadd.f32 0.0, %v2679
      %v2681 = vpop.f32.mrf.mxu0
      %v2682 = vpop.f32.mrf.mxu0
      %v2683 = vadd.f32 0.0, %v2682
      %v2684 = vpop.f32.mrf.mxu0
      %2685 = vmatprep.mubr.bf16.mxu0 0
      %2686 = vmatmul.mubr.bf16.gmra.mxu0 %v2605
      %v2687 = vpop.f32.mrf.mxu0
      %v2688 = vadd.f32 0.0, %v2687
      %v2689 = vpop.f32.mrf.mxu0
      %v2690 = vpop.f32.mrf.mxu0
      %v2691 = vadd.f32 0.0, %v2690
      %v2692 = vpop.f32.mrf.mxu0
      %2693 = vmatprep.mubr.bf16.mxu0 0
      %2694 = vmatmul.mubr.bf16.gmra.mxu0 %v2608
      %v2695 = vpop.f32.mrf.mxu0
      %v2696 = vadd.f32 0.0, %v2695
      %v2697 = vpop.f32.mrf.mxu0
      %v2698 = vpop.f32.mrf.mxu0
      %v2699 = vadd.f32 0.0, %v2698
      %v2700 = vpop.f32.mrf.mxu0
      %2701 = vmatprep.mubr.bf16.mxu0 0
      %2702 = vmatmul.mubr.bf16.gmra.mxu0 %v2611
      %v2703 = vpop.f32.mrf.mxu0
      %v2704 = vadd.f32 0.0, %v2703
      %v2705 = vpop.f32.mrf.mxu0
      %v2706 = vpop.f32.mrf.mxu0
      %v2707 = vadd.f32 0.0, %v2706
      %v2708 = vpop.f32.mrf.mxu0
      %2709 = vdwg.mxu0
      %v2710 = vadd.f32 %v2444, %v2648
      %v2711 = vadd.f32 %v2445, %v2651
      %v2712 = vadd.f32 %v2446, %v2656
      %v2713 = vadd.f32 %v2447, %v2659
      %v2714 = vadd.f32 %v2448, %v2664
      %v2715 = vadd.f32 %v2449, %v2667
      %v2716 = vadd.f32 %v2450, %v2672
      %v2717 = vadd.f32 %v2451, %v2675
      %v2718 = vadd.f32 %v2452, %v2680
      %v2719 = vadd.f32 %v2453, %v2683
      %v2720 = vadd.f32 %v2454, %v2688
      %v2721 = vadd.f32 %v2455, %v2691
      %v2722 = vadd.f32 %v2456, %v2696
      %v2723 = vadd.f32 %v2457, %v2699
      %v2724 = vadd.f32 %v2458, %v2704
      %v2725 = vadd.f32 %v2459, %v2707
      %s2726 = scalar_lea.vmem [#allocation2], 24
      %v2727 = vld [vmem:[%s2726] sm:$0xf]
      %v2728 = vld [vmem:[%s2726 + $0x4] sm:$0xf]
      %v2729 = vld [vmem:[%s2726 + $0xc] sm:$0xf]
      %v2730 = vld [vmem:[%s2726 + $0x10] sm:$0xf]
      %v2731 = vld [vmem:[%s2726 + $0x18] sm:$0xf]
      %v2732 = vld [vmem:[%s2726 + $0x1c] sm:$0xf]
      %v2733 = vld [vmem:[%s2726 + $0x24] sm:$0xf]
      %v2734 = vld [vmem:[%s2726 + $0x28] sm:$0xf]
      %v2735 = vld [vmem:[%s2726 + $0x30] sm:$0xf]
      %v2736 = vld [vmem:[%s2726 + $0x34] sm:$0xf]
      %v2737 = vld [vmem:[%s2726 + $0x3c] sm:$0xf]
      %v2738 = vld [vmem:[%s2726 + $0x40] sm:$0xf]
      %v2739 = vld [vmem:[%s2726 + $0x48] sm:$0xf]
      %v2740 = vld [vmem:[%s2726 + $0x4c] sm:$0xf]
      %v2741 = vld [vmem:[%s2726 + $0x54] sm:$0xf]
      %v2742 = vld [vmem:[%s2726 + $0x58] sm:$0xf]
      %s2743 = scalar_lea.vmem %s6, 96
      %v2744 = vld [vmem:[%s2743] sm:$0xf]
      %v2745 = vld [vmem:[%s2743 + $0x4] sm:$0xf]
      %v2746 = vld [vmem:[%s2743 + $0x8] sm:$0xf]
      %v2747 = vld [vmem:[%s2743 + $0xc] sm:$0xf]
      %v2764 = vunpack.c.l.b16 %v2727
      %v2765 = vunpack.c.l.b16 %v2728
      %v2766 = vunpack.c.l.b16 %v2729
      %v2767 = vunpack.c.l.b16 %v2730
      %v2768 = vunpack.c.l.b16 %v2731
      %v2769 = vunpack.c.l.b16 %v2732
      %v2770 = vunpack.c.l.b16 %v2733
      %v2771 = vunpack.c.l.b16 %v2734
      %v2772 = vunpack.c.l.b16 %v2735
      %v2773 = vunpack.c.l.b16 %v2736
      %v2774 = vunpack.c.l.b16 %v2737
      %v2775 = vunpack.c.l.b16 %v2738
      %v2776 = vunpack.c.l.b16 %v2739
      %v2777 = vunpack.c.l.b16 %v2740
      %v2778 = vunpack.c.l.b16 %v2741
      %v2779 = vunpack.c.l.b16 %v2742
      %v2780 = vpack.c.b16 %v2765, %v2764
      %v2781 = vpack.c.b16 %v2767, %v2766
      %v2782 = vpack.c.b16 %v2769, %v2768
      %v2783 = vpack.c.b16 %v2771, %v2770
      %v2784 = vpack.c.b16 %v2773, %v2772
      %v2785 = vpack.c.b16 %v2775, %v2774
      %v2786 = vpack.c.b16 %v2777, %v2776
      %v2787 = vpack.c.b16 %v2779, %v2778
      %v2792 = vunpack.c.l.b16 %v2744
      %v2793 = vunpack.c.l.b16 %v2745
      %v2794 = vunpack.c.l.b16 %v2746
      %v2795 = vunpack.c.l.b16 %v2747
      %v2796 = vpack.c.b16 %v2793, %v2792
      %v2797 = vpack.c.b16 %v2795, %v2794
      %v2801 = vsel %vm1299, %v2780, 0
      %v2804 = vsel %vm1299, %v2781, 0
      %v2807 = vsel %vm1299, %v2782, 0
      %v2810 = vsel %vm1299, %v2783, 0
      %v2813 = vsel %vm1299, %v2784, 0
      %v2816 = vsel %vm1299, %v2785, 0
      %v2819 = vsel %vm1299, %v2786, 0
      %v2822 = vsel %vm1299, %v2787, 0
      %2824 = vmatprep.subr.bf16.mxu0 0
      %2825 = vmatpush1.bf16.msra.mxu0 0
      %2826 = vmatprep.subr.bf16.mxu0 0
      %2827 = vmatpush1.bf16.msra.mxu0 0
      %2828 = vmatprep.subr.bf16.mxu0 0
      %2829 = vmatpush1.bf16.msra.mxu0 0
      %2830 = vmatprep.subr.bf16.mxu0 0
      %2831 = vmatpush1.bf16.msra.mxu0 0
      %2832 = vmatprep.subr.bf16.mxu0 0
      %2833 = vmatpush1.bf16.msra.mxu0 0
      %2834 = vmatprep.subr.bf16.mxu0 0
      %2835 = vmatpush1.bf16.msra.mxu0 0
      %2836 = vmatprep.subr.bf16.mxu0 0
      %2837 = vmatpush1.bf16.msra.mxu0 %v2797
      %2838 = vmatprep.subr.bf16.mxu0 0
      %2839 = vmatpush1.bf16.msra.mxu0 %v2796
      %2840 = vmatprep.subr.bf16.mxu0 0
      %2841 = vmatpush2.bf16.msra.mxu0 0
      %2842 = vmatprep.subr.bf16.mxu0 0
      %2843 = vmatpush2.bf16.msra.mxu0 0
      %2844 = vmatprep.subr.bf16.mxu0 0
      %2845 = vmatpush2.bf16.msra.mxu0 0
      %2846 = vmatprep.subr.bf16.mxu0 0
      %2847 = vmatpush2.bf16.msra.mxu0 0
      %2848 = vmatprep.subr.bf16.mxu0 0
      %2849 = vmatpush2.bf16.msra.mxu0 0
      %2850 = vmatprep.subr.bf16.mxu0 0
      %2851 = vmatpush2.bf16.msra.mxu0 0
      %2852 = vmatprep.subr.bf16.mxu0 0
      %2853 = vmatpush2.bf16.msra.mxu0 0
      %2854 = vmatprep.subr.bf16.mxu0 0
      %2855 = vmatpush2.bf16.msra.mxu0 0
      %2856 = vmatprep.mubr.bf16.mxu0 0
      %2857 = vmatmul.mubr.bf16.gmra.mxu0 %v2801
      %v2858 = vpop.f32.mrf.mxu0
      %v2859 = vadd.f32 0.0, %v2858
      %v2860 = vpop.f32.mrf.mxu0
      %v2861 = vpop.f32.mrf.mxu0
      %v2862 = vadd.f32 0.0, %v2861
      %v2863 = vpop.f32.mrf.mxu0
      %2864 = vmatprep.mubr.bf16.mxu0 0
      %2865 = vmatmul.mubr.bf16.gmra.mxu0 %v2804
      %v2866 = vpop.f32.mrf.mxu0
      %v2867 = vadd.f32 0.0, %v2866
      %v2868 = vpop.f32.mrf.mxu0
      %v2869 = vpop.f32.mrf.mxu0
      %v2870 = vadd.f32 0.0, %v2869
      %v2871 = vpop.f32.mrf.mxu0
      %2872 = vmatprep.mubr.bf16.mxu0 0
      %2873 = vmatmul.mubr.bf16.gmra.mxu0 %v2807
      %v2874 = vpop.f32.mrf.mxu0
      %v2875 = vadd.f32 0.0, %v2874
      %v2876 = vpop.f32.mrf.mxu0
      %v2877 = vpop.f32.mrf.mxu0
      %v2878 = vadd.f32 0.0, %v2877
      %v2879 = vpop.f32.mrf.mxu0
      %2880 = vmatprep.mubr.bf16.mxu0 0
      %2881 = vmatmul.mubr.bf16.gmra.mxu0 %v2810
      %v2882 = vpop.f32.mrf.mxu0
      %v2883 = vadd.f32 0.0, %v2882
      %v2884 = vpop.f32.mrf.mxu0
      %v2885 = vpop.f32.mrf.mxu0
      %v2886 = vadd.f32 0.0, %v2885
      %v2887 = vpop.f32.mrf.mxu0
      %2888 = vmatprep.mubr.bf16.mxu0 0
      %2889 = vmatmul.mubr.bf16.gmra.mxu0 %v2813
      %v2890 = vpop.f32.mrf.mxu0
      %v2891 = vadd.f32 0.0, %v2890
      %v2892 = vpop.f32.mrf.mxu0
      %v2893 = vpop.f32.mrf.mxu0
      %v2894 = vadd.f32 0.0, %v2893
      %v2895 = vpop.f32.mrf.mxu0
      %2896 = vmatprep.mubr.bf16.mxu0 0
      %2897 = vmatmul.mubr.bf16.gmra.mxu0 %v2816
      %v2898 = vpop.f32.mrf.mxu0
      %v2899 = vadd.f32 0.0, %v2898
      %v2900 = vpop.f32.mrf.mxu0
      %v2901 = vpop.f32.mrf.mxu0
      %v2902 = vadd.f32 0.0, %v2901
      %v2903 = vpop.f32.mrf.mxu0
      %2904 = vmatprep.mubr.bf16.mxu0 0
      %2905 = vmatmul.mubr.bf16.gmra.mxu0 %v2819
      %v2906 = vpop.f32.mrf.mxu0
      %v2907 = vadd.f32 0.0, %v2906
      %v2908 = vpop.f32.mrf.mxu0
      %v2909 = vpop.f32.mrf.mxu0
      %v2910 = vadd.f32 0.0, %v2909
      %v2911 = vpop.f32.mrf.mxu0
      %2912 = vmatprep.mubr.bf16.mxu0 0
      %2913 = vmatmul.mubr.bf16.gmra.mxu0 %v2822
      %v2914 = vpop.f32.mrf.mxu0
      %v2915 = vadd.f32 0.0, %v2914
      %v2916 = vpop.f32.mrf.mxu0
      %v2917 = vpop.f32.mrf.mxu0
      %v2918 = vadd.f32 0.0, %v2917
      %v2919 = vpop.f32.mrf.mxu0
      %2920 = vdwg.mxu0
      %v2921 = vadd.f32 %v2710, %v2859
      %v2922 = vadd.f32 %v2711, %v2862
      %v2923 = vadd.f32 %v2712, %v2867
      %v2924 = vadd.f32 %v2713, %v2870
      %v2925 = vadd.f32 %v2714, %v2875
      %v2926 = vadd.f32 %v2715, %v2878
      %v2927 = vadd.f32 %v2716, %v2883
      %v2928 = vadd.f32 %v2717, %v2886
      %v2929 = vadd.f32 %v2718, %v2891
      %v2930 = vadd.f32 %v2719, %v2894
      %v2931 = vadd.f32 %v2720, %v2899
      %v2932 = vadd.f32 %v2721, %v2902
      %v2933 = vadd.f32 %v2722, %v2907
      %v2934 = vadd.f32 %v2723, %v2910
      %v2935 = vadd.f32 %v2724, %v2915
      %v2936 = vadd.f32 %v2725, %v2918
      %v2937 = vld [vmem:[%s2726] sm:$0xf]
      %v2938 = vld [vmem:[%s2726 + $0x4] sm:$0xf]
      %v2939 = vld [vmem:[%s2726 + $0x8] sm:$0x1]
      %v2940 = vld [vmem:[%s2726 + $0xc] sm:$0xf]
      %v2941 = vld [vmem:[%s2726 + $0x10] sm:$0xf]
      %v2942 = vld [vmem:[%s2726 + $0x14] sm:$0x1]
      %v2943 = vld [vmem:[%s2726 + $0x18] sm:$0xf]
      %v2944 = vld [vmem:[%s2726 + $0x1c] sm:$0xf]
      %v2945 = vld [vmem:[%s2726 + $0x20] sm:$0x1]
      %v2946 = vld [vmem:[%s2726 + $0x24] sm:$0xf]
      %v2947 = vld [vmem:[%s2726 + $0x28] sm:$0xf]
      %v2948 = vld [vmem:[%s2726 + $0x2c] sm:$0x1]
      %v2949 = vld [vmem:[%s2726 + $0x30] sm:$0xf]
      %v2950 = vld [vmem:[%s2726 + $0x34] sm:$0xf]
      %v2951 = vld [vmem:[%s2726 + $0x38] sm:$0x1]
      %v2952 = vld [vmem:[%s2726 + $0x3c] sm:$0xf]
      %v2953 = vld [vmem:[%s2726 + $0x40] sm:$0xf]
      %v2954 = vld [vmem:[%s2726 + $0x44] sm:$0x1]
      %v2955 = vld [vmem:[%s2726 + $0x48] sm:$0xf]
      %v2956 = vld [vmem:[%s2726 + $0x4c] sm:$0xf]
      %v2957 = vld [vmem:[%s2726 + $0x50] sm:$0x1]
      %v2958 = vld [vmem:[%s2726 + $0x54] sm:$0xf]
      %v2959 = vld [vmem:[%s2726 + $0x58] sm:$0xf]
      %v2960 = vld [vmem:[%s2726 + $0x5c] sm:$0x1]
      %v2962 = vshrl.u32 %v2937, 16
      %v2964 = vrot.slane %v2962, 4
      %v2965 = vshll.u32 %v2937, 16
      %v2967 = vrot.slane %v2965, 5
      %v2968 = vor.u32 %v2964, %v2967
      %v2969 = vrot.slane %v2968, 4
      %v2971 = vshll.u32 %v2938, 16
      %v2973 = vrot.slane %v2971, 5
      %v2974 = vsel %vm1065, %v2969, %v2973
      %v2975 = vshrl.u32 %v2938, 16
      %v2977 = vrot.slane %v2975, 4
      %v2978 = vor.u32 %v2977, %v2973
      %v2979 = vrot.slane %v2978, 4
      %v2981 = vshll.u32 %v2939, 16
      %v2983 = vrot.slane %v2981, 5
      %v2984 = vsel %vm1065, %v2979, %v2983
      %v2986 = vshrl.u32 %v2940, 16
      %v2988 = vrot.slane %v2986, 4
      %v2989 = vshll.u32 %v2940, 16
      %v2991 = vrot.slane %v2989, 5
      %v2992 = vor.u32 %v2988, %v2991
      %v2993 = vrot.slane %v2992, 4
      %v2995 = vshll.u32 %v2941, 16
      %v2997 = vrot.slane %v2995, 5
      %v2998 = vsel %vm1065, %v2993, %v2997
      %v2999 = vshrl.u32 %v2941, 16
      %v3001 = vrot.slane %v2999, 4
      %v3002 = vor.u32 %v3001, %v2997
      %v3003 = vrot.slane %v3002, 4
      %v3005 = vshll.u32 %v2942, 16
      %v3007 = vrot.slane %v3005, 5
      %v3008 = vsel %vm1065, %v3003, %v3007
      %v3010 = vshrl.u32 %v2943, 16
      %v3012 = vrot.slane %v3010, 4
      %v3013 = vshll.u32 %v2943, 16
      %v3015 = vrot.slane %v3013, 5
      %v3016 = vor.u32 %v3012, %v3015
      %v3017 = vrot.slane %v3016, 4
      %v3019 = vshll.u32 %v2944, 16
      %v3021 = vrot.slane %v3019, 5
      %v3022 = vsel %vm1065, %v3017, %v3021
      %v3023 = vshrl.u32 %v2944, 16
      %v3025 = vrot.slane %v3023, 4
      %v3026 = vor.u32 %v3025, %v3021
      %v3027 = vrot.slane %v3026, 4
      %v3029 = vshll.u32 %v2945, 16
      %v3031 = vrot.slane %v3029, 5
      %v3032 = vsel %vm1065, %v3027, %v3031
      %v3034 = vshrl.u32 %v2946, 16
      %v3036 = vrot.slane %v3034, 4
      %v3037 = vshll.u32 %v2946, 16
      %v3039 = vrot.slane %v3037, 5
      %v3040 = vor.u32 %v3036, %v3039
      %v3041 = vrot.slane %v3040, 4
      %v3043 = vshll.u32 %v2947, 16
      %v3045 = vrot.slane %v3043, 5
      %v3046 = vsel %vm1065, %v3041, %v3045
      %v3047 = vshrl.u32 %v2947, 16
      %v3049 = vrot.slane %v3047, 4
      %v3050 = vor.u32 %v3049, %v3045
      %v3051 = vrot.slane %v3050, 4
      %v3053 = vshll.u32 %v2948, 16
      %v3055 = vrot.slane %v3053, 5
      %v3056 = vsel %vm1065, %v3051, %v3055
      %v3058 = vshrl.u32 %v2949, 16
      %v3060 = vrot.slane %v3058, 4
      %v3061 = vshll.u32 %v2949, 16
      %v3063 = vrot.slane %v3061, 5
      %v3064 = vor.u32 %v3060, %v3063
      %v3065 = vrot.slane %v3064, 4
      %v3067 = vshll.u32 %v2950, 16
      %v3069 = vrot.slane %v3067, 5
      %v3070 = vsel %vm1065, %v3065, %v3069
      %v3071 = vshrl.u32 %v2950, 16
      %v3073 = vrot.slane %v3071, 4
      %v3074 = vor.u32 %v3073, %v3069
      %v3075 = vrot.slane %v3074, 4
      %v3077 = vshll.u32 %v2951, 16
      %v3079 = vrot.slane %v3077, 5
      %v3080 = vsel %vm1065, %v3075, %v3079
      %v3082 = vshrl.u32 %v2952, 16
      %v3084 = vrot.slane %v3082, 4
      %v3085 = vshll.u32 %v2952, 16
      %v3087 = vrot.slane %v3085, 5
      %v3088 = vor.u32 %v3084, %v3087
      %v3089 = vrot.slane %v3088, 4
      %v3091 = vshll.u32 %v2953, 16
      %v3093 = vrot.slane %v3091, 5
      %v3094 = vsel %vm1065, %v3089, %v3093
      %v3095 = vshrl.u32 %v2953, 16
      %v3097 = vrot.slane %v3095, 4
      %v3098 = vor.u32 %v3097, %v3093
      %v3099 = vrot.slane %v3098, 4
      %v3101 = vshll.u32 %v2954, 16
      %v3103 = vrot.slane %v3101, 5
      %v3104 = vsel %vm1065, %v3099, %v3103
      %v3106 = vshrl.u32 %v2955, 16
      %v3108 = vrot.slane %v3106, 4
      %v3109 = vshll.u32 %v2955, 16
      %v3111 = vrot.slane %v3109, 5
      %v3112 = vor.u32 %v3108, %v3111
      %v3113 = vrot.slane %v3112, 4
      %v3115 = vshll.u32 %v2956, 16
      %v3117 = vrot.slane %v3115, 5
      %v3118 = vsel %vm1065, %v3113, %v3117
      %v3119 = vshrl.u32 %v2956, 16
      %v3121 = vrot.slane %v3119, 4
      %v3122 = vor.u32 %v3121, %v3117
      %v3123 = vrot.slane %v3122, 4
      %v3125 = vshll.u32 %v2957, 16
      %v3127 = vrot.slane %v3125, 5
      %v3128 = vsel %vm1065, %v3123, %v3127
      %v3130 = vshrl.u32 %v2958, 16
      %v3132 = vrot.slane %v3130, 4
      %v3133 = vshll.u32 %v2958, 16
      %v3135 = vrot.slane %v3133, 5
      %v3136 = vor.u32 %v3132, %v3135
      %v3137 = vrot.slane %v3136, 4
      %v3139 = vshll.u32 %v2959, 16
      %v3141 = vrot.slane %v3139, 5
      %v3142 = vsel %vm1065, %v3137, %v3141
      %v3143 = vshrl.u32 %v2959, 16
      %v3145 = vrot.slane %v3143, 4
      %v3146 = vor.u32 %v3145, %v3141
      %v3147 = vrot.slane %v3146, 4
      %v3149 = vshll.u32 %v2960, 16
      %v3151 = vrot.slane %v3149, 5
      %v3152 = vsel %vm1065, %v3147, %v3151
      %s3153 = scalar_lea.vmem %s6, 112
      %v3154 = vld [vmem:[%s3153] sm:$0xf]
      %v3155 = vld [vmem:[%s3153 + $0x4] sm:$0xf]
      %v3156 = vld [vmem:[%s3153 + $0x8] sm:$0xf]
      %v3157 = vld [vmem:[%s3153 + $0xc] sm:$0xf]
      %v3158 = vunpack.c.l.b16 %v2974
      %v3159 = vunpack.c.l.b16 %v2984
      %v3160 = vunpack.c.l.b16 %v2998
      %v3161 = vunpack.c.l.b16 %v3008
      %v3162 = vunpack.c.l.b16 %v3022
      %v3163 = vunpack.c.l.b16 %v3032
      %v3164 = vunpack.c.l.b16 %v3046
      %v3165 = vunpack.c.l.b16 %v3056
      %v3166 = vunpack.c.l.b16 %v3070
      %v3167 = vunpack.c.l.b16 %v3080
      %v3168 = vunpack.c.l.b16 %v3094
      %v3169 = vunpack.c.l.b16 %v3104
      %v3170 = vunpack.c.l.b16 %v3118
      %v3171 = vunpack.c.l.b16 %v3128
      %v3172 = vunpack.c.l.b16 %v3142
      %v3173 = vunpack.c.l.b16 %v3152
      %v3174 = vpack.c.b16 %v3159, %v3158
      %v3175 = vpack.c.b16 %v3161, %v3160
      %v3176 = vpack.c.b16 %v3163, %v3162
      %v3177 = vpack.c.b16 %v3165, %v3164
      %v3178 = vpack.c.b16 %v3167, %v3166
      %v3179 = vpack.c.b16 %v3169, %v3168
      %v3180 = vpack.c.b16 %v3171, %v3170
      %v3181 = vpack.c.b16 %v3173, %v3172
      %v3186 = vunpack.c.l.b16 %v3154
      %v3187 = vunpack.c.l.b16 %v3155
      %v3188 = vunpack.c.l.b16 %v3156
      %v3189 = vunpack.c.l.b16 %v3157
      %v3190 = vpack.c.b16 %v3187, %v3186
      %v3191 = vpack.c.b16 %v3189, %v3188
      %v3195 = vsel %vm1299, %v3174, 0
      %v3198 = vsel %vm1299, %v3175, 0
      %v3201 = vsel %vm1299, %v3176, 0
      %v3204 = vsel %vm1299, %v3177, 0
      %v3207 = vsel %vm1299, %v3178, 0
      %v3210 = vsel %vm1299, %v3179, 0
      %v3213 = vsel %vm1299, %v3180, 0
      %v3216 = vsel %vm1299, %v3181, 0
      %3218 = vmatprep.subr.bf16.mxu0 0
      %3219 = vmatpush1.bf16.msra.mxu0 0
      %3220 = vmatprep.subr.bf16.mxu0 0
      %3221 = vmatpush1.bf16.msra.mxu0 0
      %3222 = vmatprep.subr.bf16.mxu0 0
      %3223 = vmatpush1.bf16.msra.mxu0 0
      %3224 = vmatprep.subr.bf16.mxu0 0
      %3225 = vmatpush1.bf16.msra.mxu0 0
      %3226 = vmatprep.subr.bf16.mxu0 0
      %3227 = vmatpush1.bf16.msra.mxu0 0
      %3228 = vmatprep.subr.bf16.mxu0 0
      %3229 = vmatpush1.bf16.msra.mxu0 0
      %3230 = vmatprep.subr.bf16.mxu0 0
      %3231 = vmatpush1.bf16.msra.mxu0 %v3191
      %3232 = vmatprep.subr.bf16.mxu0 0
      %3233 = vmatpush1.bf16.msra.mxu0 %v3190
      %3234 = vmatprep.subr.bf16.mxu0 0
      %3235 = vmatpush2.bf16.msra.mxu0 0
      %3236 = vmatprep.subr.bf16.mxu0 0
      %3237 = vmatpush2.bf16.msra.mxu0 0
      %3238 = vmatprep.subr.bf16.mxu0 0
      %3239 = vmatpush2.bf16.msra.mxu0 0
      %3240 = vmatprep.subr.bf16.mxu0 0
      %3241 = vmatpush2.bf16.msra.mxu0 0
      %3242 = vmatprep.subr.bf16.mxu0 0
      %3243 = vmatpush2.bf16.msra.mxu0 0
      %3244 = vmatprep.subr.bf16.mxu0 0
      %3245 = vmatpush2.bf16.msra.mxu0 0
      %3246 = vmatprep.subr.bf16.mxu0 0
      %3247 = vmatpush2.bf16.msra.mxu0 0
      %3248 = vmatprep.subr.bf16.mxu0 0
      %3249 = vmatpush2.bf16.msra.mxu0 0
      %3250 = vmatprep.mubr.bf16.mxu0 0
      %3251 = vmatmul.mubr.bf16.gmra.mxu0 %v3195
      %v3252 = vpop.f32.mrf.mxu0
      %v3253 = vadd.f32 0.0, %v3252
      %v3254 = vpop.f32.mrf.mxu0
      %v3255 = vpop.f32.mrf.mxu0
      %v3256 = vadd.f32 0.0, %v3255
      %v3257 = vpop.f32.mrf.mxu0
      %3258 = vmatprep.mubr.bf16.mxu0 0
      %3259 = vmatmul.mubr.bf16.gmra.mxu0 %v3198
      %v3260 = vpop.f32.mrf.mxu0
      %v3261 = vadd.f32 0.0, %v3260
      %v3262 = vpop.f32.mrf.mxu0
      %v3263 = vpop.f32.mrf.mxu0
      %v3264 = vadd.f32 0.0, %v3263
      %v3265 = vpop.f32.mrf.mxu0
      %3266 = vmatprep.mubr.bf16.mxu0 0
      %3267 = vmatmul.mubr.bf16.gmra.mxu0 %v3201
      %v3268 = vpop.f32.mrf.mxu0
      %v3269 = vadd.f32 0.0, %v3268
      %v3270 = vpop.f32.mrf.mxu0
      %v3271 = vpop.f32.mrf.mxu0
      %v3272 = vadd.f32 0.0, %v3271
      %v3273 = vpop.f32.mrf.mxu0
      %3274 = vmatprep.mubr.bf16.mxu0 0
      %3275 = vmatmul.mubr.bf16.gmra.mxu0 %v3204
      %v3276 = vpop.f32.mrf.mxu0
      %v3277 = vadd.f32 0.0, %v3276
      %v3278 = vpop.f32.mrf.mxu0
      %v3279 = vpop.f32.mrf.mxu0
      %v3280 = vadd.f32 0.0, %v3279
      %v3281 = vpop.f32.mrf.mxu0
      %3282 = vmatprep.mubr.bf16.mxu0 0
      %3283 = vmatmul.mubr.bf16.gmra.mxu0 %v3207
      %v3284 = vpop.f32.mrf.mxu0
      %v3285 = vadd.f32 0.0, %v3284
      %v3286 = vpop.f32.mrf.mxu0
      %v3287 = vpop.f32.mrf.mxu0
      %v3288 = vadd.f32 0.0, %v3287
      %v3289 = vpop.f32.mrf.mxu0
      %3290 = vmatprep.mubr.bf16.mxu0 0
      %3291 = vmatmul.mubr.bf16.gmra.mxu0 %v3210
      %v3292 = vpop.f32.mrf.mxu0
      %v3293 = vadd.f32 0.0, %v3292
      %v3294 = vpop.f32.mrf.mxu0
      %v3295 = vpop.f32.mrf.mxu0
      %v3296 = vadd.f32 0.0, %v3295
      %v3297 = vpop.f32.mrf.mxu0
      %3298 = vmatprep.mubr.bf16.mxu0 0
      %3299 = vmatmul.mubr.bf16.gmra.mxu0 %v3213
      %v3300 = vpop.f32.mrf.mxu0
      %v3301 = vadd.f32 0.0, %v3300
      %v3302 = vpop.f32.mrf.mxu0
      %v3303 = vpop.f32.mrf.mxu0
      %v3304 = vadd.f32 0.0, %v3303
      %v3305 = vpop.f32.mrf.mxu0
      %3306 = vmatprep.mubr.bf16.mxu0 0
      %3307 = vmatmul.mubr.bf16.gmra.mxu0 %v3216
      %v3308 = vpop.f32.mrf.mxu0
      %v3309 = vadd.f32 0.0, %v3308
      %v3310 = vpop.f32.mrf.mxu0
      %v3311 = vpop.f32.mrf.mxu0
      %v3312 = vadd.f32 0.0, %v3311
      %v3313 = vpop.f32.mrf.mxu0
      %3314 = vdwg.mxu0
      %v3315 = vadd.f32 %v2921, %v3253
      %v3316 = vadd.f32 %v2922, %v3256
      %v3317 = vadd.f32 %v2923, %v3261
      %v3318 = vadd.f32 %v2924, %v3264
      %v3319 = vadd.f32 %v2925, %v3269
      %v3320 = vadd.f32 %v2926, %v3272
      %v3321 = vadd.f32 %v2927, %v3277
      %v3322 = vadd.f32 %v2928, %v3280
      %v3323 = vadd.f32 %v2929, %v3285
      %v3324 = vadd.f32 %v2930, %v3288
      %v3325 = vadd.f32 %v2931, %v3293
      %v3326 = vadd.f32 %v2932, %v3296
      %v3327 = vadd.f32 %v2933, %v3301
      %v3328 = vadd.f32 %v2934, %v3304
      %v3329 = vadd.f32 %v2935, %v3309
      %v3330 = vadd.f32 %v2936, %v3312
      %v3331 = vld [vmem:[%s2726] sm:$0xe]
      %v3332 = vld [vmem:[%s2726 + $0xc] sm:$0xe]
      %v3333 = vld [vmem:[%s2726 + $0x18] sm:$0xe]
      %v3334 = vld [vmem:[%s2726 + $0x24] sm:$0xe]
      %v3335 = vld [vmem:[%s2726 + $0x30] sm:$0xe]
      %v3336 = vld [vmem:[%s2726 + $0x3c] sm:$0xe]
      %v3337 = vld [vmem:[%s2726 + $0x48] sm:$0xe]
      %v3338 = vld [vmem:[%s2726 + $0x54] sm:$0xe]
      %v3363 = vrot.slane %v3331, 5
      %v3364 = vrot.slane %v3363, 4
      %v3365 = vrot.slane %v2938, 5
      %v3366 = vsel %vm1620, %v3364, %v3365
      %v3367 = vrot.slane %v3365, 4
      %v3368 = vrot.slane %v2939, 5
      %v3369 = vsel %vm1620, %v3367, %v3368
      %v3370 = vrot.slane %v3332, 5
      %v3371 = vrot.slane %v3370, 4
      %v3372 = vrot.slane %v2941, 5
      %v3373 = vsel %vm1620, %v3371, %v3372
      %v3374 = vrot.slane %v3372, 4
      %v3375 = vrot.slane %v2942, 5
      %v3376 = vsel %vm1620, %v3374, %v3375
      %v3377 = vrot.slane %v3333, 5
      %v3378 = vrot.slane %v3377, 4
      %v3379 = vrot.slane %v2944, 5
      %v3380 = vsel %vm1620, %v3378, %v3379
      %v3381 = vrot.slane %v3379, 4
      %v3382 = vrot.slane %v2945, 5
      %v3383 = vsel %vm1620, %v3381, %v3382
      %v3384 = vrot.slane %v3334, 5
      %v3385 = vrot.slane %v3384, 4
      %v3386 = vrot.slane %v2947, 5
      %v3387 = vsel %vm1620, %v3385, %v3386
      %v3388 = vrot.slane %v3386, 4
      %v3389 = vrot.slane %v2948, 5
      %v3390 = vsel %vm1620, %v3388, %v3389
      %v3391 = vrot.slane %v3335, 5
      %v3392 = vrot.slane %v3391, 4
      %v3393 = vrot.slane %v2950, 5
      %v3394 = vsel %vm1620, %v3392, %v3393
      %v3395 = vrot.slane %v3393, 4
      %v3396 = vrot.slane %v2951, 5
      %v3397 = vsel %vm1620, %v3395, %v3396
      %v3398 = vrot.slane %v3336, 5
      %v3399 = vrot.slane %v3398, 4
      %v3400 = vrot.slane %v2953, 5
      %v3401 = vsel %vm1620, %v3399, %v3400
      %v3402 = vrot.slane %v3400, 4
      %v3403 = vrot.slane %v2954, 5
      %v3404 = vsel %vm1620, %v3402, %v3403
      %v3405 = vrot.slane %v3337, 5
      %v3406 = vrot.slane %v3405, 4
      %v3407 = vrot.slane %v2956, 5
      %v3408 = vsel %vm1620, %v3406, %v3407
      %v3409 = vrot.slane %v3407, 4
      %v3410 = vrot.slane %v2957, 5
      %v3411 = vsel %vm1620, %v3409, %v3410
      %v3412 = vrot.slane %v3338, 5
      %v3413 = vrot.slane %v3412, 4
      %v3414 = vrot.slane %v2959, 5
      %v3415 = vsel %vm1620, %v3413, %v3414
      %v3416 = vrot.slane %v3414, 4
      %v3417 = vrot.slane %v2960, 5
      %v3418 = vsel %vm1620, %v3416, %v3417
      %s3419 = scalar_lea.vmem %s6, 128
      %v3420 = vld [vmem:[%s3419] sm:$0xf]
      %v3421 = vld [vmem:[%s3419 + $0x4] sm:$0xf]
      %v3422 = vld [vmem:[%s3419 + $0x8] sm:$0xf]
      %v3423 = vld [vmem:[%s3419 + $0xc] sm:$0xf]
      %v3424 = vunpack.c.l.b16 %v3366
      %v3425 = vunpack.c.l.b16 %v3369
      %v3426 = vunpack.c.l.b16 %v3373
      %v3427 = vunpack.c.l.b16 %v3376
      %v3428 = vunpack.c.l.b16 %v3380
      %v3429 = vunpack.c.l.b16 %v3383
      %v3430 = vunpack.c.l.b16 %v3387
      %v3431 = vunpack.c.l.b16 %v3390
      %v3432 = vunpack.c.l.b16 %v3394
      %v3433 = vunpack.c.l.b16 %v3397
      %v3434 = vunpack.c.l.b16 %v3401
      %v3435 = vunpack.c.l.b16 %v3404
      %v3436 = vunpack.c.l.b16 %v3408
      %v3437 = vunpack.c.l.b16 %v3411
      %v3438 = vunpack.c.l.b16 %v3415
      %v3439 = vunpack.c.l.b16 %v3418
      %v3440 = vpack.c.b16 %v3425, %v3424
      %v3441 = vpack.c.b16 %v3427, %v3426
      %v3442 = vpack.c.b16 %v3429, %v3428
      %v3443 = vpack.c.b16 %v3431, %v3430
      %v3444 = vpack.c.b16 %v3433, %v3432
      %v3445 = vpack.c.b16 %v3435, %v3434
      %v3446 = vpack.c.b16 %v3437, %v3436
      %v3447 = vpack.c.b16 %v3439, %v3438
      %v3452 = vunpack.c.l.b16 %v3420
      %v3453 = vunpack.c.l.b16 %v3421
      %v3454 = vunpack.c.l.b16 %v3422
      %v3455 = vunpack.c.l.b16 %v3423
      %v3456 = vpack.c.b16 %v3453, %v3452
      %v3457 = vpack.c.b16 %v3455, %v3454
      %v3461 = vsel %vm1299, %v3440, 0
      %v3464 = vsel %vm1299, %v3441, 0
      %v3467 = vsel %vm1299, %v3442, 0
      %v3470 = vsel %vm1299, %v3443, 0
      %v3473 = vsel %vm1299, %v3444, 0
      %v3476 = vsel %vm1299, %v3445, 0
      %v3479 = vsel %vm1299, %v3446, 0
      %v3482 = vsel %vm1299, %v3447, 0
      %3484 = vmatprep.subr.bf16.mxu0 0
      %3485 = vmatpush1.bf16.msra.mxu0 0
      %3486 = vmatprep.subr.bf16.mxu0 0
      %3487 = vmatpush1.bf16.msra.mxu0 0
      %3488 = vmatprep.subr.bf16.mxu0 0
      %3489 = vmatpush1.bf16.msra.mxu0 0
      %3490 = vmatprep.subr.bf16.mxu0 0
      %3491 = vmatpush1.bf16.msra.mxu0 0
      %3492 = vmatprep.subr.bf16.mxu0 0
      %3493 = vmatpush1.bf16.msra.mxu0 0
      %3494 = vmatprep.subr.bf16.mxu0 0
      %3495 = vmatpush1.bf16.msra.mxu0 0
      %3496 = vmatprep.subr.bf16.mxu0 0
      %3497 = vmatpush1.bf16.msra.mxu0 %v3457
      %3498 = vmatprep.subr.bf16.mxu0 0
      %3499 = vmatpush1.bf16.msra.mxu0 %v3456
      %3500 = vmatprep.subr.bf16.mxu0 0
      %3501 = vmatpush2.bf16.msra.mxu0 0
      %3502 = vmatprep.subr.bf16.mxu0 0
      %3503 = vmatpush2.bf16.msra.mxu0 0
      %3504 = vmatprep.subr.bf16.mxu0 0
      %3505 = vmatpush2.bf16.msra.mxu0 0
      %3506 = vmatprep.subr.bf16.mxu0 0
      %3507 = vmatpush2.bf16.msra.mxu0 0
      %3508 = vmatprep.subr.bf16.mxu0 0
      %3509 = vmatpush2.bf16.msra.mxu0 0
      %3510 = vmatprep.subr.bf16.mxu0 0
      %3511 = vmatpush2.bf16.msra.mxu0 0
      %3512 = vmatprep.subr.bf16.mxu0 0
      %3513 = vmatpush2.bf16.msra.mxu0 0
      %3514 = vmatprep.subr.bf16.mxu0 0
      %3515 = vmatpush2.bf16.msra.mxu0 0
      %3516 = vmatprep.mubr.bf16.mxu0 0
      %3517 = vmatmul.mubr.bf16.gmra.mxu0 %v3461
      %v3518 = vpop.f32.mrf.mxu0
      %v3519 = vadd.f32 0.0, %v3518
      %v3520 = vpop.f32.mrf.mxu0
      %v3521 = vpop.f32.mrf.mxu0
      %v3522 = vadd.f32 0.0, %v3521
      %v3523 = vpop.f32.mrf.mxu0
      %3524 = vmatprep.mubr.bf16.mxu0 0
      %3525 = vmatmul.mubr.bf16.gmra.mxu0 %v3464
      %v3526 = vpop.f32.mrf.mxu0
      %v3527 = vadd.f32 0.0, %v3526
      %v3528 = vpop.f32.mrf.mxu0
      %v3529 = vpop.f32.mrf.mxu0
      %v3530 = vadd.f32 0.0, %v3529
      %v3531 = vpop.f32.mrf.mxu0
      %3532 = vmatprep.mubr.bf16.mxu0 0
      %3533 = vmatmul.mubr.bf16.gmra.mxu0 %v3467
      %v3534 = vpop.f32.mrf.mxu0
      %v3535 = vadd.f32 0.0, %v3534
      %v3536 = vpop.f32.mrf.mxu0
      %v3537 = vpop.f32.mrf.mxu0
      %v3538 = vadd.f32 0.0, %v3537
      %v3539 = vpop.f32.mrf.mxu0
      %3540 = vmatprep.mubr.bf16.mxu0 0
      %3541 = vmatmul.mubr.bf16.gmra.mxu0 %v3470
      %v3542 = vpop.f32.mrf.mxu0
      %v3543 = vadd.f32 0.0, %v3542
      %v3544 = vpop.f32.mrf.mxu0
      %v3545 = vpop.f32.mrf.mxu0
      %v3546 = vadd.f32 0.0, %v3545
      %v3547 = vpop.f32.mrf.mxu0
      %3548 = vmatprep.mubr.bf16.mxu0 0
      %3549 = vmatmul.mubr.bf16.gmra.mxu0 %v3473
      %v3550 = vpop.f32.mrf.mxu0
      %v3551 = vadd.f32 0.0, %v3550
      %v3552 = vpop.f32.mrf.mxu0
      %v3553 = vpop.f32.mrf.mxu0
      %v3554 = vadd.f32 0.0, %v3553
      %v3555 = vpop.f32.mrf.mxu0
      %3556 = vmatprep.mubr.bf16.mxu0 0
      %3557 = vmatmul.mubr.bf16.gmra.mxu0 %v3476
      %v3558 = vpop.f32.mrf.mxu0
      %v3559 = vadd.f32 0.0, %v3558
      %v3560 = vpop.f32.mrf.mxu0
      %v3561 = vpop.f32.mrf.mxu0
      %v3562 = vadd.f32 0.0, %v3561
      %v3563 = vpop.f32.mrf.mxu0
      %3564 = vmatprep.mubr.bf16.mxu0 0
      %3565 = vmatmul.mubr.bf16.gmra.mxu0 %v3479
      %v3566 = vpop.f32.mrf.mxu0
      %v3567 = vadd.f32 0.0, %v3566
      %v3568 = vpop.f32.mrf.mxu0
      %v3569 = vpop.f32.mrf.mxu0
      %v3570 = vadd.f32 0.0, %v3569
      %v3571 = vpop.f32.mrf.mxu0
      %3572 = vmatprep.mubr.bf16.mxu0 0
      %3573 = vmatmul.mubr.bf16.gmra.mxu0 %v3482
      %v3574 = vpop.f32.mrf.mxu0
      %v3575 = vadd.f32 0.0, %v3574
      %v3576 = vpop.f32.mrf.mxu0
      %v3577 = vpop.f32.mrf.mxu0
      %v3578 = vadd.f32 0.0, %v3577
      %v3579 = vpop.f32.mrf.mxu0
      %3580 = vdwg.mxu0
      %v3581 = vadd.f32 %v3315, %v3519
      %v3582 = vadd.f32 %v3316, %v3522
      %v3583 = vadd.f32 %v3317, %v3527
      %v3584 = vadd.f32 %v3318, %v3530
      %v3585 = vadd.f32 %v3319, %v3535
      %v3586 = vadd.f32 %v3320, %v3538
      %v3587 = vadd.f32 %v3321, %v3543
      %v3588 = vadd.f32 %v3322, %v3546
      %v3589 = vadd.f32 %v3323, %v3551
      %v3590 = vadd.f32 %v3324, %v3554
      %v3591 = vadd.f32 %v3325, %v3559
      %v3592 = vadd.f32 %v3326, %v3562
      %v3593 = vadd.f32 %v3327, %v3567
      %v3594 = vadd.f32 %v3328, %v3570
      %v3595 = vadd.f32 %v3329, %v3575
      %v3596 = vadd.f32 %v3330, %v3578
      %v3597 = vld [vmem:[%s7] sm:$0x1]
      %v3599 = vlaneseq
      %v3600 = vshrl.u32 %v3599, 7
      %v3601 = vsub.s32 0, %v3600
      %v3602 = vrot.slane %v3597, %v3601
      %v3604 = vadd.f32 %v3581, %v3602
      %v3605 = vadd.f32 %v3582, %v3602
      %v3606 = vadd.f32 %v3583, %v3602
      %v3607 = vadd.f32 %v3584, %v3602
      %v3608 = vadd.f32 %v3585, %v3602
      %v3609 = vadd.f32 %v3586, %v3602
      %v3610 = vadd.f32 %v3587, %v3602
      %v3611 = vadd.f32 %v3588, %v3602
      %v3612 = vadd.f32 %v3589, %v3602
      %v3613 = vadd.f32 %v3590, %v3602
      %v3614 = vadd.f32 %v3591, %v3602
      %v3615 = vadd.f32 %v3592, %v3602
      %v3616 = vadd.f32 %v3593, %v3602
      %v3617 = vadd.f32 %v3594, %v3602
      %v3618 = vadd.f32 %v3595, %v3602
      %v3619 = vadd.f32 %v3596, %v3602
      %v3620 = vld [vmem:[%s352] sm:$0xff]
      %v3621 = vld [vmem:[%s352 + $0x8] sm:$0xff]
      %v3622 = vld [vmem:[%s352 + $0x10] sm:$0xff]
      %v3623 = vld [vmem:[%s352 + $0x18] sm:$0xff]
      %v3624 = vld [vmem:[%s352 + $0x20] sm:$0xff]
      %v3625 = vld [vmem:[%s352 + $0x28] sm:$0xff]
      %v3626 = vld [vmem:[%s352 + $0x30] sm:$0xff]
      %v3627 = vld [vmem:[%s352 + $0x38] sm:$0xff]
      %v3628 = vld [vmem:[%s352 + $0x40] sm:$0xff]
      %v3629 = vld [vmem:[%s352 + $0x48] sm:$0xff]
      %v3630 = vld [vmem:[%s352 + $0x50] sm:$0xff]
      %v3631 = vld [vmem:[%s352 + $0x58] sm:$0xff]
      %v3632 = vld [vmem:[%s352 + $0x60] sm:$0xff]
      %v3633 = vld [vmem:[%s352 + $0x68] sm:$0xff]
      %v3634 = vld [vmem:[%s352 + $0x70] sm:$0xff]
      %v3635 = vld [vmem:[%s352 + $0x78] sm:$0xff]
      %v3636 = vld [vmem:[%s1] sm:$0x1]
      %v3638 = vlaneseq
      %v3639 = vshrl.u32 %v3638, 7
      %v3640 = vsub.s32 0, %v3639
      %v3641 = vrot.slane %v3636, %v3640
      %v3643 = vmul.f32 %v3620, %v3641
      %v3644 = vmul.f32 %v3621, %v3641
      %v3645 = vmul.f32 %v3622, %v3641
      %v3646 = vmul.f32 %v3623, %v3641
      %v3647 = vmul.f32 %v3624, %v3641
      %v3648 = vmul.f32 %v3625, %v3641
      %v3649 = vmul.f32 %v3626, %v3641
      %v3650 = vmul.f32 %v3627, %v3641
      %v3651 = vmul.f32 %v3628, %v3641
      %v3652 = vmul.f32 %v3629, %v3641
      %v3653 = vmul.f32 %v3630, %v3641
      %v3654 = vmul.f32 %v3631, %v3641
      %v3655 = vmul.f32 %v3632, %v3641
      %v3656 = vmul.f32 %v3633, %v3641
      %v3657 = vmul.f32 %v3634, %v3641
      %v3658 = vmul.f32 %v3635, %v3641
      %v3659 = vld [vmem:[%s2] sm:$0x1]
      %v3661 = vlaneseq
      %v3662 = vshrl.u32 %v3661, 7
      %v3663 = vsub.s32 0, %v3662
      %v3664 = vrot.slane %v3659, %v3663
      %v3666 = vadd.f32 %v3643, %v3664
      %v3667 = vadd.f32 %v3644, %v3664
      %v3668 = vadd.f32 %v3645, %v3664
      %v3669 = vadd.f32 %v3646, %v3664
      %v3670 = vadd.f32 %v3647, %v3664
      %v3671 = vadd.f32 %v3648, %v3664
      %v3672 = vadd.f32 %v3649, %v3664
      %v3673 = vadd.f32 %v3650, %v3664
      %v3674 = vadd.f32 %v3651, %v3664
      %v3675 = vadd.f32 %v3652, %v3664
      %v3676 = vadd.f32 %v3653, %v3664
      %v3677 = vadd.f32 %v3654, %v3664
      %v3678 = vadd.f32 %v3655, %v3664
      %v3679 = vadd.f32 %v3656, %v3664
      %v3680 = vadd.f32 %v3657, %v3664
      %v3681 = vadd.f32 %v3658, %v3664
      %v3682 = vmul.f32 %v3666, %v3604
      %v3683 = vmul.f32 %v3667, %v3605
      %v3684 = vmul.f32 %v3668, %v3606
      %v3685 = vmul.f32 %v3669, %v3607
      %v3686 = vmul.f32 %v3670, %v3608
      %v3687 = vmul.f32 %v3671, %v3609
      %v3688 = vmul.f32 %v3672, %v3610
      %v3689 = vmul.f32 %v3673, %v3611
      %v3690 = vmul.f32 %v3674, %v3612
      %v3691 = vmul.f32 %v3675, %v3613
      %v3692 = vmul.f32 %v3676, %v3614
      %v3693 = vmul.f32 %v3677, %v3615
      %v3694 = vmul.f32 %v3678, %v3616
      %v3695 = vmul.f32 %v3679, %v3617
      %v3696 = vmul.f32 %v3680, %v3618
      %v3697 = vmul.f32 %v3681, %v3619
      %v3698 = vadd.f32 %v3666, %v3682
      %v3699 = vadd.f32 %v3667, %v3683
      %v3700 = vadd.f32 %v3668, %v3684
      %v3701 = vadd.f32 %v3669, %v3685
      %v3702 = vadd.f32 %v3670, %v3686
      %v3703 = vadd.f32 %v3671, %v3687
      %v3704 = vadd.f32 %v3672, %v3688
      %v3705 = vadd.f32 %v3673, %v3689
      %v3706 = vadd.f32 %v3674, %v3690
      %v3707 = vadd.f32 %v3675, %v3691
      %v3708 = vadd.f32 %v3676, %v3692
      %v3709 = vadd.f32 %v3677, %v3693
      %v3710 = vadd.f32 %v3678, %v3694
      %v3711 = vadd.f32 %v3679, %v3695
      %v3712 = vadd.f32 %v3680, %v3696
      %v3713 = vadd.f32 %v3681, %v3697
      %3730 = vrot.lane.b32.xlu0 %v3604, 124
      %v3731 = vpop.permute.xlu0 %3730
      %3732 = vrot.lane.b32.xlu0 %v3605, 124
      %v3733 = vpop.permute.xlu0 %3732
      %3734 = vrot.lane.b32.xlu0 %v3606, 124
      %v3735 = vpop.permute.xlu0 %3734
      %3736 = vrot.lane.b32.xlu0 %v3607, 124
      %v3737 = vpop.permute.xlu0 %3736
      %3738 = vrot.lane.b32.xlu0 %v3608, 124
      %v3739 = vpop.permute.xlu0 %3738
      %3740 = vrot.lane.b32.xlu0 %v3609, 124
      %v3741 = vpop.permute.xlu0 %3740
      %3742 = vrot.lane.b32.xlu0 %v3610, 124
      %v3743 = vpop.permute.xlu0 %3742
      %3744 = vrot.lane.b32.xlu0 %v3611, 124
      %v3745 = vpop.permute.xlu0 %3744
      %3746 = vrot.lane.b32.xlu0 %v3612, 124
      %v3747 = vpop.permute.xlu0 %3746
      %3748 = vrot.lane.b32.xlu0 %v3613, 124
      %v3749 = vpop.permute.xlu0 %3748
      %3750 = vrot.lane.b32.xlu0 %v3614, 124
      %v3751 = vpop.permute.xlu0 %3750
      %3752 = vrot.lane.b32.xlu0 %v3615, 124
      %v3753 = vpop.permute.xlu0 %3752
      %3754 = vrot.lane.b32.xlu0 %v3616, 124
      %v3755 = vpop.permute.xlu0 %3754
      %3756 = vrot.lane.b32.xlu0 %v3617, 124
      %v3757 = vpop.permute.xlu0 %3756
      %3758 = vrot.lane.b32.xlu0 %v3618, 124
      %v3759 = vpop.permute.xlu0 %3758
      %3760 = vrot.lane.b32.xlu0 %v3619, 124
      %v3761 = vpop.permute.xlu0 %3760
      %v3778 = vadd.f32 %v3698, %v3731
      %v3779 = vadd.f32 %v3699, %v3733
      %v3780 = vadd.f32 %v3700, %v3735
      %v3781 = vadd.f32 %v3701, %v3737
      %v3782 = vadd.f32 %v3702, %v3739
      %v3783 = vadd.f32 %v3703, %v3741
      %v3784 = vadd.f32 %v3704, %v3743
      %v3785 = vadd.f32 %v3705, %v3745
      %v3786 = vadd.f32 %v3706, %v3747
      %v3787 = vadd.f32 %v3707, %v3749
      %v3788 = vadd.f32 %v3708, %v3751
      %v3789 = vadd.f32 %v3709, %v3753
      %v3790 = vadd.f32 %v3710, %v3755
      %v3791 = vadd.f32 %v3711, %v3757
      %v3792 = vadd.f32 %v3712, %v3759
      %v3793 = vadd.f32 %v3713, %v3761
      %vm3794 = vcmask 31744
      %3795 = vst.msk [vmem:[%s368] sm:$0xff] %vm3794, %v3778
      %3796 = vst.msk [vmem:[%s368 + $0x8] sm:$0xff] %vm3794, %v3779
      %3797 = vst.msk [vmem:[%s368 + $0x10] sm:$0xff] %vm3794, %v3780
      %3798 = vst.msk [vmem:[%s368 + $0x18] sm:$0xff] %vm3794, %v3781
      %3799 = vst.msk [vmem:[%s368 + $0x20] sm:$0xff] %vm3794, %v3782
      %3800 = vst.msk [vmem:[%s368 + $0x28] sm:$0xff] %vm3794, %v3783
      %3801 = vst.msk [vmem:[%s368 + $0x30] sm:$0xff] %vm3794, %v3784
      %3802 = vst.msk [vmem:[%s368 + $0x38] sm:$0xff] %vm3794, %v3785
      %3803 = vst.msk [vmem:[%s368 + $0x40] sm:$0xff] %vm3794, %v3786
      %3804 = vst.msk [vmem:[%s368 + $0x48] sm:$0xff] %vm3794, %v3787
      %3805 = vst.msk [vmem:[%s368 + $0x50] sm:$0xff] %vm3794, %v3788
      %3806 = vst.msk [vmem:[%s368 + $0x58] sm:$0xff] %vm3794, %v3789
      %3807 = vst.msk [vmem:[%s368 + $0x60] sm:$0xff] %vm3794, %v3790
      %3808 = vst.msk [vmem:[%s368 + $0x68] sm:$0xff] %vm3794, %v3791
      %3809 = vst.msk [vmem:[%s368 + $0x70] sm:$0xff] %vm3794, %v3792
      %3810 = vst.msk [vmem:[%s368 + $0x78] sm:$0xff] %vm3794, %v3793
      %s3811 = smul.u32 8, %s24
      %p3812 = scmp.lt.s32.totalorder %s23, 1
      %s3813 = scalar_select %p3812, %s23, 1
      %p3814 = scmp.lt.s32.totalorder %s3811, 15
      %s3815 = scalar_select %p3814, %s3811, 15
      %s3816 = smul.addr %s3815, 2
      %s3817 = smul.addr %s3813, 32
      %s3818 = sadd.s32 %s3816, %s3817
      %s3819 = smul.addr %s3818, 8
      %s3820 = scalar_lea.vmem %s8, %s3819
      // Predicated region
      $region61: #{spade_pallas.3} parent=51 // pred_check
        %p3821 = pneg %p231
      $region62: #{spade_pallas.3} parent=51 // pred_check_branch
        %3823 = sbr.rel (%p3821) target = $region64
      $region63: #{spade_pallas.3} parent=51 // pred_region
        %s3824 = smul.u32 8, %s24
      $region64: #{spade_pallas.3} parent=51 // pred_fallthru
        _
    $region52: #{spade_pallas.3} parent=5 // pred_fallthru
      _
    %p3825 = scmp.le.s32.totalorder 2, %s14
    // Predicated region
    $region65: #{spade_pallas.3} parent=5 // pred_check
      %p3826 = pneg %p3825
    $region66: #{spade_pallas.3} parent=5 // pred_check_branch
      %3828 = sbr.rel (%p3826) target = $region68
    $region67: #{spade_pallas.3} parent=5 // pred_region
      %s3829 = ssub.s32 %s14, 2
      // Predicated region
      $region69: #{spade_pallas.3} parent=67 // pred_check
        %p3830 = pneg %p237
      $region70: #{spade_pallas.3} parent=67 // pred_check_branch
        %3832 = sbr.rel (%p3830) target = $region72
      $region71: #{spade_pallas.3} parent=67 // pred_region
        %s3833 = smul.u32 8, %s26
        %p3834 = scmp.lt.s32.totalorder %s25, 1
        %s3835 = scalar_select %p3834, %s25, 1
        %p3836 = scmp.lt.s32.totalorder %s3833, 15
        %s3837 = scalar_select %p3836, %s3833, 15
        %s3838 = smul.addr %s3837, 2
        %s3839 = smul.addr %s3835, 32
        %s3840 = sadd.s32 %s3838, %s3839
        %s3841 = smul.addr %s3840, 8
        %s3842 = scalar_lea.vmem %s8, %s3841
      $region72: #{spade_pallas.3} parent=67 // pred_fallthru
        _
    $region68: #{spade_pallas.3} parent=5 // pred_fallthru
      _
  $region6: #{spade_pallas.3} parent=0 // loop_footer
    %s18 = sadd.s32 1, %s14
  $region7: #{spade_pallas.3} parent=0 // loop_footer_branch
    %13 = sbr.rel target = $region3
  $region8: #{spade_pallas.3} parent=0 // loop_exit
    _

</llo_original>
